<compile_context>
chip_gen: v5e
topology: v5e:2x2
jax: 0.10.0
libtpu: 0.0.40
codegen_flags: <defaults>
</compile_context>

<pallas_src>
import functools

import jax
import jax.numpy as jnp
from jax.experimental import pallas as pl
from jax.experimental.pallas import tpu as pltpu

C_OUT, KH, KW = 20, 3, 3


def conv_relu_kernel(x_ref, w_ref, b_ref, m_ref, o_ref, *, H, W):
    # x_ref: (B_TILE, FLAT)        row-flattened images, zero-padded along H and by 1
    #                              element on each flat end; FLAT = (H+2)*W + 2
    # w_ref: (C_OUT, KH*KW)        flattened conv weights
    # b_ref: (C_OUT, 1)            bias
    # m_ref: (2, H*W)              [left-edge mask, right-edge mask] for 'same' pad along W
    # o_ref: (B_TILE, C_OUT, H*W)  lane-dense output block
    HW = H * W
    bt = o_ref.shape[0]

    x = x_ref[...]                       # (bt, FLAT)      loaded once
    w = w_ref[...]                       # (C_OUT, 9)      hoisted out of tap loop
    b = b_ref[...]                       # (C_OUT, 1)
    mask_l = m_ref[0:1, :]               # (1, HW)
    mask_r = m_ref[1:2, :]               # (1, HW)

    acc = jnp.zeros((bt, C_OUT, HW), jnp.float32)
    # 3x3 'same' conv: each tap is a static lane-shifted view of the flattened image.
    for kh in range(KH):
        for kw in range(KW):
            t = kh * KW + kw
            start = kh * W + kw                       # = (kh*W + kw - 1) + 1 pad offset
            xs = x[:, start:start + HW]               # (bt, HW), lane-dense
            if kw == 0:
                xs = xs * mask_l                      # kill wrap-around from previous row
            elif kw == KW - 1:
                xs = xs * mask_r                      # kill wrap-around into next row
            # outer-product MAC: (1, C_OUT, 1) * (bt, 1, HW) -> (bt, C_OUT, HW)
            acc = acc + w[None, :, t:t + 1] * xs[:, None, :]

    acc = acc + b[None, :, :]
    o_ref[...] = jnp.maximum(acc, 0.0).astype(o_ref.dtype)   # ReLU activation


def conv_block(x, w, b, *, b_tile=8):
    """x: (N, 1, H, W) float32 NCHW; w: (C_OUT, 1, KH, KW); b: (C_OUT,). Returns NCHW."""
    N, C_in, H, W = x.shape
    assert C_in == 1, "ConvBlock has in_channels=1"
    HW = H * W
    FLAT = (H + 2) * W + 2

    # --- plain-JAX glue: layout prep only (cheap at these sizes) -------------------
    # Pad along H only, flatten rows into the lane axis, pad the flat vector by 1 on
    # each side so every tap is a contiguous in-range slice of length H*W.
    xh = jnp.pad(x[:, 0], ((0, 0), (1, 1), (0, 0)))                    # (N, H+2, W)
    xflat = jnp.pad(xh.reshape(N, (H + 2) * W), ((0, 0), (1, 1)))      # (N, FLAT)

    # Pad batch up to a multiple of b_tile (b_tile=8 keeps block sublane dim aligned).
    n_pad = (-N) % b_tile
    if n_pad:
        xflat = jnp.pad(xflat, ((0, n_pad), (0, 0)))
    Np = N + n_pad

    w2 = w.reshape(C_OUT, KH * KW).astype(jnp.float32)                 # (C_OUT, 9)
    b2 = b.reshape(C_OUT, 1).astype(jnp.float32)                       # (C_OUT, 1)

    # Column masks that emulate the zero 'same' padding along W for the shifted views.
    col = jnp.arange(HW, dtype=jnp.int32) % W
    mask_l = (col != 0).astype(jnp.float32)
    mask_r = (col != W - 1).astype(jnp.float32)
    masks = jnp.stack([mask_l, mask_r], axis=0)                        # (2, HW)

    kernel = functools.partial(conv_relu_kernel, H=H, W=W)

    out = pl.pallas_call(
        kernel,
        out_shape=jax.ShapeDtypeStruct((Np, C_OUT, HW), x.dtype),
        grid=(Np // b_tile,),
        in_specs=[
            pl.BlockSpec((b_tile, FLAT), lambda n: (n, 0)),
            pl.BlockSpec((C_OUT, KH * KW), lambda n: (0, 0)),
            pl.BlockSpec((C_OUT, 1), lambda n: (0, 0)),
            pl.BlockSpec((2, HW), lambda n: (0, 0)),
        ],
        out_specs=pl.BlockSpec((b_tile, C_OUT, HW), lambda n: (n, 0, 0)),
        compiler_params=pltpu.CompilerParams(
            dimension_semantics=("parallel",),
            vmem_limit_bytes=32 * 1024 * 1024,
        ),
    )(xflat, w2, b2, masks)

    # Drop batch padding and view the lane-dense output back as NCHW (free reshape).
    return out[:N].reshape(N, C_OUT, H, W)


if __name__ == "__main__":
    key = jax.random.PRNGKey(0)
    kx, kwt, kb = jax.random.split(key, 3)

    N, C_in, H, W = 16, 1, 16, 16
    x = jax.random.normal(kx, (N, C_in, H, W), dtype=jnp.float32)

    # Deterministic Conv2d-style init: U(-k, k), k = 1/sqrt(fan_in) = 1/sqrt(1*3*3)
    k = 1.0 / (C_in * KH * KW) ** 0.5
    w = jax.random.uniform(kwt, (C_OUT, C_in, KH, KW), jnp.float32, -k, k)
    b = jax.random.uniform(kb, (C_OUT,), jnp.float32, -k, k)

    out = conv_block(x, w, b)
    out = jax.block_until_ready(out)

    # Reference (plain JAX, f32-accurate) check of conv + bias + ReLU semantics.
    ref = jax.lax.conv_general_dilated(
        x, w, window_strides=(1, 1), padding="SAME",
        dimension_numbers=("NCHW", "OIHW", "NCHW"),
        precision=jax.lax.Precision.HIGHEST,
    )
    ref = jnp.maximum(ref + b[None, :, None, None], 0.0)

    assert out.shape == (N, C_OUT, H, W)
    assert jnp.allclose(out, ref, atol=1e-5, rtol=1e-5), float(jnp.max(jnp.abs(out - ref)))

    print("KERNEL_OK")
</pallas_src>

<mosaic_0001>
module attributes {stable_mosaic.version = 11 : i64} {
  func.func @conv_relu_kernel(%arg0: i32, %arg1: memref<8x290xf32, #tpu.memory_space<vmem>>, %arg2: memref<20x9xf32, #tpu.memory_space<vmem>>, %arg3: memref<20x1xf32, #tpu.memory_space<vmem>>, %arg4: memref<2x256xf32, #tpu.memory_space<vmem>>, %arg5: memref<8x20x256xf32, #tpu.memory_space<vmem>>) attributes {dimension_semantics = [#tpu.dimension_semantics<parallel>], iteration_bounds = array<i64: 2>, scalar_prefetch = 0 : i64, scratch_operands = 0 : i64, tpu.core_type = #tpu.core_type<tc>, window_params = [{transform_indices = @transform_0, window_bounds = array<i64: 8, 290>}, {pipeline_mode = #tpu.pipeline_mode<synchronous>, transform_indices = @transform_1, window_bounds = array<i64: 20, 9>}, {pipeline_mode = #tpu.pipeline_mode<synchronous>, transform_indices = @transform_2, window_bounds = array<i64: 20, 1>}, {pipeline_mode = #tpu.pipeline_mode<synchronous>, transform_indices = @transform_3, window_bounds = array<i64: 2, 256>}, {transform_indices = @transform_4, window_bounds = array<i64: 8, 20, 256>}]} {
    %c0 = arith.constant 0 : index
    %c0_0 = arith.constant 0 : index
    %0 = vector.load %arg1[%c0, %c0_0] : memref<8x290xf32, #tpu.memory_space<vmem>>, vector<8x290xf32>
    %c0_1 = arith.constant 0 : index
    %c0_2 = arith.constant 0 : index
    %1 = vector.load %arg2[%c0_1, %c0_2] : memref<20x9xf32, #tpu.memory_space<vmem>>, vector<20x9xf32>
    %c0_3 = arith.constant 0 : index
    %c0_4 = arith.constant 0 : index
    %2 = vector.load %arg3[%c0_3, %c0_4] : memref<20x1xf32, #tpu.memory_space<vmem>>, vector<20x1xf32>
    %c0_5 = arith.constant 0 : index
    %c0_6 = arith.constant 0 : index
    %3 = vector.load %arg4[%c0_5, %c0_6] : memref<2x256xf32, #tpu.memory_space<vmem>>, vector<1x256xf32>
    %c1 = arith.constant 1 : index
    %c0_7 = arith.constant 0 : index
    %4 = vector.load %arg4[%c1, %c0_7] : memref<2x256xf32, #tpu.memory_space<vmem>>, vector<1x256xf32>
    %cst = arith.constant 0.000000e+00 : f32
    %5 = vector.broadcast %cst : f32 to vector<8x20x256xf32>
    %6 = vector.extract_strided_slice %0 {offsets = [0, 0], sizes = [8, 256], strides = [1, 1]} : vector<8x290xf32> to vector<8x256xf32>
    %7 = vector.broadcast %3 : vector<1x256xf32> to vector<8x256xf32>
    %8 = arith.mulf %6, %7 : vector<8x256xf32>
    %9 = vector.extract_strided_slice %1 {offsets = [0, 0], sizes = [20, 1], strides = [1, 1]} : vector<20x9xf32> to vector<20x1xf32>
    %10 = vector.shape_cast %9 : vector<20x1xf32> to vector<1x20x1xf32>
    %11 = vector.shape_cast %8 : vector<8x256xf32> to vector<8x1x256xf32>
    %12 = vector.broadcast %10 : vector<1x20x1xf32> to vector<8x20x256xf32>
    %13 = vector.broadcast %11 : vector<8x1x256xf32> to vector<8x20x256xf32>
    %14 = arith.mulf %12, %13 : vector<8x20x256xf32>
    %15 = arith.addf %5, %14 : vector<8x20x256xf32>
    %16 = vector.extract_strided_slice %0 {offsets = [0, 1], sizes = [8, 256], strides = [1, 1]} : vector<8x290xf32> to vector<8x256xf32>
    %17 = vector.extract_strided_slice %1 {offsets = [0, 1], sizes = [20, 1], strides = [1, 1]} : vector<20x9xf32> to vector<20x1xf32>
    %18 = vector.shape_cast %17 : vector<20x1xf32> to vector<1x20x1xf32>
    %19 = vector.shape_cast %16 : vector<8x256xf32> to vector<8x1x256xf32>
    %20 = vector.broadcast %18 : vector<1x20x1xf32> to vector<8x20x256xf32>
    %21 = vector.broadcast %19 : vector<8x1x256xf32> to vector<8x20x256xf32>
    %22 = arith.mulf %20, %21 : vector<8x20x256xf32>
    %23 = arith.addf %15, %22 : vector<8x20x256xf32>
    %24 = vector.extract_strided_slice %0 {offsets = [0, 2], sizes = [8, 256], strides = [1, 1]} : vector<8x290xf32> to vector<8x256xf32>
    %25 = vector.broadcast %4 : vector<1x256xf32> to vector<8x256xf32>
    %26 = arith.mulf %24, %25 : vector<8x256xf32>
    %27 = vector.extract_strided_slice %1 {offsets = [0, 2], sizes = [20, 1], strides = [1, 1]} : vector<20x9xf32> to vector<20x1xf32>
    %28 = vector.shape_cast %27 : vector<20x1xf32> to vector<1x20x1xf32>
    %29 = vector.shape_cast %26 : vector<8x256xf32> to vector<8x1x256xf32>
    %30 = vector.broadcast %28 : vector<1x20x1xf32> to vector<8x20x256xf32>
    %31 = vector.broadcast %29 : vector<8x1x256xf32> to vector<8x20x256xf32>
    %32 = arith.mulf %30, %31 : vector<8x20x256xf32>
    %33 = arith.addf %23, %32 : vector<8x20x256xf32>
    %34 = vector.extract_strided_slice %0 {offsets = [0, 16], sizes = [8, 256], strides = [1, 1]} : vector<8x290xf32> to vector<8x256xf32>
    %35 = vector.broadcast %3 : vector<1x256xf32> to vector<8x256xf32>
    %36 = arith.mulf %34, %35 : vector<8x256xf32>
    %37 = vector.extract_strided_slice %1 {offsets = [0, 3], sizes = [20, 1], strides = [1, 1]} : vector<20x9xf32> to vector<20x1xf32>
    %38 = vector.shape_cast %37 : vector<20x1xf32> to vector<1x20x1xf32>
    %39 = vector.shape_cast %36 : vector<8x256xf32> to vector<8x1x256xf32>
    %40 = vector.broadcast %38 : vector<1x20x1xf32> to vector<8x20x256xf32>
    %41 = vector.broadcast %39 : vector<8x1x256xf32> to vector<8x20x256xf32>
    %42 = arith.mulf %40, %41 : vector<8x20x256xf32>
    %43 = arith.addf %33, %42 : vector<8x20x256xf32>
    %44 = vector.extract_strided_slice %0 {offsets = [0, 17], sizes = [8, 256], strides = [1, 1]} : vector<8x290xf32> to vector<8x256xf32>
    %45 = vector.extract_strided_slice %1 {offsets = [0, 4], sizes = [20, 1], strides = [1, 1]} : vector<20x9xf32> to vector<20x1xf32>
    %46 = vector.shape_cast %45 : vector<20x1xf32> to vector<1x20x1xf32>
    %47 = vector.shape_cast %44 : vector<8x256xf32> to vector<8x1x256xf32>
    %48 = vector.broadcast %46 : vector<1x20x1xf32> to vector<8x20x256xf32>
    %49 = vector.broadcast %47 : vector<8x1x256xf32> to vector<8x20x256xf32>
    %50 = arith.mulf %48, %49 : vector<8x20x256xf32>
    %51 = arith.addf %43, %50 : vector<8x20x256xf32>
    %52 = vector.extract_strided_slice %0 {offsets = [0, 18], sizes = [8, 256], strides = [1, 1]} : vector<8x290xf32> to vector<8x256xf32>
    %53 = vector.broadcast %4 : vector<1x256xf32> to vector<8x256xf32>
    %54 = arith.mulf %52, %53 : vector<8x256xf32>
    %55 = vector.extract_strided_slice %1 {offsets = [0, 5], sizes = [20, 1], strides = [1, 1]} : vector<20x9xf32> to vector<20x1xf32>
    %56 = vector.shape_cast %55 : vector<20x1xf32> to vector<1x20x1xf32>
    %57 = vector.shape_cast %54 : vector<8x256xf32> to vector<8x1x256xf32>
    %58 = vector.broadcast %56 : vector<1x20x1xf32> to vector<8x20x256xf32>
    %59 = vector.broadcast %57 : vector<8x1x256xf32> to vector<8x20x256xf32>
    %60 = arith.mulf %58, %59 : vector<8x20x256xf32>
    %61 = arith.addf %51, %60 : vector<8x20x256xf32>
    %62 = vector.extract_strided_slice %0 {offsets = [0, 32], sizes = [8, 256], strides = [1, 1]} : vector<8x290xf32> to vector<8x256xf32>
    %63 = vector.broadcast %3 : vector<1x256xf32> to vector<8x256xf32>
    %64 = arith.mulf %62, %63 : vector<8x256xf32>
    %65 = vector.extract_strided_slice %1 {offsets = [0, 6], sizes = [20, 1], strides = [1, 1]} : vector<20x9xf32> to vector<20x1xf32>
    %66 = vector.shape_cast %65 : vector<20x1xf32> to vector<1x20x1xf32>
    %67 = vector.shape_cast %64 : vector<8x256xf32> to vector<8x1x256xf32>
    %68 = vector.broadcast %66 : vector<1x20x1xf32> to vector<8x20x256xf32>
    %69 = vector.broadcast %67 : vector<8x1x256xf32> to vector<8x20x256xf32>
    %70 = arith.mulf %68, %69 : vector<8x20x256xf32>
    %71 = arith.addf %61, %70 : vector<8x20x256xf32>
    %72 = vector.extract_strided_slice %0 {offsets = [0, 33], sizes = [8, 256], strides = [1, 1]} : vector<8x290xf32> to vector<8x256xf32>
    %73 = vector.extract_strided_slice %1 {offsets = [0, 7], sizes = [20, 1], strides = [1, 1]} : vector<20x9xf32> to vector<20x1xf32>
    %74 = vector.shape_cast %73 : vector<20x1xf32> to vector<1x20x1xf32>
    %75 = vector.shape_cast %72 : vector<8x256xf32> to vector<8x1x256xf32>
    %76 = vector.broadcast %74 : vector<1x20x1xf32> to vector<8x20x256xf32>
    %77 = vector.broadcast %75 : vector<8x1x256xf32> to vector<8x20x256xf32>
    %78 = arith.mulf %76, %77 : vector<8x20x256xf32>
    %79 = arith.addf %71, %78 : vector<8x20x256xf32>
    %80 = vector.extract_strided_slice %0 {offsets = [0, 34], sizes = [8, 256], strides = [1, 1]} : vector<8x290xf32> to vector<8x256xf32>
    %81 = vector.broadcast %4 : vector<1x256xf32> to vector<8x256xf32>
    %82 = arith.mulf %80, %81 : vector<8x256xf32>
    %83 = vector.extract_strided_slice %1 {offsets = [0, 8], sizes = [20, 1], strides = [1, 1]} : vector<20x9xf32> to vector<20x1xf32>
    %84 = vector.shape_cast %83 : vector<20x1xf32> to vector<1x20x1xf32>
    %85 = vector.shape_cast %82 : vector<8x256xf32> to vector<8x1x256xf32>
    %86 = vector.broadcast %84 : vector<1x20x1xf32> to vector<8x20x256xf32>
    %87 = vector.broadcast %85 : vector<8x1x256xf32> to vector<8x20x256xf32>
    %88 = arith.mulf %86, %87 : vector<8x20x256xf32>
    %89 = arith.addf %79, %88 : vector<8x20x256xf32>
    %90 = vector.shape_cast %2 : vector<20x1xf32> to vector<1x20x1xf32>
    %91 = vector.broadcast %90 : vector<1x20x1xf32> to vector<8x20x256xf32>
    %92 = arith.addf %89, %91 : vector<8x20x256xf32>
    %cst_8 = arith.constant 0.000000e+00 : f32
    %93 = vector.broadcast %cst_8 : f32 to vector<8x20x256xf32>
    %94 = arith.maximumf %92, %93 : vector<8x20x256xf32>
    %c0_9 = arith.constant 0 : index
    %c0_10 = arith.constant 0 : index
    %c0_11 = arith.constant 0 : index
    %95 = vector.load %arg5[%c0_9, %c0_10, %c0_11] : memref<8x20x256xf32, #tpu.memory_space<vmem>>, vector<8x20x256xf32>
    tpu.vector_store %arg5[%c0_9, %c0_10, %c0_11], %94 {strides = array<i32>} : memref<8x20x256xf32, #tpu.memory_space<vmem>>, vector<8x20x256xf32>,
    return
  }
  func.func @transform_0(%arg0: i32) -> (i32, i32) {
    %c0_i32 = arith.constant 0 : i32
    %c0_i32_0 = arith.constant 0 : i32
    return %arg0, %c0_i32 : i32, i32
  }
  func.func @transform_1(%arg0: i32) -> (i32, i32) {
    %c0_i32 = arith.constant 0 : i32
    %c0_i32_0 = arith.constant 0 : i32
    %c0_i32_1 = arith.constant 0 : i32
    return %c0_i32, %c0_i32_0 : i32, i32
  }
  func.func @transform_2(%arg0: i32) -> (i32, i32) {
    %c0_i32 = arith.constant 0 : i32
    %c0_i32_0 = arith.constant 0 : i32
    %c0_i32_1 = arith.constant 0 : i32
    return %c0_i32, %c0_i32_0 : i32, i32
  }
  func.func @transform_3(%arg0: i32) -> (i32, i32) {
    %c0_i32 = arith.constant 0 : i32
    %c0_i32_0 = arith.constant 0 : i32
    %c0_i32_1 = arith.constant 0 : i32
    return %c0_i32, %c0_i32_0 : i32, i32
  }
  func.func @transform_4(%arg0: i32) -> (i32, i32, i32) {
    %c0_i32 = arith.constant 0 : i32
    %c0_i32_0 = arith.constant 0 : i32
    %c0_i32_1 = arith.constant 0 : i32
    return %arg0, %c0_i32, %c0_i32_0 : i32, i32, i32
  }
}

</mosaic_0001>

<llo_original>
// kernel: tpu_custom_call.1
$region0: #{tpu_custom_call.1}
  #allocation0 [shape = 'u32[]', space=smem, size = 0x4, offset = 0x4, fixed_abs, tag = 'smem constant byte address 0x4 - core index']
  #allocation1 [shape = 'u32[72,128]{1,0:T(1,128)}', space=vmem, size = 0x9000, scoped, tag = 'internal scratch']
  %s0 = inlined_call_operand.vmem [shape: f32[16,290], index: 0, kind: input, shape index: {}]
  %s1 = inlined_call_operand.vmem [shape: f32[20,9], index: 1, kind: input, shape index: {}]
  %s2 = inlined_call_operand.vmem [shape: f32[20,1], index: 2, kind: input, shape index: {}]
  %s3 = inlined_call_operand.vmem [shape: f32[2,256], index: 3, kind: input, shape index: {}]
  %s4 = inlined_call_operand.vmem [shape: f32[16,20,256], index: 4, kind: output, shape index: {}]
  %s5 = sld [smem:[#allocation0]]
  $region49: #{tpu_custom_call.1} parent=0
    _
  %s7 = ssub.s32 1, %s5
  %s8 = scalar_select 0, %s7, %s5
  loop: start=0, step=1, limit=4
  $region2: #{tpu_custom_call.1} parent=0 // loop_pre_header
    _
  $region3: #{tpu_custom_call.1} parent=0 // loop_header
    %s10 = sphi 0, %s14
    %p11 = scmp.ge.s32.totalorder %s10, 4
    %s20 = sphi 0, %s22
    %s23 = sphi 0, %s20
    %s24 = sphi 0, %s23
    %s40 = sphi 0, %s24
    %s44 = sphi 0, %s44
    %s46 = sphi 0, %s44
    %s47 = sphi 0, %s46
    %s61 = sphi 0, %s47
    %s65 = sphi 0, %s65
    %s67 = sphi 0, %s65
    %s68 = sphi 0, %s67
    %s82 = sphi 0, %s68
    %s86 = sphi 0, %s86
    %s88 = sphi 0, %s86
    %s89 = sphi 0, %s88
    %s103 = sphi 0, %s89
    %s109 = sphi 0, %s111
    %s112 = sphi 0, %s109
    %s113 = sphi 0, %s112
    %s129 = sphi 0, %s113
  $region4: #{tpu_custom_call.1} parent=0 // loop_header_branch
    %13 = sbr.rel (%p11) target = $region8
  $region5: #{tpu_custom_call.1} parent=0 // loop_body
    %s15 = ssub.s32 %s10, 1
    %s16 = ssub.s32 %s10, 2
    %s17 = sadd.s32 %s10, 1
    %s18 = ssub.s32 %s10, %s17
    %p19 = scmp.eq.s32.totalorder %s18, 0
    %s21 = sadd.s32 %s20, 1
    %s22 = scalar_select %p19, %s20, %s21
    %p25 = pneg %p19
    %p26 = scmp.eq.s32.totalorder %s10, 1
    %p27 = por %p25, %p26
    %p28 = scmp.ne.s32.totalorder %s20, %s23
    %p29 = scmp.eq.s32.totalorder %s10, 0
    %p30 = por %p28, %p29
    %p31 = scmp.ne.s32.totalorder %s20, %s23
    %p32 = scmp.eq.s32.totalorder %s15, 1
    %p33 = por %p31, %p32
    %p34 = scmp.ne.s32.totalorder %s23, %s24
    %p35 = scmp.eq.s32.totalorder %s15, 0
    %p36 = por %p34, %p35
    %p37 = scmp.ne.s32.totalorder %s23, %s24
    %p38 = scmp.eq.s32.totalorder %s16, 1
    %p39 = por %p37, %p38
    %p41 = scmp.ne.s32.totalorder %s24, %s40
    %p42 = scmp.eq.s32.totalorder %s16, 0
    %p43 = por %p41, %p42
    %s45 = sadd.s32 %s44, 1
    %p48 = scmp.eq.s32.totalorder %s10, 1
    %p49 = scmp.ne.s32.totalorder %s44, %s46
    %p50 = scmp.eq.s32.totalorder %s10, 0
    %p51 = por %p49, %p50
    %p52 = scmp.ne.s32.totalorder %s44, %s46
    %p53 = scmp.eq.s32.totalorder %s15, 1
    %p54 = por %p52, %p53
    %p55 = scmp.ne.s32.totalorder %s46, %s47
    %p56 = scmp.eq.s32.totalorder %s15, 0
    %p57 = por %p55, %p56
    %p58 = scmp.ne.s32.totalorder %s46, %s47
    %p59 = scmp.eq.s32.totalorder %s16, 1
    %p60 = por %p58, %p59
    %p62 = scmp.ne.s32.totalorder %s47, %s61
    %p63 = scmp.eq.s32.totalorder %s16, 0
    %p64 = por %p62, %p63
    %s66 = sadd.s32 %s65, 1
    %p69 = scmp.eq.s32.totalorder %s10, 1
    %p70 = scmp.ne.s32.totalorder %s65, %s67
    %p71 = scmp.eq.s32.totalorder %s10, 0
    %p72 = por %p70, %p71
    %p73 = scmp.ne.s32.totalorder %s65, %s67
    %p74 = scmp.eq.s32.totalorder %s15, 1
    %p75 = por %p73, %p74
    %p76 = scmp.ne.s32.totalorder %s67, %s68
    %p77 = scmp.eq.s32.totalorder %s15, 0
    %p78 = por %p76, %p77
    %p79 = scmp.ne.s32.totalorder %s67, %s68
    %p80 = scmp.eq.s32.totalorder %s16, 1
    %p81 = por %p79, %p80
    %p83 = scmp.ne.s32.totalorder %s68, %s82
    %p84 = scmp.eq.s32.totalorder %s16, 0
    %p85 = por %p83, %p84
    %s87 = sadd.s32 %s86, 1
    %p90 = scmp.eq.s32.totalorder %s10, 1
    %p91 = scmp.ne.s32.totalorder %s86, %s88
    %p92 = scmp.eq.s32.totalorder %s10, 0
    %p93 = por %p91, %p92
    %p94 = scmp.ne.s32.totalorder %s86, %s88
    %p95 = scmp.eq.s32.totalorder %s15, 1
    %p96 = por %p94, %p95
    %p97 = scmp.ne.s32.totalorder %s88, %s89
    %p98 = scmp.eq.s32.totalorder %s15, 0
    %p99 = por %p97, %p98
    %p100 = scmp.ne.s32.totalorder %s88, %s89
    %p101 = scmp.eq.s32.totalorder %s16, 1
    %p102 = por %p100, %p101
    %p104 = scmp.ne.s32.totalorder %s89, %s103
    %p105 = scmp.eq.s32.totalorder %s16, 0
    %p106 = por %p104, %p105
    %s107 = ssub.s32 %s10, %s17
    %p108 = scmp.eq.s32.totalorder %s107, 0
    %s110 = sadd.s32 %s109, 1
    %s111 = scalar_select %p108, %s109, %s110
    %p114 = pneg %p108
    %p115 = scmp.eq.s32.totalorder %s10, 1
    %p116 = por %p114, %p115
    %p117 = scmp.ne.s32.totalorder %s109, %s112
    %p118 = scmp.eq.s32.totalorder %s10, 0
    %p119 = por %p117, %p118
    %p120 = scmp.ne.s32.totalorder %s109, %s112
    %p121 = scmp.eq.s32.totalorder %s15, 1
    %p122 = por %p120, %p121
    %p123 = scmp.ne.s32.totalorder %s112, %s113
    %p124 = scmp.eq.s32.totalorder %s15, 0
    %p125 = por %p123, %p124
    %p126 = scmp.ne.s32.totalorder %s112, %s113
    %p127 = scmp.eq.s32.totalorder %s16, 1
    %p128 = por %p126, %p127
    %p130 = scmp.ne.s32.totalorder %s113, %s129
    %p131 = scmp.eq.s32.totalorder %s16, 0
    %p132 = por %p130, %p131
    %p133 = scmp.le.s32.totalorder 1, %s10
    %p134 = scmp.lt.s32.totalorder %s10, 3
    %p135 = pnand %p133, %p134
    %p136 = pneg %p135
    // Predicated region
    $region9: #{tpu_custom_call.1} parent=5 // pred_check
      _
    $region10: #{tpu_custom_call.1} parent=5 // pred_check_branch
      %138 = sbr.rel (%p135) target = $region12
    $region11: #{tpu_custom_call.1} parent=5 // pred_region
      %s139 = ssub.s32 %s10, 1
      // Predicated region
      $region13: #{tpu_custom_call.1} parent=11 // pred_check
        %p140 = pneg %p57
      $region14: #{tpu_custom_call.1} parent=11 // pred_check_branch
        %142 = sbr.rel (%p140) target = $region16
      $region15: #{tpu_custom_call.1} parent=11 // pred_region
        _
      $region16: #{tpu_custom_call.1} parent=11 // pred_fallthru
        _
      // Predicated region
      $region17: #{tpu_custom_call.1} parent=11 // pred_check
        %p143 = pneg %p78
      $region18: #{tpu_custom_call.1} parent=11 // pred_check_branch
        %145 = sbr.rel (%p143) target = $region20
      $region19: #{tpu_custom_call.1} parent=11 // pred_region
        _
      $region20: #{tpu_custom_call.1} parent=11 // pred_fallthru
        _
      // Predicated region
      $region21: #{tpu_custom_call.1} parent=11 // pred_check
        %p146 = pneg %p99
      $region22: #{tpu_custom_call.1} parent=11 // pred_check_branch
        %148 = sbr.rel (%p146) target = $region24
      $region23: #{tpu_custom_call.1} parent=11 // pred_region
        _
      $region24: #{tpu_custom_call.1} parent=11 // pred_fallthru
        _
    $region12: #{tpu_custom_call.1} parent=5 // pred_fallthru
      _
    %p149 = scmp.lt.s32.totalorder %s10, 2
    // Predicated region
    $region25: #{tpu_custom_call.1} parent=5 // pred_check
      %p150 = pneg %p149
    $region26: #{tpu_custom_call.1} parent=5 // pred_check_branch
      %152 = sbr.rel (%p150) target = $region28
    $region27: #{tpu_custom_call.1} parent=5 // pred_region
      // Predicated region
      $region29: #{tpu_custom_call.1} parent=27 // pred_check
        %p153 = pneg %p30
      $region30: #{tpu_custom_call.1} parent=27 // pred_check_branch
        %155 = sbr.rel (%p153) target = $region32
      $region31: #{tpu_custom_call.1} parent=27 // pred_region
        %p156 = scmp.lt.s32.totalorder %s10, 1
        %s157 = scalar_select %p156, %s10, 1
        %s158 = smul.addr %s157, 3
        %s159 = smul.addr %s158, 8
        %s160 = scalar_lea.vmem %s0, %s159
      $region32: #{tpu_custom_call.1} parent=27 // pred_fallthru
        _
    $region28: #{tpu_custom_call.1} parent=5 // pred_fallthru
      _
    %p161 = scmp.le.s32.totalorder 1, %s10
    %p162 = scmp.lt.s32.totalorder %s10, 3
    %p163 = pnand %p161, %p162
    %p164 = pneg %p163
    // Predicated region
    $region33: #{tpu_custom_call.1} parent=5 // pred_check
      _
    $region34: #{tpu_custom_call.1} parent=5 // pred_check_branch
      %166 = sbr.rel (%p163) target = $region36
    $region35: #{tpu_custom_call.1} parent=5 // pred_region
      %s167 = ssub.s32 %s10, 1
      %p168 = scmp.lt.s32.totalorder %s15, 1
      %s169 = scalar_select %p168, %s15, 1
      %s170 = smul.addr %s169, 3
      %s171 = smul.addr %s170, 8
      %s172 = scalar_lea.vmem %s0, %s171
      %p173 = pneg %p36
      %p174 = pneg %p33
      %p175 = pneg %p57
      %p176 = pneg %p54
      %p177 = pneg %p78
      %p178 = pneg %p75
      %p179 = pneg %p99
      %p180 = pneg %p96
      %p181 = pneg %p125
      %p182 = pneg %p122
      %s183 = smul.u32 8, %s15
      %p184 = scmp.lt.s32.totalorder %s183, 15
      %s185 = scalar_select %p184, %s183, 15
      %s186 = smul.addr %s185, 6
      %s187 = smul.addr %s186, 8
      %s188 = scalar_lea.vmem %s4, %s187
      %p189 = scmp.lt.s32.totalorder %s15, 1
      %s190 = scalar_select %p189, %s15, 1
      %s191 = smul.addr %s190, 3
      %s192 = smul.addr %s191, 8
      %s193 = scalar_lea.vmem %s0, %s192
      %s194 = smul.u32 8, %s15
      %p195 = scmp.lt.s32.totalorder %s194, 15
      %s196 = scalar_select %p195, %s194, 15
      %s197 = smul.addr %s196, 6
      %s198 = smul.addr %s197, 8
      %s199 = scalar_lea.vmem %s4, %s198
      %s200 = smul.u32 8, %s15
      %v201 = vld [vmem:[%s193] sm:$0xff]
      %v202 = vld [vmem:[%s193 + $0x8] sm:$0xff]
      %v203 = vld [vmem:[%s193 + $0x10] sm:$0xff]
      %v204 = vld [vmem:[%s1] sm:$0xff]
      %v205 = vld [vmem:[%s1 + $0x8] sm:$0xff]
      %v206 = vld [vmem:[%s1 + $0x10] sm:$0xf]
      %v207 = vld [vmem:[%s2] sm:$0xff]
      %v208 = vld [vmem:[%s2 + $0x8] sm:$0xff]
      %v209 = vld [vmem:[%s2 + $0x10] sm:$0xf]
      %v210 = vld [vmem:[%s3] ss:$2 sm:$0x3]
      %s211 = scalar_lea.vmem %s3, 1
      %v212 = vld [vmem:[%s211] ss:$2 sm:$0x3]
      %v214 = vperm.slane %v210, 0
      %v215 = vperm.slane %v210, 1
      %v218 = vmul.f32 %v201, %v214
      %v219 = vmul.f32 %v202, %v215
      %v222 = vrot.slane %v219, 7
      %vm223 = vcmask 1040384
      %v224 = vsel %vm223, %v218, %v222
      %vm225 = vcmask 1041409
      %v226 = vsel %vm225, %v218, %v222
      %v227 = vrot.slane %v226, 1
      %vm228 = vcmask 1042434
      %v229 = vsel %vm228, %v218, %v222
      %v230 = vrot.slane %v229, 2
      %vm231 = vcmask 1043459
      %v232 = vsel %vm231, %v218, %v222
      %v233 = vrot.slane %v232, 3
      %vm234 = vcmask 1044484
      %v235 = vsel %vm234, %v218, %v222
      %v236 = vrot.slane %v235, 4
      %vm237 = vcmask 1045509
      %v238 = vsel %vm237, %v218, %v222
      %v239 = vrot.slane %v238, 5
      %vm240 = vcmask 1046534
      %v241 = vsel %vm240, %v218, %v222
      %v242 = vrot.slane %v241, 6
      %vm243 = vcmask 1046528
      %v244 = vsel %vm243, %v222, %v218
      %v245 = vrot.slane %v244, 7
      %247 = vset.pattern.permute.xlu0 0
      %248 = vperm.xlu0 %247, %v204
      %v249 = vpop.permute.xlu0 %248
      %252 = vset.pattern.permute.xlu0 0
      %253 = vperm.xlu0 %252, %v205
      %v254 = vpop.permute.xlu0 %253
      %257 = vset.pattern.permute.xlu0 0
      %258 = vperm.xlu0 %257, %v206
      %v259 = vpop.permute.xlu0 %258
      %v261 = vperm.slane %v224, 0
      %v262 = vperm.slane %v224, 1
      %v263 = vperm.slane %v227, 0
      %v264 = vperm.slane %v227, 1
      %v265 = vperm.slane %v230, 0
      %v266 = vperm.slane %v230, 1
      %v267 = vperm.slane %v233, 0
      %v268 = vperm.slane %v233, 1
      %v269 = vperm.slane %v236, 0
      %v270 = vperm.slane %v236, 1
      %v271 = vperm.slane %v239, 0
      %v272 = vperm.slane %v239, 1
      %v273 = vperm.slane %v242, 0
      %v274 = vperm.slane %v242, 1
      %v275 = vperm.slane %v245, 0
      %v276 = vperm.slane %v245, 1
      %v293 = vmul.f32 %v249, %v261
      %v294 = vmul.f32 %v249, %v262
      %v295 = vmul.f32 %v254, %v261
      %v296 = vmul.f32 %v254, %v262
      %v297 = vmul.f32 %v259, %v261
      %v298 = vmul.f32 %v259, %v262
      %v299 = vmul.f32 %v249, %v263
      %v300 = vmul.f32 %v249, %v264
      %v301 = vmul.f32 %v254, %v263
      %v302 = vmul.f32 %v254, %v264
      %v303 = vmul.f32 %v259, %v263
      %v304 = vmul.f32 %v259, %v264
      %v305 = vmul.f32 %v249, %v265
      %v306 = vmul.f32 %v249, %v266
      %v307 = vmul.f32 %v254, %v265
      %v308 = vmul.f32 %v254, %v266
      %v309 = vmul.f32 %v259, %v265
      %v310 = vmul.f32 %v259, %v266
      %v311 = vmul.f32 %v249, %v267
      %v312 = vmul.f32 %v249, %v268
      %v313 = vmul.f32 %v254, %v267
      %v314 = vmul.f32 %v254, %v268
      %v315 = vmul.f32 %v259, %v267
      %v316 = vmul.f32 %v259, %v268
      %v317 = vmul.f32 %v249, %v269
      %v318 = vmul.f32 %v249, %v270
      %v319 = vmul.f32 %v254, %v269
      %v320 = vmul.f32 %v254, %v270
      %v321 = vmul.f32 %v259, %v269
      %v322 = vmul.f32 %v259, %v270
      %v323 = vmul.f32 %v249, %v271
      %v324 = vmul.f32 %v249, %v272
      %v325 = vmul.f32 %v254, %v271
      %v326 = vmul.f32 %v254, %v272
      %v327 = vmul.f32 %v259, %v271
      %v328 = vmul.f32 %v259, %v272
      %v329 = vmul.f32 %v249, %v273
      %v330 = vmul.f32 %v249, %v274
      %v331 = vmul.f32 %v254, %v273
      %v332 = vmul.f32 %v254, %v274
      %v333 = vmul.f32 %v259, %v273
      %v334 = vmul.f32 %v259, %v274
      %v335 = vmul.f32 %v249, %v275
      %v336 = vmul.f32 %v249, %v276
      %v337 = vmul.f32 %v254, %v275
      %v338 = vmul.f32 %v254, %v276
      %v339 = vmul.f32 %v259, %v275
      %v340 = vmul.f32 %v259, %v276
      %v341 = vadd.f32 %v293, 0.0
      %v342 = vadd.f32 %v294, 0.0
      %v343 = vadd.f32 %v295, 0.0
      %v344 = vadd.f32 %v296, 0.0
      %v345 = vadd.f32 %v297, 0.0
      %v346 = vadd.f32 %v298, 0.0
      %v347 = vadd.f32 %v299, 0.0
      %v348 = vadd.f32 %v300, 0.0
      %v349 = vadd.f32 %v301, 0.0
      %v350 = vadd.f32 %v302, 0.0
      %v351 = vadd.f32 %v303, 0.0
      %v352 = vadd.f32 %v304, 0.0
      %v353 = vadd.f32 %v305, 0.0
      %v354 = vadd.f32 %v306, 0.0
      %v355 = vadd.f32 %v307, 0.0
      %v356 = vadd.f32 %v308, 0.0
      %v357 = vadd.f32 %v309, 0.0
      %v358 = vadd.f32 %v310, 0.0
      %v359 = vadd.f32 %v311, 0.0
      %v360 = vadd.f32 %v312, 0.0
      %v361 = vadd.f32 %v313, 0.0
      %v362 = vadd.f32 %v314, 0.0
      %v363 = vadd.f32 %v315, 0.0
      %v364 = vadd.f32 %v316, 0.0
      %v365 = vadd.f32 %v317, 0.0
      %v366 = vadd.f32 %v318, 0.0
      %v367 = vadd.f32 %v319, 0.0
      %v368 = vadd.f32 %v320, 0.0
      %v369 = vadd.f32 %v321, 0.0
      %v370 = vadd.f32 %v322, 0.0
      %v371 = vadd.f32 %v323, 0.0
      %v372 = vadd.f32 %v324, 0.0
      %v373 = vadd.f32 %v325, 0.0
      %v374 = vadd.f32 %v326, 0.0
      %v375 = vadd.f32 %v327, 0.0
      %v376 = vadd.f32 %v328, 0.0
      %v377 = vadd.f32 %v329, 0.0
      %v378 = vadd.f32 %v330, 0.0
      %v379 = vadd.f32 %v331, 0.0
      %v380 = vadd.f32 %v332, 0.0
      %v381 = vadd.f32 %v333, 0.0
      %v382 = vadd.f32 %v334, 0.0
      %v383 = vadd.f32 %v335, 0.0
      %v384 = vadd.f32 %v336, 0.0
      %v385 = vadd.f32 %v337, 0.0
      %v386 = vadd.f32 %v338, 0.0
      %v387 = vadd.f32 %v339, 0.0
      %v388 = vadd.f32 %v340, 0.0
      %v392 = vrot.slane %v202, 7
      %v393 = vrot.slane %v203, 6
      %v394 = vsel %vm223, %v201, %v392
      %vm395 = vcmask 1041408
      %v396 = vsel %vm395, %v394, %v393
      %v397 = vsel %vm225, %v201, %v392
      %vm398 = vcmask 1042433
      %v399 = vsel %vm398, %v397, %v393
      %v400 = vrot.slane %v399, 1
      %v401 = vsel %vm228, %v201, %v392
      %vm402 = vcmask 1043458
      %v403 = vsel %vm402, %v401, %v393
      %v404 = vrot.slane %v403, 2
      %v405 = vsel %vm231, %v201, %v392
      %vm406 = vcmask 1044483
      %v407 = vsel %vm406, %v405, %v393
      %v408 = vrot.slane %v407, 3
      %v409 = vsel %vm234, %v201, %v392
      %vm410 = vcmask 1045508
      %v411 = vsel %vm410, %v409, %v393
      %v412 = vrot.slane %v411, 4
      %v413 = vsel %vm237, %v201, %v392
      %vm414 = vcmask 1046533
      %v415 = vsel %vm414, %v413, %v393
      %v416 = vrot.slane %v415, 5
      %v417 = vsel %vm240, %v201, %v392
      %vm418 = vcmask 1045504
      %v419 = vsel %vm418, %v393, %v417
      %v420 = vrot.slane %v419, 6
      %v421 = vsel %vm243, %v392, %v201
      %vm422 = vcmask 1046529
      %v423 = vsel %vm422, %v393, %v421
      %v424 = vrot.slane %v423, 7
      %425 = vset.pattern.permute.xlu0 1
      %426 = vperm.xlu0 %425, %v204
      %v427 = vpop.permute.xlu0 %426
      %429 = vset.pattern.permute.xlu0 1
      %430 = vperm.xlu0 %429, %v205
      %v431 = vpop.permute.xlu0 %430
      %433 = vset.pattern.permute.xlu0 1
      %434 = vperm.xlu0 %433, %v206
      %v435 = vpop.permute.xlu0 %434
      %v437 = vperm.slane %v396, 0
      %v438 = vperm.slane %v396, 1
      %v439 = vperm.slane %v396, 2
      %v440 = vperm.slane %v400, 0
      %v441 = vperm.slane %v400, 1
      %v442 = vperm.slane %v400, 2
      %v443 = vperm.slane %v404, 0
      %v444 = vperm.slane %v404, 1
      %v445 = vperm.slane %v404, 2
      %v446 = vperm.slane %v408, 0
      %v447 = vperm.slane %v408, 1
      %v448 = vperm.slane %v408, 2
      %v449 = vperm.slane %v412, 0
      %v450 = vperm.slane %v412, 1
      %v451 = vperm.slane %v412, 2
      %v452 = vperm.slane %v416, 0
      %v453 = vperm.slane %v416, 1
      %v454 = vperm.slane %v416, 2
      %v455 = vperm.slane %v420, 0
      %v456 = vperm.slane %v420, 1
      %v457 = vperm.slane %v420, 2
      %v458 = vperm.slane %v424, 0
      %v459 = vperm.slane %v424, 1
      %v460 = vperm.slane %v424, 2
      %v485 = vmul.f32 %v427, %v437
      %v486 = vmul.f32 %v427, %v438
      %v487 = vmul.f32 %v427, %v439
      %v488 = vmul.f32 %v431, %v437
      %v489 = vmul.f32 %v431, %v438
      %v490 = vmul.f32 %v431, %v439
      %v491 = vmul.f32 %v435, %v437
      %v492 = vmul.f32 %v435, %v438
      %v493 = vmul.f32 %v435, %v439
      %v494 = vmul.f32 %v427, %v440
      %v495 = vmul.f32 %v427, %v441
      %v496 = vmul.f32 %v427, %v442
      %v497 = vmul.f32 %v431, %v440
      %v498 = vmul.f32 %v431, %v441
      %v499 = vmul.f32 %v431, %v442
      %v500 = vmul.f32 %v435, %v440
      %v501 = vmul.f32 %v435, %v441
      %v502 = vmul.f32 %v435, %v442
      %v503 = vmul.f32 %v427, %v443
      %v504 = vmul.f32 %v427, %v444
      %v505 = vmul.f32 %v427, %v445
      %v506 = vmul.f32 %v431, %v443
      %v507 = vmul.f32 %v431, %v444
      %v508 = vmul.f32 %v431, %v445
      %v509 = vmul.f32 %v435, %v443
      %v510 = vmul.f32 %v435, %v444
      %v511 = vmul.f32 %v435, %v445
      %v512 = vmul.f32 %v427, %v446
      %v513 = vmul.f32 %v427, %v447
      %v514 = vmul.f32 %v427, %v448
      %v515 = vmul.f32 %v431, %v446
      %v516 = vmul.f32 %v431, %v447
      %v517 = vmul.f32 %v431, %v448
      %v518 = vmul.f32 %v435, %v446
      %v519 = vmul.f32 %v435, %v447
      %v520 = vmul.f32 %v435, %v448
      %v521 = vmul.f32 %v427, %v449
      %v522 = vmul.f32 %v427, %v450
      %v523 = vmul.f32 %v427, %v451
      %v524 = vmul.f32 %v431, %v449
      %v525 = vmul.f32 %v431, %v450
      %v526 = vmul.f32 %v431, %v451
      %v527 = vmul.f32 %v435, %v449
      %v528 = vmul.f32 %v435, %v450
      %v529 = vmul.f32 %v435, %v451
      %v530 = vmul.f32 %v427, %v452
      %v531 = vmul.f32 %v427, %v453
      %v532 = vmul.f32 %v427, %v454
      %v533 = vmul.f32 %v431, %v452
      %v534 = vmul.f32 %v431, %v453
      %v535 = vmul.f32 %v431, %v454
      %v536 = vmul.f32 %v435, %v452
      %v537 = vmul.f32 %v435, %v453
      %v538 = vmul.f32 %v435, %v454
      %v539 = vmul.f32 %v427, %v455
      %v540 = vmul.f32 %v427, %v456
      %v541 = vmul.f32 %v427, %v457
      %v542 = vmul.f32 %v431, %v455
      %v543 = vmul.f32 %v431, %v456
      %v544 = vmul.f32 %v431, %v457
      %v545 = vmul.f32 %v435, %v455
      %v546 = vmul.f32 %v435, %v456
      %v547 = vmul.f32 %v435, %v457
      %v548 = vmul.f32 %v427, %v458
      %v549 = vmul.f32 %v427, %v459
      %v550 = vmul.f32 %v427, %v460
      %v551 = vmul.f32 %v431, %v458
      %v552 = vmul.f32 %v431, %v459
      %v553 = vmul.f32 %v431, %v460
      %v554 = vmul.f32 %v435, %v458
      %v555 = vmul.f32 %v435, %v459
      %v556 = vmul.f32 %v435, %v460
      %629 = vrot.lane.b32.xlu0 %v485, 127
      %v630 = vpop.permute.xlu0 %629
      %631 = vrot.lane.b32.xlu0 %v486, 127
      %v632 = vpop.permute.xlu0 %631
      %633 = vrot.lane.b32.xlu0 %v487, 127
      %v634 = vpop.permute.xlu0 %633
      %635 = vrot.lane.b32.xlu0 %v488, 127
      %v636 = vpop.permute.xlu0 %635
      %637 = vrot.lane.b32.xlu0 %v489, 127
      %v638 = vpop.permute.xlu0 %637
      %639 = vrot.lane.b32.xlu0 %v490, 127
      %v640 = vpop.permute.xlu0 %639
      %641 = vrot.lane.b32.xlu0 %v491, 127
      %v642 = vpop.permute.xlu0 %641
      %643 = vrot.lane.b32.xlu0 %v492, 127
      %v644 = vpop.permute.xlu0 %643
      %645 = vrot.lane.b32.xlu0 %v493, 127
      %v646 = vpop.permute.xlu0 %645
      %647 = vrot.lane.b32.xlu0 %v494, 127
      %v648 = vpop.permute.xlu0 %647
      %649 = vrot.lane.b32.xlu0 %v495, 127
      %v650 = vpop.permute.xlu0 %649
      %651 = vrot.lane.b32.xlu0 %v496, 127
      %v652 = vpop.permute.xlu0 %651
      %653 = vrot.lane.b32.xlu0 %v497, 127
      %v654 = vpop.permute.xlu0 %653
      %655 = vrot.lane.b32.xlu0 %v498, 127
      %v656 = vpop.permute.xlu0 %655
      %657 = vrot.lane.b32.xlu0 %v499, 127
      %v658 = vpop.permute.xlu0 %657
      %659 = vrot.lane.b32.xlu0 %v500, 127
      %v660 = vpop.permute.xlu0 %659
      %661 = vrot.lane.b32.xlu0 %v501, 127
      %v662 = vpop.permute.xlu0 %661
      %663 = vrot.lane.b32.xlu0 %v502, 127
      %v664 = vpop.permute.xlu0 %663
      %665 = vrot.lane.b32.xlu0 %v503, 127
      %v666 = vpop.permute.xlu0 %665
      %667 = vrot.lane.b32.xlu0 %v504, 127
      %v668 = vpop.permute.xlu0 %667
      %669 = vrot.lane.b32.xlu0 %v505, 127
      %v670 = vpop.permute.xlu0 %669
      %671 = vrot.lane.b32.xlu0 %v506, 127
      %v672 = vpop.permute.xlu0 %671
      %673 = vrot.lane.b32.xlu0 %v507, 127
      %v674 = vpop.permute.xlu0 %673
      %675 = vrot.lane.b32.xlu0 %v508, 127
      %v676 = vpop.permute.xlu0 %675
      %677 = vrot.lane.b32.xlu0 %v509, 127
      %v678 = vpop.permute.xlu0 %677
      %679 = vrot.lane.b32.xlu0 %v510, 127
      %v680 = vpop.permute.xlu0 %679
      %681 = vrot.lane.b32.xlu0 %v511, 127
      %v682 = vpop.permute.xlu0 %681
      %683 = vrot.lane.b32.xlu0 %v512, 127
      %v684 = vpop.permute.xlu0 %683
      %685 = vrot.lane.b32.xlu0 %v513, 127
      %v686 = vpop.permute.xlu0 %685
      %687 = vrot.lane.b32.xlu0 %v514, 127
      %v688 = vpop.permute.xlu0 %687
      %689 = vrot.lane.b32.xlu0 %v515, 127
      %v690 = vpop.permute.xlu0 %689
      %691 = vrot.lane.b32.xlu0 %v516, 127
      %v692 = vpop.permute.xlu0 %691
      %693 = vrot.lane.b32.xlu0 %v517, 127
      %v694 = vpop.permute.xlu0 %693
      %695 = vrot.lane.b32.xlu0 %v518, 127
      %v696 = vpop.permute.xlu0 %695
      %697 = vrot.lane.b32.xlu0 %v519, 127
      %v698 = vpop.permute.xlu0 %697
      %699 = vrot.lane.b32.xlu0 %v520, 127
      %v700 = vpop.permute.xlu0 %699
      %701 = vrot.lane.b32.xlu0 %v521, 127
      %v702 = vpop.permute.xlu0 %701
      %703 = vrot.lane.b32.xlu0 %v522, 127
      %v704 = vpop.permute.xlu0 %703
      %705 = vrot.lane.b32.xlu0 %v523, 127
      %v706 = vpop.permute.xlu0 %705
      %707 = vrot.lane.b32.xlu0 %v524, 127
      %v708 = vpop.permute.xlu0 %707
      %709 = vrot.lane.b32.xlu0 %v525, 127
      %v710 = vpop.permute.xlu0 %709
      %711 = vrot.lane.b32.xlu0 %v526, 127
      %v712 = vpop.permute.xlu0 %711
      %713 = vrot.lane.b32.xlu0 %v527, 127
      %v714 = vpop.permute.xlu0 %713
      %715 = vrot.lane.b32.xlu0 %v528, 127
      %v716 = vpop.permute.xlu0 %715
      %717 = vrot.lane.b32.xlu0 %v529, 127
      %v718 = vpop.permute.xlu0 %717
      %719 = vrot.lane.b32.xlu0 %v530, 127
      %v720 = vpop.permute.xlu0 %719
      %721 = vrot.lane.b32.xlu0 %v531, 127
      %v722 = vpop.permute.xlu0 %721
      %723 = vrot.lane.b32.xlu0 %v532, 127
      %v724 = vpop.permute.xlu0 %723
      %725 = vrot.lane.b32.xlu0 %v533, 127
      %v726 = vpop.permute.xlu0 %725
      %727 = vrot.lane.b32.xlu0 %v534, 127
      %v728 = vpop.permute.xlu0 %727
      %729 = vrot.lane.b32.xlu0 %v535, 127
      %v730 = vpop.permute.xlu0 %729
      %731 = vrot.lane.b32.xlu0 %v536, 127
      %v732 = vpop.permute.xlu0 %731
      %733 = vrot.lane.b32.xlu0 %v537, 127
      %v734 = vpop.permute.xlu0 %733
      %735 = vrot.lane.b32.xlu0 %v538, 127
      %v736 = vpop.permute.xlu0 %735
      %737 = vrot.lane.b32.xlu0 %v539, 127
      %v738 = vpop.permute.xlu0 %737
      %739 = vrot.lane.b32.xlu0 %v540, 127
      %v740 = vpop.permute.xlu0 %739
      %741 = vrot.lane.b32.xlu0 %v541, 127
      %v742 = vpop.permute.xlu0 %741
      %743 = vrot.lane.b32.xlu0 %v542, 127
      %v744 = vpop.permute.xlu0 %743
      %745 = vrot.lane.b32.xlu0 %v543, 127
      %v746 = vpop.permute.xlu0 %745
      %747 = vrot.lane.b32.xlu0 %v544, 127
      %v748 = vpop.permute.xlu0 %747
      %749 = vrot.lane.b32.xlu0 %v545, 127
      %v750 = vpop.permute.xlu0 %749
      %751 = vrot.lane.b32.xlu0 %v546, 127
      %v752 = vpop.permute.xlu0 %751
      %753 = vrot.lane.b32.xlu0 %v547, 127
      %v754 = vpop.permute.xlu0 %753
      %755 = vrot.lane.b32.xlu0 %v548, 127
      %v756 = vpop.permute.xlu0 %755
      %757 = vrot.lane.b32.xlu0 %v549, 127
      %v758 = vpop.permute.xlu0 %757
      %759 = vrot.lane.b32.xlu0 %v550, 127
      %v760 = vpop.permute.xlu0 %759
      %761 = vrot.lane.b32.xlu0 %v551, 127
      %v762 = vpop.permute.xlu0 %761
      %763 = vrot.lane.b32.xlu0 %v552, 127
      %v764 = vpop.permute.xlu0 %763
      %765 = vrot.lane.b32.xlu0 %v553, 127
      %v766 = vpop.permute.xlu0 %765
      %767 = vrot.lane.b32.xlu0 %v554, 127
      %v768 = vpop.permute.xlu0 %767
      %769 = vrot.lane.b32.xlu0 %v555, 127
      %v770 = vpop.permute.xlu0 %769
      %771 = vrot.lane.b32.xlu0 %v556, 127
      %v772 = vpop.permute.xlu0 %771
      %vm773 = vcmask 1039360
      %v774 = vsel %vm773, %v630, %v632
      %v775 = vsel %vm773, %v632, %v634
      %v776 = vsel %vm773, %v636, %v638
      %v777 = vsel %vm773, %v638, %v640
      %v778 = vsel %vm773, %v642, %v644
      %v779 = vsel %vm773, %v644, %v646
      %v780 = vsel %vm773, %v648, %v650
      %v781 = vsel %vm773, %v650, %v652
      %v782 = vsel %vm773, %v654, %v656
      %v783 = vsel %vm773, %v656, %v658
      %v784 = vsel %vm773, %v660, %v662
      %v785 = vsel %vm773, %v662, %v664
      %v786 = vsel %vm773, %v666, %v668
      %v787 = vsel %vm773, %v668, %v670
      %v788 = vsel %vm773, %v672, %v674
      %v789 = vsel %vm773, %v674, %v676
      %v790 = vsel %vm773, %v678, %v680
      %v791 = vsel %vm773, %v680, %v682
      %v792 = vsel %vm773, %v684, %v686
      %v793 = vsel %vm773, %v686, %v688
      %v794 = vsel %vm773, %v690, %v692
      %v795 = vsel %vm773, %v692, %v694
      %v796 = vsel %vm773, %v696, %v698
      %v797 = vsel %vm773, %v698, %v700
      %v798 = vsel %vm773, %v702, %v704
      %v799 = vsel %vm773, %v704, %v706
      %v800 = vsel %vm773, %v708, %v710
      %v801 = vsel %vm773, %v710, %v712
      %v802 = vsel %vm773, %v714, %v716
      %v803 = vsel %vm773, %v716, %v718
      %v804 = vsel %vm773, %v720, %v722
      %v805 = vsel %vm773, %v722, %v724
      %v806 = vsel %vm773, %v726, %v728
      %v807 = vsel %vm773, %v728, %v730
      %v808 = vsel %vm773, %v732, %v734
      %v809 = vsel %vm773, %v734, %v736
      %v810 = vsel %vm773, %v738, %v740
      %v811 = vsel %vm773, %v740, %v742
      %v812 = vsel %vm773, %v744, %v746
      %v813 = vsel %vm773, %v746, %v748
      %v814 = vsel %vm773, %v750, %v752
      %v815 = vsel %vm773, %v752, %v754
      %v816 = vsel %vm773, %v756, %v758
      %v817 = vsel %vm773, %v758, %v760
      %v818 = vsel %vm773, %v762, %v764
      %v819 = vsel %vm773, %v764, %v766
      %v820 = vsel %vm773, %v768, %v770
      %v821 = vsel %vm773, %v770, %v772
      %v870 = vadd.f32 %v341, %v774
      %v871 = vadd.f32 %v342, %v775
      %v872 = vadd.f32 %v343, %v776
      %v873 = vadd.f32 %v344, %v777
      %v874 = vadd.f32 %v345, %v778
      %v875 = vadd.f32 %v346, %v779
      %v876 = vadd.f32 %v347, %v780
      %v877 = vadd.f32 %v348, %v781
      %v878 = vadd.f32 %v349, %v782
      %v879 = vadd.f32 %v350, %v783
      %v880 = vadd.f32 %v351, %v784
      %v881 = vadd.f32 %v352, %v785
      %v882 = vadd.f32 %v353, %v786
      %v883 = vadd.f32 %v354, %v787
      %v884 = vadd.f32 %v355, %v788
      %v885 = vadd.f32 %v356, %v789
      %v886 = vadd.f32 %v357, %v790
      %v887 = vadd.f32 %v358, %v791
      %v888 = vadd.f32 %v359, %v792
      %v889 = vadd.f32 %v360, %v793
      %v890 = vadd.f32 %v361, %v794
      %v891 = vadd.f32 %v362, %v795
      %v892 = vadd.f32 %v363, %v796
      %v893 = vadd.f32 %v364, %v797
      %v894 = vadd.f32 %v365, %v798
      %v895 = vadd.f32 %v366, %v799
      %v896 = vadd.f32 %v367, %v800
      %v897 = vadd.f32 %v368, %v801
      %v898 = vadd.f32 %v369, %v802
      %v899 = vadd.f32 %v370, %v803
      %v900 = vadd.f32 %v371, %v804
      %v901 = vadd.f32 %v372, %v805
      %v902 = vadd.f32 %v373, %v806
      %v903 = vadd.f32 %v374, %v807
      %v904 = vadd.f32 %v375, %v808
      %v905 = vadd.f32 %v376, %v809
      %v906 = vadd.f32 %v377, %v810
      %v907 = vadd.f32 %v378, %v811
      %v908 = vadd.f32 %v379, %v812
      %v909 = vadd.f32 %v380, %v813
      %v910 = vadd.f32 %v381, %v814
      %v911 = vadd.f32 %v382, %v815
      %v912 = vadd.f32 %v383, %v816
      %v913 = vadd.f32 %v384, %v817
      %v914 = vadd.f32 %v385, %v818
      %v915 = vadd.f32 %v386, %v819
      %v916 = vadd.f32 %v387, %v820
      %v917 = vadd.f32 %v388, %v821
      %v919 = vperm.slane %v212, 0
      %v920 = vperm.slane %v212, 1
      %921 = vrot.lane.b32.xlu0 %v919, 2
      %v922 = vpop.permute.xlu0 %921
      %923 = vrot.lane.b32.xlu0 %v920, 2
      %v924 = vpop.permute.xlu0 %923
      %vm925 = vcmask 15360
      %v926 = vsel %vm925, %v922, %v924
      %v930 = vmul.f32 %v201, %v922
      %v931 = vmul.f32 %v202, %v926
      %v932 = vmul.f32 %v203, %v924
      %v936 = vrot.slane %v931, 7
      %v937 = vrot.slane %v932, 6
      %v938 = vsel %vm223, %v930, %v936
      %v939 = vsel %vm395, %v938, %v937
      %v940 = vsel %vm225, %v930, %v936
      %v941 = vsel %vm398, %v940, %v937
      %v942 = vrot.slane %v941, 1
      %v943 = vsel %vm228, %v930, %v936
      %v944 = vsel %vm402, %v943, %v937
      %v945 = vrot.slane %v944, 2
      %v946 = vsel %vm231, %v930, %v936
      %v947 = vsel %vm406, %v946, %v937
      %v948 = vrot.slane %v947, 3
      %v949 = vsel %vm234, %v930, %v936
      %v950 = vsel %vm410, %v949, %v937
      %v951 = vrot.slane %v950, 4
      %v952 = vsel %vm237, %v930, %v936
      %v953 = vsel %vm414, %v952, %v937
      %v954 = vrot.slane %v953, 5
      %v955 = vsel %vm240, %v930, %v936
      %v956 = vsel %vm418, %v937, %v955
      %v957 = vrot.slane %v956, 6
      %v958 = vsel %vm243, %v936, %v930
      %v959 = vsel %vm422, %v937, %v958
      %v960 = vrot.slane %v959, 7
      %961 = vset.pattern.permute.xlu0 2
      %962 = vperm.xlu0 %961, %v204
      %v963 = vpop.permute.xlu0 %962
      %965 = vset.pattern.permute.xlu0 2
      %966 = vperm.xlu0 %965, %v205
      %v967 = vpop.permute.xlu0 %966
      %969 = vset.pattern.permute.xlu0 2
      %970 = vperm.xlu0 %969, %v206
      %v971 = vpop.permute.xlu0 %970
      %v973 = vperm.slane %v939, 0
      %v974 = vperm.slane %v939, 1
      %v975 = vperm.slane %v939, 2
      %v976 = vperm.slane %v942, 0
      %v977 = vperm.slane %v942, 1
      %v978 = vperm.slane %v942, 2
      %v979 = vperm.slane %v945, 0
      %v980 = vperm.slane %v945, 1
      %v981 = vperm.slane %v945, 2
      %v982 = vperm.slane %v948, 0
      %v983 = vperm.slane %v948, 1
      %v984 = vperm.slane %v948, 2
      %v985 = vperm.slane %v951, 0
      %v986 = vperm.slane %v951, 1
      %v987 = vperm.slane %v951, 2
      %v988 = vperm.slane %v954, 0
      %v989 = vperm.slane %v954, 1
      %v990 = vperm.slane %v954, 2
      %v991 = vperm.slane %v957, 0
      %v992 = vperm.slane %v957, 1
      %v993 = vperm.slane %v957, 2
      %v994 = vperm.slane %v960, 0
      %v995 = vperm.slane %v960, 1
      %v996 = vperm.slane %v960, 2
      %v1021 = vmul.f32 %v963, %v973
      %v1022 = vmul.f32 %v963, %v974
      %v1023 = vmul.f32 %v963, %v975
      %v1024 = vmul.f32 %v967, %v973
      %v1025 = vmul.f32 %v967, %v974
      %v1026 = vmul.f32 %v967, %v975
      %v1027 = vmul.f32 %v971, %v973
      %v1028 = vmul.f32 %v971, %v974
      %v1029 = vmul.f32 %v971, %v975
      %v1030 = vmul.f32 %v963, %v976
      %v1031 = vmul.f32 %v963, %v977
      %v1032 = vmul.f32 %v963, %v978
      %v1033 = vmul.f32 %v967, %v976
      %v1034 = vmul.f32 %v967, %v977
      %v1035 = vmul.f32 %v967, %v978
      %v1036 = vmul.f32 %v971, %v976
      %v1037 = vmul.f32 %v971, %v977
      %v1038 = vmul.f32 %v971, %v978
      %v1039 = vmul.f32 %v963, %v979
      %v1040 = vmul.f32 %v963, %v980
      %v1041 = vmul.f32 %v963, %v981
      %v1042 = vmul.f32 %v967, %v979
      %v1043 = vmul.f32 %v967, %v980
      %v1044 = vmul.f32 %v967, %v981
      %v1045 = vmul.f32 %v971, %v979
      %v1046 = vmul.f32 %v971, %v980
      %v1047 = vmul.f32 %v971, %v981
      %v1048 = vmul.f32 %v963, %v982
      %v1049 = vmul.f32 %v963, %v983
      %v1050 = vmul.f32 %v963, %v984
      %v1051 = vmul.f32 %v967, %v982
      %v1052 = vmul.f32 %v967, %v983
      %v1053 = vmul.f32 %v967, %v984
      %v1054 = vmul.f32 %v971, %v982
      %v1055 = vmul.f32 %v971, %v983
      %v1056 = vmul.f32 %v971, %v984
      %v1057 = vmul.f32 %v963, %v985
      %v1058 = vmul.f32 %v963, %v986
      %v1059 = vmul.f32 %v963, %v987
      %v1060 = vmul.f32 %v967, %v985
      %v1061 = vmul.f32 %v967, %v986
      %v1062 = vmul.f32 %v967, %v987
      %v1063 = vmul.f32 %v971, %v985
      %v1064 = vmul.f32 %v971, %v986
      %v1065 = vmul.f32 %v971, %v987
      %v1066 = vmul.f32 %v963, %v988
      %v1067 = vmul.f32 %v963, %v989
      %v1068 = vmul.f32 %v963, %v990
      %v1069 = vmul.f32 %v967, %v988
      %v1070 = vmul.f32 %v967, %v989
      %v1071 = vmul.f32 %v967, %v990
      %v1072 = vmul.f32 %v971, %v988
      %v1073 = vmul.f32 %v971, %v989
      %v1074 = vmul.f32 %v971, %v990
      %v1075 = vmul.f32 %v963, %v991
      %v1076 = vmul.f32 %v963, %v992
      %v1077 = vmul.f32 %v963, %v993
      %v1078 = vmul.f32 %v967, %v991
      %v1079 = vmul.f32 %v967, %v992
      %v1080 = vmul.f32 %v967, %v993
      %v1081 = vmul.f32 %v971, %v991
      %v1082 = vmul.f32 %v971, %v992
      %v1083 = vmul.f32 %v971, %v993
      %v1084 = vmul.f32 %v963, %v994
      %v1085 = vmul.f32 %v963, %v995
      %v1086 = vmul.f32 %v963, %v996
      %v1087 = vmul.f32 %v967, %v994
      %v1088 = vmul.f32 %v967, %v995
      %v1089 = vmul.f32 %v967, %v996
      %v1090 = vmul.f32 %v971, %v994
      %v1091 = vmul.f32 %v971, %v995
      %v1092 = vmul.f32 %v971, %v996
      %1165 = vrot.lane.b32.xlu0 %v1021, 126
      %v1166 = vpop.permute.xlu0 %1165
      %1167 = vrot.lane.b32.xlu0 %v1022, 126
      %v1168 = vpop.permute.xlu0 %1167
      %1169 = vrot.lane.b32.xlu0 %v1023, 126
      %v1170 = vpop.permute.xlu0 %1169
      %1171 = vrot.lane.b32.xlu0 %v1024, 126
      %v1172 = vpop.permute.xlu0 %1171
      %1173 = vrot.lane.b32.xlu0 %v1025, 126
      %v1174 = vpop.permute.xlu0 %1173
      %1175 = vrot.lane.b32.xlu0 %v1026, 126
      %v1176 = vpop.permute.xlu0 %1175
      %1177 = vrot.lane.b32.xlu0 %v1027, 126
      %v1178 = vpop.permute.xlu0 %1177
      %1179 = vrot.lane.b32.xlu0 %v1028, 126
      %v1180 = vpop.permute.xlu0 %1179
      %1181 = vrot.lane.b32.xlu0 %v1029, 126
      %v1182 = vpop.permute.xlu0 %1181
      %1183 = vrot.lane.b32.xlu0 %v1030, 126
      %v1184 = vpop.permute.xlu0 %1183
      %1185 = vrot.lane.b32.xlu0 %v1031, 126
      %v1186 = vpop.permute.xlu0 %1185
      %1187 = vrot.lane.b32.xlu0 %v1032, 126
      %v1188 = vpop.permute.xlu0 %1187
      %1189 = vrot.lane.b32.xlu0 %v1033, 126
      %v1190 = vpop.permute.xlu0 %1189
      %1191 = vrot.lane.b32.xlu0 %v1034, 126
      %v1192 = vpop.permute.xlu0 %1191
      %1193 = vrot.lane.b32.xlu0 %v1035, 126
      %v1194 = vpop.permute.xlu0 %1193
      %1195 = vrot.lane.b32.xlu0 %v1036, 126
      %v1196 = vpop.permute.xlu0 %1195
      %1197 = vrot.lane.b32.xlu0 %v1037, 126
      %v1198 = vpop.permute.xlu0 %1197
      %1199 = vrot.lane.b32.xlu0 %v1038, 126
      %v1200 = vpop.permute.xlu0 %1199
      %1201 = vrot.lane.b32.xlu0 %v1039, 126
      %v1202 = vpop.permute.xlu0 %1201
      %1203 = vrot.lane.b32.xlu0 %v1040, 126
      %v1204 = vpop.permute.xlu0 %1203
      %1205 = vrot.lane.b32.xlu0 %v1041, 126
      %v1206 = vpop.permute.xlu0 %1205
      %1207 = vrot.lane.b32.xlu0 %v1042, 126
      %v1208 = vpop.permute.xlu0 %1207
      %1209 = vrot.lane.b32.xlu0 %v1043, 126
      %v1210 = vpop.permute.xlu0 %1209
      %1211 = vrot.lane.b32.xlu0 %v1044, 126
      %v1212 = vpop.permute.xlu0 %1211
      %1213 = vrot.lane.b32.xlu0 %v1045, 126
      %v1214 = vpop.permute.xlu0 %1213
      %1215 = vrot.lane.b32.xlu0 %v1046, 126
      %v1216 = vpop.permute.xlu0 %1215
      %1217 = vrot.lane.b32.xlu0 %v1047, 126
      %v1218 = vpop.permute.xlu0 %1217
      %1219 = vrot.lane.b32.xlu0 %v1048, 126
      %v1220 = vpop.permute.xlu0 %1219
      %1221 = vrot.lane.b32.xlu0 %v1049, 126
      %v1222 = vpop.permute.xlu0 %1221
      %1223 = vrot.lane.b32.xlu0 %v1050, 126
      %v1224 = vpop.permute.xlu0 %1223
      %1225 = vrot.lane.b32.xlu0 %v1051, 126
      %v1226 = vpop.permute.xlu0 %1225
      %1227 = vrot.lane.b32.xlu0 %v1052, 126
      %v1228 = vpop.permute.xlu0 %1227
      %1229 = vrot.lane.b32.xlu0 %v1053, 126
      %v1230 = vpop.permute.xlu0 %1229
      %1231 = vrot.lane.b32.xlu0 %v1054, 126
      %v1232 = vpop.permute.xlu0 %1231
      %1233 = vrot.lane.b32.xlu0 %v1055, 126
      %v1234 = vpop.permute.xlu0 %1233
      %1235 = vrot.lane.b32.xlu0 %v1056, 126
      %v1236 = vpop.permute.xlu0 %1235
      %1237 = vrot.lane.b32.xlu0 %v1057, 126
      %v1238 = vpop.permute.xlu0 %1237
      %1239 = vrot.lane.b32.xlu0 %v1058, 126
      %v1240 = vpop.permute.xlu0 %1239
      %1241 = vrot.lane.b32.xlu0 %v1059, 126
      %v1242 = vpop.permute.xlu0 %1241
      %1243 = vrot.lane.b32.xlu0 %v1060, 126
      %v1244 = vpop.permute.xlu0 %1243
      %1245 = vrot.lane.b32.xlu0 %v1061, 126
      %v1246 = vpop.permute.xlu0 %1245
      %1247 = vrot.lane.b32.xlu0 %v1062, 126
      %v1248 = vpop.permute.xlu0 %1247
      %1249 = vrot.lane.b32.xlu0 %v1063, 126
      %v1250 = vpop.permute.xlu0 %1249
      %1251 = vrot.lane.b32.xlu0 %v1064, 126
      %v1252 = vpop.permute.xlu0 %1251
      %1253 = vrot.lane.b32.xlu0 %v1065, 126
      %v1254 = vpop.permute.xlu0 %1253
      %1255 = vrot.lane.b32.xlu0 %v1066, 126
      %v1256 = vpop.permute.xlu0 %1255
      %1257 = vrot.lane.b32.xlu0 %v1067, 126
      %v1258 = vpop.permute.xlu0 %1257
      %1259 = vrot.lane.b32.xlu0 %v1068, 126
      %v1260 = vpop.permute.xlu0 %1259
      %1261 = vrot.lane.b32.xlu0 %v1069, 126
      %v1262 = vpop.permute.xlu0 %1261
      %1263 = vrot.lane.b32.xlu0 %v1070, 126
      %v1264 = vpop.permute.xlu0 %1263
      %1265 = vrot.lane.b32.xlu0 %v1071, 126
      %v1266 = vpop.permute.xlu0 %1265
      %1267 = vrot.lane.b32.xlu0 %v1072, 126
      %v1268 = vpop.permute.xlu0 %1267
      %1269 = vrot.lane.b32.xlu0 %v1073, 126
      %v1270 = vpop.permute.xlu0 %1269
      %1271 = vrot.lane.b32.xlu0 %v1074, 126
      %v1272 = vpop.permute.xlu0 %1271
      %1273 = vrot.lane.b32.xlu0 %v1075, 126
      %v1274 = vpop.permute.xlu0 %1273
      %1275 = vrot.lane.b32.xlu0 %v1076, 126
      %v1276 = vpop.permute.xlu0 %1275
      %1277 = vrot.lane.b32.xlu0 %v1077, 126
      %v1278 = vpop.permute.xlu0 %1277
      %1279 = vrot.lane.b32.xlu0 %v1078, 126
      %v1280 = vpop.permute.xlu0 %1279
      %1281 = vrot.lane.b32.xlu0 %v1079, 126
      %v1282 = vpop.permute.xlu0 %1281
      %1283 = vrot.lane.b32.xlu0 %v1080, 126
      %v1284 = vpop.permute.xlu0 %1283
      %1285 = vrot.lane.b32.xlu0 %v1081, 126
      %v1286 = vpop.permute.xlu0 %1285
      %1287 = vrot.lane.b32.xlu0 %v1082, 126
      %v1288 = vpop.permute.xlu0 %1287
      %1289 = vrot.lane.b32.xlu0 %v1083, 126
      %v1290 = vpop.permute.xlu0 %1289
      %1291 = vrot.lane.b32.xlu0 %v1084, 126
      %v1292 = vpop.permute.xlu0 %1291
      %1293 = vrot.lane.b32.xlu0 %v1085, 126
      %v1294 = vpop.permute.xlu0 %1293
      %1295 = vrot.lane.b32.xlu0 %v1086, 126
      %v1296 = vpop.permute.xlu0 %1295
      %1297 = vrot.lane.b32.xlu0 %v1087, 126
      %v1298 = vpop.permute.xlu0 %1297
      %1299 = vrot.lane.b32.xlu0 %v1088, 126
      %v1300 = vpop.permute.xlu0 %1299
      %1301 = vrot.lane.b32.xlu0 %v1089, 126
      %v1302 = vpop.permute.xlu0 %1301
      %1303 = vrot.lane.b32.xlu0 %v1090, 126
      %v1304 = vpop.permute.xlu0 %1303
      %1305 = vrot.lane.b32.xlu0 %v1091, 126
      %v1306 = vpop.permute.xlu0 %1305
      %1307 = vrot.lane.b32.xlu0 %v1092, 126
      %v1308 = vpop.permute.xlu0 %1307
      %vm1309 = vcmask 1031168
      %v1310 = vsel %vm1309, %v1166, %v1168
      %v1311 = vsel %vm1309, %v1168, %v1170
      %v1312 = vsel %vm1309, %v1172, %v1174
      %v1313 = vsel %vm1309, %v1174, %v1176
      %v1314 = vsel %vm1309, %v1178, %v1180
      %v1315 = vsel %vm1309, %v1180, %v1182
      %v1316 = vsel %vm1309, %v1184, %v1186
      %v1317 = vsel %vm1309, %v1186, %v1188
      %v1318 = vsel %vm1309, %v1190, %v1192
      %v1319 = vsel %vm1309, %v1192, %v1194
      %v1320 = vsel %vm1309, %v1196, %v1198
      %v1321 = vsel %vm1309, %v1198, %v1200
      %v1322 = vsel %vm1309, %v1202, %v1204
      %v1323 = vsel %vm1309, %v1204, %v1206
      %v1324 = vsel %vm1309, %v1208, %v1210
      %v1325 = vsel %vm1309, %v1210, %v1212
      %v1326 = vsel %vm1309, %v1214, %v1216
      %v1327 = vsel %vm1309, %v1216, %v1218
      %v1328 = vsel %vm1309, %v1220, %v1222
      %v1329 = vsel %vm1309, %v1222, %v1224
      %v1330 = vsel %vm1309, %v1226, %v1228
      %v1331 = vsel %vm1309, %v1228, %v1230
      %v1332 = vsel %vm1309, %v1232, %v1234
      %v1333 = vsel %vm1309, %v1234, %v1236
      %v1334 = vsel %vm1309, %v1238, %v1240
      %v1335 = vsel %vm1309, %v1240, %v1242
      %v1336 = vsel %vm1309, %v1244, %v1246
      %v1337 = vsel %vm1309, %v1246, %v1248
      %v1338 = vsel %vm1309, %v1250, %v1252
      %v1339 = vsel %vm1309, %v1252, %v1254
      %v1340 = vsel %vm1309, %v1256, %v1258
      %v1341 = vsel %vm1309, %v1258, %v1260
      %v1342 = vsel %vm1309, %v1262, %v1264
      %v1343 = vsel %vm1309, %v1264, %v1266
      %v1344 = vsel %vm1309, %v1268, %v1270
      %v1345 = vsel %vm1309, %v1270, %v1272
      %v1346 = vsel %vm1309, %v1274, %v1276
      %v1347 = vsel %vm1309, %v1276, %v1278
      %v1348 = vsel %vm1309, %v1280, %v1282
      %v1349 = vsel %vm1309, %v1282, %v1284
      %v1350 = vsel %vm1309, %v1286, %v1288
      %v1351 = vsel %vm1309, %v1288, %v1290
      %v1352 = vsel %vm1309, %v1292, %v1294
      %v1353 = vsel %vm1309, %v1294, %v1296
      %v1354 = vsel %vm1309, %v1298, %v1300
      %v1355 = vsel %vm1309, %v1300, %v1302
      %v1356 = vsel %vm1309, %v1304, %v1306
      %v1357 = vsel %vm1309, %v1306, %v1308
      %v1406 = vadd.f32 %v870, %v1310
      %v1407 = vadd.f32 %v871, %v1311
      %v1408 = vadd.f32 %v872, %v1312
      %v1409 = vadd.f32 %v873, %v1313
      %v1410 = vadd.f32 %v874, %v1314
      %v1411 = vadd.f32 %v875, %v1315
      %v1412 = vadd.f32 %v876, %v1316
      %v1413 = vadd.f32 %v877, %v1317
      %v1414 = vadd.f32 %v878, %v1318
      %v1415 = vadd.f32 %v879, %v1319
      %v1416 = vadd.f32 %v880, %v1320
      %v1417 = vadd.f32 %v881, %v1321
      %v1418 = vadd.f32 %v882, %v1322
      %v1419 = vadd.f32 %v883, %v1323
      %v1420 = vadd.f32 %v884, %v1324
      %v1421 = vadd.f32 %v885, %v1325
      %v1422 = vadd.f32 %v886, %v1326
      %v1423 = vadd.f32 %v887, %v1327
      %v1424 = vadd.f32 %v888, %v1328
      %v1425 = vadd.f32 %v889, %v1329
      %v1426 = vadd.f32 %v890, %v1330
      %v1427 = vadd.f32 %v891, %v1331
      %v1428 = vadd.f32 %v892, %v1332
      %v1429 = vadd.f32 %v893, %v1333
      %v1430 = vadd.f32 %v894, %v1334
      %v1431 = vadd.f32 %v895, %v1335
      %v1432 = vadd.f32 %v896, %v1336
      %v1433 = vadd.f32 %v897, %v1337
      %v1434 = vadd.f32 %v898, %v1338
      %v1435 = vadd.f32 %v899, %v1339
      %v1436 = vadd.f32 %v900, %v1340
      %v1437 = vadd.f32 %v901, %v1341
      %v1438 = vadd.f32 %v902, %v1342
      %v1439 = vadd.f32 %v903, %v1343
      %v1440 = vadd.f32 %v904, %v1344
      %v1441 = vadd.f32 %v905, %v1345
      %v1442 = vadd.f32 %v906, %v1346
      %v1443 = vadd.f32 %v907, %v1347
      %v1444 = vadd.f32 %v908, %v1348
      %v1445 = vadd.f32 %v909, %v1349
      %v1446 = vadd.f32 %v910, %v1350
      %v1447 = vadd.f32 %v911, %v1351
      %v1448 = vadd.f32 %v912, %v1352
      %v1449 = vadd.f32 %v913, %v1353
      %v1450 = vadd.f32 %v914, %v1354
      %v1451 = vadd.f32 %v915, %v1355
      %v1452 = vadd.f32 %v916, %v1356
      %v1453 = vadd.f32 %v917, %v1357
      %1454 = vrot.lane.b32.xlu0 %v214, 16
      %v1455 = vpop.permute.xlu0 %1454
      %1456 = vrot.lane.b32.xlu0 %v215, 16
      %v1457 = vpop.permute.xlu0 %1456
      %vm1458 = vcmask 130048
      %v1459 = vsel %vm1458, %v1455, %v1457
      %v1463 = vmul.f32 %v201, %v1455
      %v1464 = vmul.f32 %v202, %v1459
      %v1465 = vmul.f32 %v203, %v1457
      %v1469 = vrot.slane %v1464, 7
      %v1470 = vrot.slane %v1465, 6
      %v1471 = vsel %vm223, %v1463, %v1469
      %v1472 = vsel %vm395, %v1471, %v1470
      %v1473 = vsel %vm225, %v1463, %v1469
      %v1474 = vsel %vm398, %v1473, %v1470
      %v1475 = vrot.slane %v1474, 1
      %v1476 = vsel %vm228, %v1463, %v1469
      %v1477 = vsel %vm402, %v1476, %v1470
      %v1478 = vrot.slane %v1477, 2
      %v1479 = vsel %vm231, %v1463, %v1469
      %v1480 = vsel %vm406, %v1479, %v1470
      %v1481 = vrot.slane %v1480, 3
      %v1482 = vsel %vm234, %v1463, %v1469
      %v1483 = vsel %vm410, %v1482, %v1470
      %v1484 = vrot.slane %v1483, 4
      %v1485 = vsel %vm237, %v1463, %v1469
      %v1486 = vsel %vm414, %v1485, %v1470
      %v1487 = vrot.slane %v1486, 5
      %v1488 = vsel %vm240, %v1463, %v1469
      %v1489 = vsel %vm418, %v1470, %v1488
      %v1490 = vrot.slane %v1489, 6
      %v1491 = vsel %vm243, %v1469, %v1463
      %v1492 = vsel %vm422, %v1470, %v1491
      %v1493 = vrot.slane %v1492, 7
      %1494 = vset.pattern.permute.xlu0 3
      %1495 = vperm.xlu0 %1494, %v204
      %v1496 = vpop.permute.xlu0 %1495
      %1498 = vset.pattern.permute.xlu0 3
      %1499 = vperm.xlu0 %1498, %v205
      %v1500 = vpop.permute.xlu0 %1499
      %1502 = vset.pattern.permute.xlu0 3
      %1503 = vperm.xlu0 %1502, %v206
      %v1504 = vpop.permute.xlu0 %1503
      %v1506 = vperm.slane %v1472, 0
      %v1507 = vperm.slane %v1472, 1
      %v1508 = vperm.slane %v1472, 2
      %v1509 = vperm.slane %v1475, 0
      %v1510 = vperm.slane %v1475, 1
      %v1511 = vperm.slane %v1475, 2
      %v1512 = vperm.slane %v1478, 0
      %v1513 = vperm.slane %v1478, 1
      %v1514 = vperm.slane %v1478, 2
      %v1515 = vperm.slane %v1481, 0
      %v1516 = vperm.slane %v1481, 1
      %v1517 = vperm.slane %v1481, 2
      %v1518 = vperm.slane %v1484, 0
      %v1519 = vperm.slane %v1484, 1
      %v1520 = vperm.slane %v1484, 2
      %v1521 = vperm.slane %v1487, 0
      %v1522 = vperm.slane %v1487, 1
      %v1523 = vperm.slane %v1487, 2
      %v1524 = vperm.slane %v1490, 0
      %v1525 = vperm.slane %v1490, 1
      %v1526 = vperm.slane %v1490, 2
      %v1527 = vperm.slane %v1493, 0
      %v1528 = vperm.slane %v1493, 1
      %v1529 = vperm.slane %v1493, 2
      %v1554 = vmul.f32 %v1496, %v1506
      %v1555 = vmul.f32 %v1496, %v1507
      %v1556 = vmul.f32 %v1496, %v1508
      %v1557 = vmul.f32 %v1500, %v1506
      %v1558 = vmul.f32 %v1500, %v1507
      %v1559 = vmul.f32 %v1500, %v1508
      %v1560 = vmul.f32 %v1504, %v1506
      %v1561 = vmul.f32 %v1504, %v1507
      %v1562 = vmul.f32 %v1504, %v1508
      %v1563 = vmul.f32 %v1496, %v1509
      %v1564 = vmul.f32 %v1496, %v1510
      %v1565 = vmul.f32 %v1496, %v1511
      %v1566 = vmul.f32 %v1500, %v1509
      %v1567 = vmul.f32 %v1500, %v1510
      %v1568 = vmul.f32 %v1500, %v1511
      %v1569 = vmul.f32 %v1504, %v1509
      %v1570 = vmul.f32 %v1504, %v1510
      %v1571 = vmul.f32 %v1504, %v1511
      %v1572 = vmul.f32 %v1496, %v1512
      %v1573 = vmul.f32 %v1496, %v1513
      %v1574 = vmul.f32 %v1496, %v1514
      %v1575 = vmul.f32 %v1500, %v1512
      %v1576 = vmul.f32 %v1500, %v1513
      %v1577 = vmul.f32 %v1500, %v1514
      %v1578 = vmul.f32 %v1504, %v1512
      %v1579 = vmul.f32 %v1504, %v1513
      %v1580 = vmul.f32 %v1504, %v1514
      %v1581 = vmul.f32 %v1496, %v1515
      %v1582 = vmul.f32 %v1496, %v1516
      %v1583 = vmul.f32 %v1496, %v1517
      %v1584 = vmul.f32 %v1500, %v1515
      %v1585 = vmul.f32 %v1500, %v1516
      %v1586 = vmul.f32 %v1500, %v1517
      %v1587 = vmul.f32 %v1504, %v1515
      %v1588 = vmul.f32 %v1504, %v1516
      %v1589 = vmul.f32 %v1504, %v1517
      %v1590 = vmul.f32 %v1496, %v1518
      %v1591 = vmul.f32 %v1496, %v1519
      %v1592 = vmul.f32 %v1496, %v1520
      %v1593 = vmul.f32 %v1500, %v1518
      %v1594 = vmul.f32 %v1500, %v1519
      %v1595 = vmul.f32 %v1500, %v1520
      %v1596 = vmul.f32 %v1504, %v1518
      %v1597 = vmul.f32 %v1504, %v1519
      %v1598 = vmul.f32 %v1504, %v1520
      %v1599 = vmul.f32 %v1496, %v1521
      %v1600 = vmul.f32 %v1496, %v1522
      %v1601 = vmul.f32 %v1496, %v1523
      %v1602 = vmul.f32 %v1500, %v1521
      %v1603 = vmul.f32 %v1500, %v1522
      %v1604 = vmul.f32 %v1500, %v1523
      %v1605 = vmul.f32 %v1504, %v1521
      %v1606 = vmul.f32 %v1504, %v1522
      %v1607 = vmul.f32 %v1504, %v1523
      %v1608 = vmul.f32 %v1496, %v1524
      %v1609 = vmul.f32 %v1496, %v1525
      %v1610 = vmul.f32 %v1496, %v1526
      %v1611 = vmul.f32 %v1500, %v1524
      %v1612 = vmul.f32 %v1500, %v1525
      %v1613 = vmul.f32 %v1500, %v1526
      %v1614 = vmul.f32 %v1504, %v1524
      %v1615 = vmul.f32 %v1504, %v1525
      %v1616 = vmul.f32 %v1504, %v1526
      %v1617 = vmul.f32 %v1496, %v1527
      %v1618 = vmul.f32 %v1496, %v1528
      %v1619 = vmul.f32 %v1496, %v1529
      %v1620 = vmul.f32 %v1500, %v1527
      %v1621 = vmul.f32 %v1500, %v1528
      %v1622 = vmul.f32 %v1500, %v1529
      %v1623 = vmul.f32 %v1504, %v1527
      %v1624 = vmul.f32 %v1504, %v1528
      %v1625 = vmul.f32 %v1504, %v1529
      %1698 = vrot.lane.b32.xlu0 %v1554, 112
      %v1699 = vpop.permute.xlu0 %1698
      %1700 = vrot.lane.b32.xlu0 %v1555, 112
      %v1701 = vpop.permute.xlu0 %1700
      %1702 = vrot.lane.b32.xlu0 %v1556, 112
      %v1703 = vpop.permute.xlu0 %1702
      %1704 = vrot.lane.b32.xlu0 %v1557, 112
      %v1705 = vpop.permute.xlu0 %1704
      %1706 = vrot.lane.b32.xlu0 %v1558, 112
      %v1707 = vpop.permute.xlu0 %1706
      %1708 = vrot.lane.b32.xlu0 %v1559, 112
      %v1709 = vpop.permute.xlu0 %1708
      %1710 = vrot.lane.b32.xlu0 %v1560, 112
      %v1711 = vpop.permute.xlu0 %1710
      %1712 = vrot.lane.b32.xlu0 %v1561, 112
      %v1713 = vpop.permute.xlu0 %1712
      %1714 = vrot.lane.b32.xlu0 %v1562, 112
      %v1715 = vpop.permute.xlu0 %1714
      %1716 = vrot.lane.b32.xlu0 %v1563, 112
      %v1717 = vpop.permute.xlu0 %1716
      %1718 = vrot.lane.b32.xlu0 %v1564, 112
      %v1719 = vpop.permute.xlu0 %1718
      %1720 = vrot.lane.b32.xlu0 %v1565, 112
      %v1721 = vpop.permute.xlu0 %1720
      %1722 = vrot.lane.b32.xlu0 %v1566, 112
      %v1723 = vpop.permute.xlu0 %1722
      %1724 = vrot.lane.b32.xlu0 %v1567, 112
      %v1725 = vpop.permute.xlu0 %1724
      %1726 = vrot.lane.b32.xlu0 %v1568, 112
      %v1727 = vpop.permute.xlu0 %1726
      %1728 = vrot.lane.b32.xlu0 %v1569, 112
      %v1729 = vpop.permute.xlu0 %1728
      %1730 = vrot.lane.b32.xlu0 %v1570, 112
      %v1731 = vpop.permute.xlu0 %1730
      %1732 = vrot.lane.b32.xlu0 %v1571, 112
      %v1733 = vpop.permute.xlu0 %1732
      %1734 = vrot.lane.b32.xlu0 %v1572, 112
      %v1735 = vpop.permute.xlu0 %1734
      %1736 = vrot.lane.b32.xlu0 %v1573, 112
      %v1737 = vpop.permute.xlu0 %1736
      %1738 = vrot.lane.b32.xlu0 %v1574, 112
      %v1739 = vpop.permute.xlu0 %1738
      %1740 = vrot.lane.b32.xlu0 %v1575, 112
      %v1741 = vpop.permute.xlu0 %1740
      %1742 = vrot.lane.b32.xlu0 %v1576, 112
      %v1743 = vpop.permute.xlu0 %1742
      %1744 = vrot.lane.b32.xlu0 %v1577, 112
      %v1745 = vpop.permute.xlu0 %1744
      %1746 = vrot.lane.b32.xlu0 %v1578, 112
      %v1747 = vpop.permute.xlu0 %1746
      %1748 = vrot.lane.b32.xlu0 %v1579, 112
      %v1749 = vpop.permute.xlu0 %1748
      %1750 = vrot.lane.b32.xlu0 %v1580, 112
      %v1751 = vpop.permute.xlu0 %1750
      %1752 = vrot.lane.b32.xlu0 %v1581, 112
      %v1753 = vpop.permute.xlu0 %1752
      %1754 = vrot.lane.b32.xlu0 %v1582, 112
      %v1755 = vpop.permute.xlu0 %1754
      %1756 = vrot.lane.b32.xlu0 %v1583, 112
      %v1757 = vpop.permute.xlu0 %1756
      %1758 = vrot.lane.b32.xlu0 %v1584, 112
      %v1759 = vpop.permute.xlu0 %1758
      %1760 = vrot.lane.b32.xlu0 %v1585, 112
      %v1761 = vpop.permute.xlu0 %1760
      %1762 = vrot.lane.b32.xlu0 %v1586, 112
      %v1763 = vpop.permute.xlu0 %1762
      %1764 = vrot.lane.b32.xlu0 %v1587, 112
      %v1765 = vpop.permute.xlu0 %1764
      %1766 = vrot.lane.b32.xlu0 %v1588, 112
      %v1767 = vpop.permute.xlu0 %1766
      %1768 = vrot.lane.b32.xlu0 %v1589, 112
      %v1769 = vpop.permute.xlu0 %1768
      %1770 = vrot.lane.b32.xlu0 %v1590, 112
      %v1771 = vpop.permute.xlu0 %1770
      %1772 = vrot.lane.b32.xlu0 %v1591, 112
      %v1773 = vpop.permute.xlu0 %1772
      %1774 = vrot.lane.b32.xlu0 %v1592, 112
      %v1775 = vpop.permute.xlu0 %1774
      %1776 = vrot.lane.b32.xlu0 %v1593, 112
      %v1777 = vpop.permute.xlu0 %1776
      %1778 = vrot.lane.b32.xlu0 %v1594, 112
      %v1779 = vpop.permute.xlu0 %1778
      %1780 = vrot.lane.b32.xlu0 %v1595, 112
      %v1781 = vpop.permute.xlu0 %1780
      %1782 = vrot.lane.b32.xlu0 %v1596, 112
      %v1783 = vpop.permute.xlu0 %1782
      %1784 = vrot.lane.b32.xlu0 %v1597, 112
      %v1785 = vpop.permute.xlu0 %1784
      %1786 = vrot.lane.b32.xlu0 %v1598, 112
      %v1787 = vpop.permute.xlu0 %1786
      %1788 = vrot.lane.b32.xlu0 %v1599, 112
      %v1789 = vpop.permute.xlu0 %1788
      %1790 = vrot.lane.b32.xlu0 %v1600, 112
      %v1791 = vpop.permute.xlu0 %1790
      %1792 = vrot.lane.b32.xlu0 %v1601, 112
      %v1793 = vpop.permute.xlu0 %1792
      %1794 = vrot.lane.b32.xlu0 %v1602, 112
      %v1795 = vpop.permute.xlu0 %1794
      %1796 = vrot.lane.b32.xlu0 %v1603, 112
      %v1797 = vpop.permute.xlu0 %1796
      %1798 = vrot.lane.b32.xlu0 %v1604, 112
      %v1799 = vpop.permute.xlu0 %1798
      %1800 = vrot.lane.b32.xlu0 %v1605, 112
      %v1801 = vpop.permute.xlu0 %1800
      %1802 = vrot.lane.b32.xlu0 %v1606, 112
      %v1803 = vpop.permute.xlu0 %1802
      %1804 = vrot.lane.b32.xlu0 %v1607, 112
      %v1805 = vpop.permute.xlu0 %1804
      %1806 = vrot.lane.b32.xlu0 %v1608, 112
      %v1807 = vpop.permute.xlu0 %1806
      %1808 = vrot.lane.b32.xlu0 %v1609, 112
      %v1809 = vpop.permute.xlu0 %1808
      %1810 = vrot.lane.b32.xlu0 %v1610, 112
      %v1811 = vpop.permute.xlu0 %1810
      %1812 = vrot.lane.b32.xlu0 %v1611, 112
      %v1813 = vpop.permute.xlu0 %1812
      %1814 = vrot.lane.b32.xlu0 %v1612, 112
      %v1815 = vpop.permute.xlu0 %1814
      %1816 = vrot.lane.b32.xlu0 %v1613, 112
      %v1817 = vpop.permute.xlu0 %1816
      %1818 = vrot.lane.b32.xlu0 %v1614, 112
      %v1819 = vpop.permute.xlu0 %1818
      %1820 = vrot.lane.b32.xlu0 %v1615, 112
      %v1821 = vpop.permute.xlu0 %1820
      %1822 = vrot.lane.b32.xlu0 %v1616, 112
      %v1823 = vpop.permute.xlu0 %1822
      %1824 = vrot.lane.b32.xlu0 %v1617, 112
      %v1825 = vpop.permute.xlu0 %1824
      %1826 = vrot.lane.b32.xlu0 %v1618, 112
      %v1827 = vpop.permute.xlu0 %1826
      %1828 = vrot.lane.b32.xlu0 %v1619, 112
      %v1829 = vpop.permute.xlu0 %1828
      %1830 = vrot.lane.b32.xlu0 %v1620, 112
      %v1831 = vpop.permute.xlu0 %1830
      %1832 = vrot.lane.b32.xlu0 %v1621, 112
      %v1833 = vpop.permute.xlu0 %1832
      %1834 = vrot.lane.b32.xlu0 %v1622, 112
      %v1835 = vpop.permute.xlu0 %1834
      %1836 = vrot.lane.b32.xlu0 %v1623, 112
      %v1837 = vpop.permute.xlu0 %1836
      %1838 = vrot.lane.b32.xlu0 %v1624, 112
      %v1839 = vpop.permute.xlu0 %1838
      %1840 = vrot.lane.b32.xlu0 %v1625, 112
      %v1841 = vpop.permute.xlu0 %1840
      %vm1842 = vcmask 916480
      %v1843 = vsel %vm1842, %v1699, %v1701
      %v1844 = vsel %vm1842, %v1701, %v1703
      %v1845 = vsel %vm1842, %v1705, %v1707
      %v1846 = vsel %vm1842, %v1707, %v1709
      %v1847 = vsel %vm1842, %v1711, %v1713
      %v1848 = vsel %vm1842, %v1713, %v1715
      %v1849 = vsel %vm1842, %v1717, %v1719
      %v1850 = vsel %vm1842, %v1719, %v1721
      %v1851 = vsel %vm1842, %v1723, %v1725
      %v1852 = vsel %vm1842, %v1725, %v1727
      %v1853 = vsel %vm1842, %v1729, %v1731
      %v1854 = vsel %vm1842, %v1731, %v1733
      %v1855 = vsel %vm1842, %v1735, %v1737
      %v1856 = vsel %vm1842, %v1737, %v1739
      %v1857 = vsel %vm1842, %v1741, %v1743
      %v1858 = vsel %vm1842, %v1743, %v1745
      %v1859 = vsel %vm1842, %v1747, %v1749
      %v1860 = vsel %vm1842, %v1749, %v1751
      %v1861 = vsel %vm1842, %v1753, %v1755
      %v1862 = vsel %vm1842, %v1755, %v1757
      %v1863 = vsel %vm1842, %v1759, %v1761
      %v1864 = vsel %vm1842, %v1761, %v1763
      %v1865 = vsel %vm1842, %v1765, %v1767
      %v1866 = vsel %vm1842, %v1767, %v1769
      %v1867 = vsel %vm1842, %v1771, %v1773
      %v1868 = vsel %vm1842, %v1773, %v1775
      %v1869 = vsel %vm1842, %v1777, %v1779
      %v1870 = vsel %vm1842, %v1779, %v1781
      %v1871 = vsel %vm1842, %v1783, %v1785
      %v1872 = vsel %vm1842, %v1785, %v1787
      %v1873 = vsel %vm1842, %v1789, %v1791
      %v1874 = vsel %vm1842, %v1791, %v1793
      %v1875 = vsel %vm1842, %v1795, %v1797
      %v1876 = vsel %vm1842, %v1797, %v1799
      %v1877 = vsel %vm1842, %v1801, %v1803
      %v1878 = vsel %vm1842, %v1803, %v1805
      %v1879 = vsel %vm1842, %v1807, %v1809
      %v1880 = vsel %vm1842, %v1809, %v1811
      %v1881 = vsel %vm1842, %v1813, %v1815
      %v1882 = vsel %vm1842, %v1815, %v1817
      %v1883 = vsel %vm1842, %v1819, %v1821
      %v1884 = vsel %vm1842, %v1821, %v1823
      %v1885 = vsel %vm1842, %v1825, %v1827
      %v1886 = vsel %vm1842, %v1827, %v1829
      %v1887 = vsel %vm1842, %v1831, %v1833
      %v1888 = vsel %vm1842, %v1833, %v1835
      %v1889 = vsel %vm1842, %v1837, %v1839
      %v1890 = vsel %vm1842, %v1839, %v1841
      %v1939 = vadd.f32 %v1406, %v1843
      %v1940 = vadd.f32 %v1407, %v1844
      %v1941 = vadd.f32 %v1408, %v1845
      %v1942 = vadd.f32 %v1409, %v1846
      %v1943 = vadd.f32 %v1410, %v1847
      %v1944 = vadd.f32 %v1411, %v1848
      %v1945 = vadd.f32 %v1412, %v1849
      %v1946 = vadd.f32 %v1413, %v1850
      %v1947 = vadd.f32 %v1414, %v1851
      %v1948 = vadd.f32 %v1415, %v1852
      %v1949 = vadd.f32 %v1416, %v1853
      %v1950 = vadd.f32 %v1417, %v1854
      %v1951 = vadd.f32 %v1418, %v1855
      %v1952 = vadd.f32 %v1419, %v1856
      %v1953 = vadd.f32 %v1420, %v1857
      %v1954 = vadd.f32 %v1421, %v1858
      %v1955 = vadd.f32 %v1422, %v1859
      %v1956 = vadd.f32 %v1423, %v1860
      %v1957 = vadd.f32 %v1424, %v1861
      %v1958 = vadd.f32 %v1425, %v1862
      %v1959 = vadd.f32 %v1426, %v1863
      %v1960 = vadd.f32 %v1427, %v1864
      %v1961 = vadd.f32 %v1428, %v1865
      %v1962 = vadd.f32 %v1429, %v1866
      %v1963 = vadd.f32 %v1430, %v1867
      %v1964 = vadd.f32 %v1431, %v1868
      %v1965 = vadd.f32 %v1432, %v1869
      %v1966 = vadd.f32 %v1433, %v1870
      %v1967 = vadd.f32 %v1434, %v1871
      %v1968 = vadd.f32 %v1435, %v1872
      %v1969 = vadd.f32 %v1436, %v1873
      %v1970 = vadd.f32 %v1437, %v1874
      %v1971 = vadd.f32 %v1438, %v1875
      %v1972 = vadd.f32 %v1439, %v1876
      %v1973 = vadd.f32 %v1440, %v1877
      %v1974 = vadd.f32 %v1441, %v1878
      %v1975 = vadd.f32 %v1442, %v1879
      %v1976 = vadd.f32 %v1443, %v1880
      %v1977 = vadd.f32 %v1444, %v1881
      %v1978 = vadd.f32 %v1445, %v1882
      %v1979 = vadd.f32 %v1446, %v1883
      %v1980 = vadd.f32 %v1447, %v1884
      %v1981 = vadd.f32 %v1448, %v1885
      %v1982 = vadd.f32 %v1449, %v1886
      %v1983 = vadd.f32 %v1450, %v1887
      %v1984 = vadd.f32 %v1451, %v1888
      %v1985 = vadd.f32 %v1452, %v1889
      %v1986 = vadd.f32 %v1453, %v1890
      %1987 = vset.pattern.permute.xlu0 4
      %1988 = vperm.xlu0 %1987, %v204
      %v1989 = vpop.permute.xlu0 %1988
      %1991 = vset.pattern.permute.xlu0 4
      %1992 = vperm.xlu0 %1991, %v205
      %v1993 = vpop.permute.xlu0 %1992
      %1995 = vset.pattern.permute.xlu0 4
      %1996 = vperm.xlu0 %1995, %v206
      %v1997 = vpop.permute.xlu0 %1996
      %v1999 = vmul.f32 %v1989, %v437
      %v2000 = vmul.f32 %v1989, %v438
      %v2001 = vmul.f32 %v1989, %v439
      %v2002 = vmul.f32 %v1993, %v437
      %v2003 = vmul.f32 %v1993, %v438
      %v2004 = vmul.f32 %v1993, %v439
      %v2005 = vmul.f32 %v1997, %v437
      %v2006 = vmul.f32 %v1997, %v438
      %v2007 = vmul.f32 %v1997, %v439
      %v2008 = vmul.f32 %v1989, %v440
      %v2009 = vmul.f32 %v1989, %v441
      %v2010 = vmul.f32 %v1989, %v442
      %v2011 = vmul.f32 %v1993, %v440
      %v2012 = vmul.f32 %v1993, %v441
      %v2013 = vmul.f32 %v1993, %v442
      %v2014 = vmul.f32 %v1997, %v440
      %v2015 = vmul.f32 %v1997, %v441
      %v2016 = vmul.f32 %v1997, %v442
      %v2017 = vmul.f32 %v1989, %v443
      %v2018 = vmul.f32 %v1989, %v444
      %v2019 = vmul.f32 %v1989, %v445
      %v2020 = vmul.f32 %v1993, %v443
      %v2021 = vmul.f32 %v1993, %v444
      %v2022 = vmul.f32 %v1993, %v445
      %v2023 = vmul.f32 %v1997, %v443
      %v2024 = vmul.f32 %v1997, %v444
      %v2025 = vmul.f32 %v1997, %v445
      %v2026 = vmul.f32 %v1989, %v446
      %v2027 = vmul.f32 %v1989, %v447
      %v2028 = vmul.f32 %v1989, %v448
      %v2029 = vmul.f32 %v1993, %v446
      %v2030 = vmul.f32 %v1993, %v447
      %v2031 = vmul.f32 %v1993, %v448
      %v2032 = vmul.f32 %v1997, %v446
      %v2033 = vmul.f32 %v1997, %v447
      %v2034 = vmul.f32 %v1997, %v448
      %v2035 = vmul.f32 %v1989, %v449
      %v2036 = vmul.f32 %v1989, %v450
      %v2037 = vmul.f32 %v1989, %v451
      %v2038 = vmul.f32 %v1993, %v449
      %v2039 = vmul.f32 %v1993, %v450
      %v2040 = vmul.f32 %v1993, %v451
      %v2041 = vmul.f32 %v1997, %v449
      %v2042 = vmul.f32 %v1997, %v450
      %v2043 = vmul.f32 %v1997, %v451
      %v2044 = vmul.f32 %v1989, %v452
      %v2045 = vmul.f32 %v1989, %v453
      %v2046 = vmul.f32 %v1989, %v454
      %v2047 = vmul.f32 %v1993, %v452
      %v2048 = vmul.f32 %v1993, %v453
      %v2049 = vmul.f32 %v1993, %v454
      %v2050 = vmul.f32 %v1997, %v452
      %v2051 = vmul.f32 %v1997, %v453
      %v2052 = vmul.f32 %v1997, %v454
      %v2053 = vmul.f32 %v1989, %v455
      %v2054 = vmul.f32 %v1989, %v456
      %v2055 = vmul.f32 %v1989, %v457
      %v2056 = vmul.f32 %v1993, %v455
      %v2057 = vmul.f32 %v1993, %v456
      %v2058 = vmul.f32 %v1993, %v457
      %v2059 = vmul.f32 %v1997, %v455
      %v2060 = vmul.f32 %v1997, %v456
      %v2061 = vmul.f32 %v1997, %v457
      %v2062 = vmul.f32 %v1989, %v458
      %v2063 = vmul.f32 %v1989, %v459
      %v2064 = vmul.f32 %v1989, %v460
      %v2065 = vmul.f32 %v1993, %v458
      %v2066 = vmul.f32 %v1993, %v459
      %v2067 = vmul.f32 %v1993, %v460
      %v2068 = vmul.f32 %v1997, %v458
      %v2069 = vmul.f32 %v1997, %v459
      %v2070 = vmul.f32 %v1997, %v460
      %2143 = vrot.lane.b32.xlu0 %v1999, 111
      %v2144 = vpop.permute.xlu0 %2143
      %2145 = vrot.lane.b32.xlu0 %v2000, 111
      %v2146 = vpop.permute.xlu0 %2145
      %2147 = vrot.lane.b32.xlu0 %v2001, 111
      %v2148 = vpop.permute.xlu0 %2147
      %2149 = vrot.lane.b32.xlu0 %v2002, 111
      %v2150 = vpop.permute.xlu0 %2149
      %2151 = vrot.lane.b32.xlu0 %v2003, 111
      %v2152 = vpop.permute.xlu0 %2151
      %2153 = vrot.lane.b32.xlu0 %v2004, 111
      %v2154 = vpop.permute.xlu0 %2153
      %2155 = vrot.lane.b32.xlu0 %v2005, 111
      %v2156 = vpop.permute.xlu0 %2155
      %2157 = vrot.lane.b32.xlu0 %v2006, 111
      %v2158 = vpop.permute.xlu0 %2157
      %2159 = vrot.lane.b32.xlu0 %v2007, 111
      %v2160 = vpop.permute.xlu0 %2159
      %2161 = vrot.lane.b32.xlu0 %v2008, 111
      %v2162 = vpop.permute.xlu0 %2161
      %2163 = vrot.lane.b32.xlu0 %v2009, 111
      %v2164 = vpop.permute.xlu0 %2163
      %2165 = vrot.lane.b32.xlu0 %v2010, 111
      %v2166 = vpop.permute.xlu0 %2165
      %2167 = vrot.lane.b32.xlu0 %v2011, 111
      %v2168 = vpop.permute.xlu0 %2167
      %2169 = vrot.lane.b32.xlu0 %v2012, 111
      %v2170 = vpop.permute.xlu0 %2169
      %2171 = vrot.lane.b32.xlu0 %v2013, 111
      %v2172 = vpop.permute.xlu0 %2171
      %2173 = vrot.lane.b32.xlu0 %v2014, 111
      %v2174 = vpop.permute.xlu0 %2173
      %2175 = vrot.lane.b32.xlu0 %v2015, 111
      %v2176 = vpop.permute.xlu0 %2175
      %2177 = vrot.lane.b32.xlu0 %v2016, 111
      %v2178 = vpop.permute.xlu0 %2177
      %2179 = vrot.lane.b32.xlu0 %v2017, 111
      %v2180 = vpop.permute.xlu0 %2179
      %2181 = vrot.lane.b32.xlu0 %v2018, 111
      %v2182 = vpop.permute.xlu0 %2181
      %2183 = vrot.lane.b32.xlu0 %v2019, 111
      %v2184 = vpop.permute.xlu0 %2183
      %2185 = vrot.lane.b32.xlu0 %v2020, 111
      %v2186 = vpop.permute.xlu0 %2185
      %2187 = vrot.lane.b32.xlu0 %v2021, 111
      %v2188 = vpop.permute.xlu0 %2187
      %2189 = vrot.lane.b32.xlu0 %v2022, 111
      %v2190 = vpop.permute.xlu0 %2189
      %2191 = vrot.lane.b32.xlu0 %v2023, 111
      %v2192 = vpop.permute.xlu0 %2191
      %2193 = vrot.lane.b32.xlu0 %v2024, 111
      %v2194 = vpop.permute.xlu0 %2193
      %2195 = vrot.lane.b32.xlu0 %v2025, 111
      %v2196 = vpop.permute.xlu0 %2195
      %2197 = vrot.lane.b32.xlu0 %v2026, 111
      %v2198 = vpop.permute.xlu0 %2197
      %2199 = vrot.lane.b32.xlu0 %v2027, 111
      %v2200 = vpop.permute.xlu0 %2199
      %2201 = vrot.lane.b32.xlu0 %v2028, 111
      %v2202 = vpop.permute.xlu0 %2201
      %2203 = vrot.lane.b32.xlu0 %v2029, 111
      %v2204 = vpop.permute.xlu0 %2203
      %2205 = vrot.lane.b32.xlu0 %v2030, 111
      %v2206 = vpop.permute.xlu0 %2205
      %2207 = vrot.lane.b32.xlu0 %v2031, 111
      %v2208 = vpop.permute.xlu0 %2207
      %2209 = vrot.lane.b32.xlu0 %v2032, 111
      %v2210 = vpop.permute.xlu0 %2209
      %2211 = vrot.lane.b32.xlu0 %v2033, 111
      %v2212 = vpop.permute.xlu0 %2211
      %2213 = vrot.lane.b32.xlu0 %v2034, 111
      %v2214 = vpop.permute.xlu0 %2213
      %2215 = vrot.lane.b32.xlu0 %v2035, 111
      %v2216 = vpop.permute.xlu0 %2215
      %2217 = vrot.lane.b32.xlu0 %v2036, 111
      %v2218 = vpop.permute.xlu0 %2217
      %2219 = vrot.lane.b32.xlu0 %v2037, 111
      %v2220 = vpop.permute.xlu0 %2219
      %2221 = vrot.lane.b32.xlu0 %v2038, 111
      %v2222 = vpop.permute.xlu0 %2221
      %2223 = vrot.lane.b32.xlu0 %v2039, 111
      %v2224 = vpop.permute.xlu0 %2223
      %2225 = vrot.lane.b32.xlu0 %v2040, 111
      %v2226 = vpop.permute.xlu0 %2225
      %2227 = vrot.lane.b32.xlu0 %v2041, 111
      %v2228 = vpop.permute.xlu0 %2227
      %2229 = vrot.lane.b32.xlu0 %v2042, 111
      %v2230 = vpop.permute.xlu0 %2229
      %2231 = vrot.lane.b32.xlu0 %v2043, 111
      %v2232 = vpop.permute.xlu0 %2231
      %2233 = vrot.lane.b32.xlu0 %v2044, 111
      %v2234 = vpop.permute.xlu0 %2233
      %2235 = vrot.lane.b32.xlu0 %v2045, 111
      %v2236 = vpop.permute.xlu0 %2235
      %2237 = vrot.lane.b32.xlu0 %v2046, 111
      %v2238 = vpop.permute.xlu0 %2237
      %2239 = vrot.lane.b32.xlu0 %v2047, 111
      %v2240 = vpop.permute.xlu0 %2239
      %2241 = vrot.lane.b32.xlu0 %v2048, 111
      %v2242 = vpop.permute.xlu0 %2241
      %2243 = vrot.lane.b32.xlu0 %v2049, 111
      %v2244 = vpop.permute.xlu0 %2243
      %2245 = vrot.lane.b32.xlu0 %v2050, 111
      %v2246 = vpop.permute.xlu0 %2245
      %2247 = vrot.lane.b32.xlu0 %v2051, 111
      %v2248 = vpop.permute.xlu0 %2247
      %2249 = vrot.lane.b32.xlu0 %v2052, 111
      %v2250 = vpop.permute.xlu0 %2249
      %2251 = vrot.lane.b32.xlu0 %v2053, 111
      %v2252 = vpop.permute.xlu0 %2251
      %2253 = vrot.lane.b32.xlu0 %v2054, 111
      %v2254 = vpop.permute.xlu0 %2253
      %2255 = vrot.lane.b32.xlu0 %v2055, 111
      %v2256 = vpop.permute.xlu0 %2255
      %2257 = vrot.lane.b32.xlu0 %v2056, 111
      %v2258 = vpop.permute.xlu0 %2257
      %2259 = vrot.lane.b32.xlu0 %v2057, 111
      %v2260 = vpop.permute.xlu0 %2259
      %2261 = vrot.lane.b32.xlu0 %v2058, 111
      %v2262 = vpop.permute.xlu0 %2261
      %2263 = vrot.lane.b32.xlu0 %v2059, 111
      %v2264 = vpop.permute.xlu0 %2263
      %2265 = vrot.lane.b32.xlu0 %v2060, 111
      %v2266 = vpop.permute.xlu0 %2265
      %2267 = vrot.lane.b32.xlu0 %v2061, 111
      %v2268 = vpop.permute.xlu0 %2267
      %2269 = vrot.lane.b32.xlu0 %v2062, 111
      %v2270 = vpop.permute.xlu0 %2269
      %2271 = vrot.lane.b32.xlu0 %v2063, 111
      %v2272 = vpop.permute.xlu0 %2271
      %2273 = vrot.lane.b32.xlu0 %v2064, 111
      %v2274 = vpop.permute.xlu0 %2273
      %2275 = vrot.lane.b32.xlu0 %v2065, 111
      %v2276 = vpop.permute.xlu0 %2275
      %2277 = vrot.lane.b32.xlu0 %v2066, 111
      %v2278 = vpop.permute.xlu0 %2277
      %2279 = vrot.lane.b32.xlu0 %v2067, 111
      %v2280 = vpop.permute.xlu0 %2279
      %2281 = vrot.lane.b32.xlu0 %v2068, 111
      %v2282 = vpop.permute.xlu0 %2281
      %2283 = vrot.lane.b32.xlu0 %v2069, 111
      %v2284 = vpop.permute.xlu0 %2283
      %2285 = vrot.lane.b32.xlu0 %v2070, 111
      %v2286 = vpop.permute.xlu0 %2285
      %vm2287 = vcmask 908288
      %v2288 = vsel %vm2287, %v2144, %v2146
      %v2289 = vsel %vm2287, %v2146, %v2148
      %v2290 = vsel %vm2287, %v2150, %v2152
      %v2291 = vsel %vm2287, %v2152, %v2154
      %v2292 = vsel %vm2287, %v2156, %v2158
      %v2293 = vsel %vm2287, %v2158, %v2160
      %v2294 = vsel %vm2287, %v2162, %v2164
      %v2295 = vsel %vm2287, %v2164, %v2166
      %v2296 = vsel %vm2287, %v2168, %v2170
      %v2297 = vsel %vm2287, %v2170, %v2172
      %v2298 = vsel %vm2287, %v2174, %v2176
      %v2299 = vsel %vm2287, %v2176, %v2178
      %v2300 = vsel %vm2287, %v2180, %v2182
      %v2301 = vsel %vm2287, %v2182, %v2184
      %v2302 = vsel %vm2287, %v2186, %v2188
      %v2303 = vsel %vm2287, %v2188, %v2190
      %v2304 = vsel %vm2287, %v2192, %v2194
      %v2305 = vsel %vm2287, %v2194, %v2196
      %v2306 = vsel %vm2287, %v2198, %v2200
      %v2307 = vsel %vm2287, %v2200, %v2202
      %v2308 = vsel %vm2287, %v2204, %v2206
      %v2309 = vsel %vm2287, %v2206, %v2208
      %v2310 = vsel %vm2287, %v2210, %v2212
      %v2311 = vsel %vm2287, %v2212, %v2214
      %v2312 = vsel %vm2287, %v2216, %v2218
      %v2313 = vsel %vm2287, %v2218, %v2220
      %v2314 = vsel %vm2287, %v2222, %v2224
      %v2315 = vsel %vm2287, %v2224, %v2226
      %v2316 = vsel %vm2287, %v2228, %v2230
      %v2317 = vsel %vm2287, %v2230, %v2232
      %v2318 = vsel %vm2287, %v2234, %v2236
      %v2319 = vsel %vm2287, %v2236, %v2238
      %v2320 = vsel %vm2287, %v2240, %v2242
      %v2321 = vsel %vm2287, %v2242, %v2244
      %v2322 = vsel %vm2287, %v2246, %v2248
      %v2323 = vsel %vm2287, %v2248, %v2250
      %v2324 = vsel %vm2287, %v2252, %v2254
      %v2325 = vsel %vm2287, %v2254, %v2256
      %v2326 = vsel %vm2287, %v2258, %v2260
      %v2327 = vsel %vm2287, %v2260, %v2262
      %v2328 = vsel %vm2287, %v2264, %v2266
      %v2329 = vsel %vm2287, %v2266, %v2268
      %v2330 = vsel %vm2287, %v2270, %v2272
      %v2331 = vsel %vm2287, %v2272, %v2274
      %v2332 = vsel %vm2287, %v2276, %v2278
      %v2333 = vsel %vm2287, %v2278, %v2280
      %v2334 = vsel %vm2287, %v2282, %v2284
      %v2335 = vsel %vm2287, %v2284, %v2286
      %v2384 = vadd.f32 %v1939, %v2288
      %v2385 = vadd.f32 %v1940, %v2289
      %v2386 = vadd.f32 %v1941, %v2290
      %v2387 = vadd.f32 %v1942, %v2291
      %v2388 = vadd.f32 %v1943, %v2292
      %v2389 = vadd.f32 %v1944, %v2293
      %v2390 = vadd.f32 %v1945, %v2294
      %v2391 = vadd.f32 %v1946, %v2295
      %v2392 = vadd.f32 %v1947, %v2296
      %v2393 = vadd.f32 %v1948, %v2297
      %v2394 = vadd.f32 %v1949, %v2298
      %v2395 = vadd.f32 %v1950, %v2299
      %v2396 = vadd.f32 %v1951, %v2300
      %v2397 = vadd.f32 %v1952, %v2301
      %v2398 = vadd.f32 %v1953, %v2302
      %v2399 = vadd.f32 %v1954, %v2303
      %v2400 = vadd.f32 %v1955, %v2304
      %v2401 = vadd.f32 %v1956, %v2305
      %v2402 = vadd.f32 %v1957, %v2306
      %v2403 = vadd.f32 %v1958, %v2307
      %v2404 = vadd.f32 %v1959, %v2308
      %v2405 = vadd.f32 %v1960, %v2309
      %v2406 = vadd.f32 %v1961, %v2310
      %v2407 = vadd.f32 %v1962, %v2311
      %v2408 = vadd.f32 %v1963, %v2312
      %v2409 = vadd.f32 %v1964, %v2313
      %v2410 = vadd.f32 %v1965, %v2314
      %v2411 = vadd.f32 %v1966, %v2315
      %v2412 = vadd.f32 %v1967, %v2316
      %v2413 = vadd.f32 %v1968, %v2317
      %v2414 = vadd.f32 %v1969, %v2318
      %v2415 = vadd.f32 %v1970, %v2319
      %v2416 = vadd.f32 %v1971, %v2320
      %v2417 = vadd.f32 %v1972, %v2321
      %v2418 = vadd.f32 %v1973, %v2322
      %v2419 = vadd.f32 %v1974, %v2323
      %v2420 = vadd.f32 %v1975, %v2324
      %v2421 = vadd.f32 %v1976, %v2325
      %v2422 = vadd.f32 %v1977, %v2326
      %v2423 = vadd.f32 %v1978, %v2327
      %v2424 = vadd.f32 %v1979, %v2328
      %v2425 = vadd.f32 %v1980, %v2329
      %v2426 = vadd.f32 %v1981, %v2330
      %v2427 = vadd.f32 %v1982, %v2331
      %v2428 = vadd.f32 %v1983, %v2332
      %v2429 = vadd.f32 %v1984, %v2333
      %v2430 = vadd.f32 %v1985, %v2334
      %v2431 = vadd.f32 %v1986, %v2335
      %2432 = vrot.lane.b32.xlu0 %v919, 18
      %v2433 = vpop.permute.xlu0 %2432
      %2434 = vrot.lane.b32.xlu0 %v920, 18
      %v2435 = vpop.permute.xlu0 %2434
      %vm2436 = vcmask 146432
      %v2437 = vsel %vm2436, %v2433, %v2435
      %v2441 = vmul.f32 %v201, %v2433
      %v2442 = vmul.f32 %v202, %v2437
      %v2443 = vmul.f32 %v203, %v2435
      %v2447 = vrot.slane %v2442, 7
      %v2448 = vrot.slane %v2443, 6
      %v2449 = vsel %vm223, %v2441, %v2447
      %v2450 = vsel %vm395, %v2449, %v2448
      %v2451 = vsel %vm225, %v2441, %v2447
      %v2452 = vsel %vm398, %v2451, %v2448
      %v2453 = vrot.slane %v2452, 1
      %v2454 = vsel %vm228, %v2441, %v2447
      %v2455 = vsel %vm402, %v2454, %v2448
      %v2456 = vrot.slane %v2455, 2
      %v2457 = vsel %vm231, %v2441, %v2447
      %v2458 = vsel %vm406, %v2457, %v2448
      %v2459 = vrot.slane %v2458, 3
      %v2460 = vsel %vm234, %v2441, %v2447
      %v2461 = vsel %vm410, %v2460, %v2448
      %v2462 = vrot.slane %v2461, 4
      %v2463 = vsel %vm237, %v2441, %v2447
      %v2464 = vsel %vm414, %v2463, %v2448
      %v2465 = vrot.slane %v2464, 5
      %v2466 = vsel %vm240, %v2441, %v2447
      %v2467 = vsel %vm418, %v2448, %v2466
      %v2468 = vrot.slane %v2467, 6
      %v2469 = vsel %vm243, %v2447, %v2441
      %v2470 = vsel %vm422, %v2448, %v2469
      %v2471 = vrot.slane %v2470, 7
      %2472 = vset.pattern.permute.xlu0 5
      %2473 = vperm.xlu0 %2472, %v204
      %v2474 = vpop.permute.xlu0 %2473
      %2476 = vset.pattern.permute.xlu0 5
      %2477 = vperm.xlu0 %2476, %v205
      %v2478 = vpop.permute.xlu0 %2477
      %2480 = vset.pattern.permute.xlu0 5
      %2481 = vperm.xlu0 %2480, %v206
      %v2482 = vpop.permute.xlu0 %2481
      %v2484 = vperm.slane %v2450, 0
      %v2485 = vperm.slane %v2450, 1
      %v2486 = vperm.slane %v2450, 2
      %v2487 = vperm.slane %v2453, 0
      %v2488 = vperm.slane %v2453, 1
      %v2489 = vperm.slane %v2453, 2
      %v2490 = vperm.slane %v2456, 0
      %v2491 = vperm.slane %v2456, 1
      %v2492 = vperm.slane %v2456, 2
      %v2493 = vperm.slane %v2459, 0
      %v2494 = vperm.slane %v2459, 1
      %v2495 = vperm.slane %v2459, 2
      %v2496 = vperm.slane %v2462, 0
      %v2497 = vperm.slane %v2462, 1
      %v2498 = vperm.slane %v2462, 2
      %v2499 = vperm.slane %v2465, 0
      %v2500 = vperm.slane %v2465, 1
      %v2501 = vperm.slane %v2465, 2
      %v2502 = vperm.slane %v2468, 0
      %v2503 = vperm.slane %v2468, 1
      %v2504 = vperm.slane %v2468, 2
      %v2505 = vperm.slane %v2471, 0
      %v2506 = vperm.slane %v2471, 1
      %v2507 = vperm.slane %v2471, 2
      %v2532 = vmul.f32 %v2474, %v2484
      %v2533 = vmul.f32 %v2474, %v2485
      %v2534 = vmul.f32 %v2474, %v2486
      %v2535 = vmul.f32 %v2478, %v2484
      %v2536 = vmul.f32 %v2478, %v2485
      %v2537 = vmul.f32 %v2478, %v2486
      %v2538 = vmul.f32 %v2482, %v2484
      %v2539 = vmul.f32 %v2482, %v2485
      %v2540 = vmul.f32 %v2482, %v2486
      %v2541 = vmul.f32 %v2474, %v2487
      %v2542 = vmul.f32 %v2474, %v2488
      %v2543 = vmul.f32 %v2474, %v2489
      %v2544 = vmul.f32 %v2478, %v2487
      %v2545 = vmul.f32 %v2478, %v2488
      %v2546 = vmul.f32 %v2478, %v2489
      %v2547 = vmul.f32 %v2482, %v2487
      %v2548 = vmul.f32 %v2482, %v2488
      %v2549 = vmul.f32 %v2482, %v2489
      %v2550 = vmul.f32 %v2474, %v2490
      %v2551 = vmul.f32 %v2474, %v2491
      %v2552 = vmul.f32 %v2474, %v2492
      %v2553 = vmul.f32 %v2478, %v2490
      %v2554 = vmul.f32 %v2478, %v2491
      %v2555 = vmul.f32 %v2478, %v2492
      %v2556 = vmul.f32 %v2482, %v2490
      %v2557 = vmul.f32 %v2482, %v2491
      %v2558 = vmul.f32 %v2482, %v2492
      %v2559 = vmul.f32 %v2474, %v2493
      %v2560 = vmul.f32 %v2474, %v2494
      %v2561 = vmul.f32 %v2474, %v2495
      %v2562 = vmul.f32 %v2478, %v2493
      %v2563 = vmul.f32 %v2478, %v2494
      %v2564 = vmul.f32 %v2478, %v2495
      %v2565 = vmul.f32 %v2482, %v2493
      %v2566 = vmul.f32 %v2482, %v2494
      %v2567 = vmul.f32 %v2482, %v2495
      %v2568 = vmul.f32 %v2474, %v2496
      %v2569 = vmul.f32 %v2474, %v2497
      %v2570 = vmul.f32 %v2474, %v2498
      %v2571 = vmul.f32 %v2478, %v2496
      %v2572 = vmul.f32 %v2478, %v2497
      %v2573 = vmul.f32 %v2478, %v2498
      %v2574 = vmul.f32 %v2482, %v2496
      %v2575 = vmul.f32 %v2482, %v2497
      %v2576 = vmul.f32 %v2482, %v2498
      %v2577 = vmul.f32 %v2474, %v2499
      %v2578 = vmul.f32 %v2474, %v2500
      %v2579 = vmul.f32 %v2474, %v2501
      %v2580 = vmul.f32 %v2478, %v2499
      %v2581 = vmul.f32 %v2478, %v2500
      %v2582 = vmul.f32 %v2478, %v2501
      %v2583 = vmul.f32 %v2482, %v2499
      %v2584 = vmul.f32 %v2482, %v2500
      %v2585 = vmul.f32 %v2482, %v2501
      %v2586 = vmul.f32 %v2474, %v2502
      %v2587 = vmul.f32 %v2474, %v2503
      %v2588 = vmul.f32 %v2474, %v2504
      %v2589 = vmul.f32 %v2478, %v2502
      %v2590 = vmul.f32 %v2478, %v2503
      %v2591 = vmul.f32 %v2478, %v2504
      %v2592 = vmul.f32 %v2482, %v2502
      %v2593 = vmul.f32 %v2482, %v2503
      %v2594 = vmul.f32 %v2482, %v2504
      %v2595 = vmul.f32 %v2474, %v2505
      %v2596 = vmul.f32 %v2474, %v2506
      %v2597 = vmul.f32 %v2474, %v2507
      %v2598 = vmul.f32 %v2478, %v2505
      %v2599 = vmul.f32 %v2478, %v2506
      %v2600 = vmul.f32 %v2478, %v2507
      %v2601 = vmul.f32 %v2482, %v2505
      %v2602 = vmul.f32 %v2482, %v2506
      %v2603 = vmul.f32 %v2482, %v2507
      %2676 = vrot.lane.b32.xlu0 %v2532, 110
      %v2677 = vpop.permute.xlu0 %2676
      %2678 = vrot.lane.b32.xlu0 %v2533, 110
      %v2679 = vpop.permute.xlu0 %2678
      %2680 = vrot.lane.b32.xlu0 %v2534, 110
      %v2681 = vpop.permute.xlu0 %2680
      %2682 = vrot.lane.b32.xlu0 %v2535, 110
      %v2683 = vpop.permute.xlu0 %2682
      %2684 = vrot.lane.b32.xlu0 %v2536, 110
      %v2685 = vpop.permute.xlu0 %2684
      %2686 = vrot.lane.b32.xlu0 %v2537, 110
      %v2687 = vpop.permute.xlu0 %2686
      %2688 = vrot.lane.b32.xlu0 %v2538, 110
      %v2689 = vpop.permute.xlu0 %2688
      %2690 = vrot.lane.b32.xlu0 %v2539, 110
      %v2691 = vpop.permute.xlu0 %2690
      %2692 = vrot.lane.b32.xlu0 %v2540, 110
      %v2693 = vpop.permute.xlu0 %2692
      %2694 = vrot.lane.b32.xlu0 %v2541, 110
      %v2695 = vpop.permute.xlu0 %2694
      %2696 = vrot.lane.b32.xlu0 %v2542, 110
      %v2697 = vpop.permute.xlu0 %2696
      %2698 = vrot.lane.b32.xlu0 %v2543, 110
      %v2699 = vpop.permute.xlu0 %2698
      %2700 = vrot.lane.b32.xlu0 %v2544, 110
      %v2701 = vpop.permute.xlu0 %2700
      %2702 = vrot.lane.b32.xlu0 %v2545, 110
      %v2703 = vpop.permute.xlu0 %2702
      %2704 = vrot.lane.b32.xlu0 %v2546, 110
      %v2705 = vpop.permute.xlu0 %2704
      %2706 = vrot.lane.b32.xlu0 %v2547, 110
      %v2707 = vpop.permute.xlu0 %2706
      %2708 = vrot.lane.b32.xlu0 %v2548, 110
      %v2709 = vpop.permute.xlu0 %2708
      %2710 = vrot.lane.b32.xlu0 %v2549, 110
      %v2711 = vpop.permute.xlu0 %2710
      %2712 = vrot.lane.b32.xlu0 %v2550, 110
      %v2713 = vpop.permute.xlu0 %2712
      %2714 = vrot.lane.b32.xlu0 %v2551, 110
      %v2715 = vpop.permute.xlu0 %2714
      %2716 = vrot.lane.b32.xlu0 %v2552, 110
      %v2717 = vpop.permute.xlu0 %2716
      %2718 = vrot.lane.b32.xlu0 %v2553, 110
      %v2719 = vpop.permute.xlu0 %2718
      %2720 = vrot.lane.b32.xlu0 %v2554, 110
      %v2721 = vpop.permute.xlu0 %2720
      %2722 = vrot.lane.b32.xlu0 %v2555, 110
      %v2723 = vpop.permute.xlu0 %2722
      %2724 = vrot.lane.b32.xlu0 %v2556, 110
      %v2725 = vpop.permute.xlu0 %2724
      %2726 = vrot.lane.b32.xlu0 %v2557, 110
      %v2727 = vpop.permute.xlu0 %2726
      %2728 = vrot.lane.b32.xlu0 %v2558, 110
      %v2729 = vpop.permute.xlu0 %2728
      %2730 = vrot.lane.b32.xlu0 %v2559, 110
      %v2731 = vpop.permute.xlu0 %2730
      %2732 = vrot.lane.b32.xlu0 %v2560, 110
      %v2733 = vpop.permute.xlu0 %2732
      %2734 = vrot.lane.b32.xlu0 %v2561, 110
      %v2735 = vpop.permute.xlu0 %2734
      %2736 = vrot.lane.b32.xlu0 %v2562, 110
      %v2737 = vpop.permute.xlu0 %2736
      %2738 = vrot.lane.b32.xlu0 %v2563, 110
      %v2739 = vpop.permute.xlu0 %2738
      %2740 = vrot.lane.b32.xlu0 %v2564, 110
      %v2741 = vpop.permute.xlu0 %2740
      %2742 = vrot.lane.b32.xlu0 %v2565, 110
      %v2743 = vpop.permute.xlu0 %2742
      %2744 = vrot.lane.b32.xlu0 %v2566, 110
      %v2745 = vpop.permute.xlu0 %2744
      %2746 = vrot.lane.b32.xlu0 %v2567, 110
      %v2747 = vpop.permute.xlu0 %2746
      %2748 = vrot.lane.b32.xlu0 %v2568, 110
      %v2749 = vpop.permute.xlu0 %2748
      %2750 = vrot.lane.b32.xlu0 %v2569, 110
      %v2751 = vpop.permute.xlu0 %2750
      %2752 = vrot.lane.b32.xlu0 %v2570, 110
      %v2753 = vpop.permute.xlu0 %2752
      %2754 = vrot.lane.b32.xlu0 %v2571, 110
      %v2755 = vpop.permute.xlu0 %2754
      %2756 = vrot.lane.b32.xlu0 %v2572, 110
      %v2757 = vpop.permute.xlu0 %2756
      %2758 = vrot.lane.b32.xlu0 %v2573, 110
      %v2759 = vpop.permute.xlu0 %2758
      %2760 = vrot.lane.b32.xlu0 %v2574, 110
      %v2761 = vpop.permute.xlu0 %2760
      %2762 = vrot.lane.b32.xlu0 %v2575, 110
      %v2763 = vpop.permute.xlu0 %2762
      %2764 = vrot.lane.b32.xlu0 %v2576, 110
      %v2765 = vpop.permute.xlu0 %2764
      %2766 = vrot.lane.b32.xlu0 %v2577, 110
      %v2767 = vpop.permute.xlu0 %2766
      %2768 = vrot.lane.b32.xlu0 %v2578, 110
      %v2769 = vpop.permute.xlu0 %2768
      %2770 = vrot.lane.b32.xlu0 %v2579, 110
      %v2771 = vpop.permute.xlu0 %2770
      %2772 = vrot.lane.b32.xlu0 %v2580, 110
      %v2773 = vpop.permute.xlu0 %2772
      %2774 = vrot.lane.b32.xlu0 %v2581, 110
      %v2775 = vpop.permute.xlu0 %2774
      %2776 = vrot.lane.b32.xlu0 %v2582, 110
      %v2777 = vpop.permute.xlu0 %2776
      %2778 = vrot.lane.b32.xlu0 %v2583, 110
      %v2779 = vpop.permute.xlu0 %2778
      %2780 = vrot.lane.b32.xlu0 %v2584, 110
      %v2781 = vpop.permute.xlu0 %2780
      %2782 = vrot.lane.b32.xlu0 %v2585, 110
      %v2783 = vpop.permute.xlu0 %2782
      %2784 = vrot.lane.b32.xlu0 %v2586, 110
      %v2785 = vpop.permute.xlu0 %2784
      %2786 = vrot.lane.b32.xlu0 %v2587, 110
      %v2787 = vpop.permute.xlu0 %2786
      %2788 = vrot.lane.b32.xlu0 %v2588, 110
      %v2789 = vpop.permute.xlu0 %2788
      %2790 = vrot.lane.b32.xlu0 %v2589, 110
      %v2791 = vpop.permute.xlu0 %2790
      %2792 = vrot.lane.b32.xlu0 %v2590, 110
      %v2793 = vpop.permute.xlu0 %2792
      %2794 = vrot.lane.b32.xlu0 %v2591, 110
      %v2795 = vpop.permute.xlu0 %2794
      %2796 = vrot.lane.b32.xlu0 %v2592, 110
      %v2797 = vpop.permute.xlu0 %2796
      %2798 = vrot.lane.b32.xlu0 %v2593, 110
      %v2799 = vpop.permute.xlu0 %2798
      %2800 = vrot.lane.b32.xlu0 %v2594, 110
      %v2801 = vpop.permute.xlu0 %2800
      %2802 = vrot.lane.b32.xlu0 %v2595, 110
      %v2803 = vpop.permute.xlu0 %2802
      %2804 = vrot.lane.b32.xlu0 %v2596, 110
      %v2805 = vpop.permute.xlu0 %2804
      %2806 = vrot.lane.b32.xlu0 %v2597, 110
      %v2807 = vpop.permute.xlu0 %2806
      %2808 = vrot.lane.b32.xlu0 %v2598, 110
      %v2809 = vpop.permute.xlu0 %2808
      %2810 = vrot.lane.b32.xlu0 %v2599, 110
      %v2811 = vpop.permute.xlu0 %2810
      %2812 = vrot.lane.b32.xlu0 %v2600, 110
      %v2813 = vpop.permute.xlu0 %2812
      %2814 = vrot.lane.b32.xlu0 %v2601, 110
      %v2815 = vpop.permute.xlu0 %2814
      %2816 = vrot.lane.b32.xlu0 %v2602, 110
      %v2817 = vpop.permute.xlu0 %2816
      %2818 = vrot.lane.b32.xlu0 %v2603, 110
      %v2819 = vpop.permute.xlu0 %2818
      %vm2820 = vcmask 900096
      %v2821 = vsel %vm2820, %v2677, %v2679
      %v2822 = vsel %vm2820, %v2679, %v2681
      %v2823 = vsel %vm2820, %v2683, %v2685
      %v2824 = vsel %vm2820, %v2685, %v2687
      %v2825 = vsel %vm2820, %v2689, %v2691
      %v2826 = vsel %vm2820, %v2691, %v2693
      %v2827 = vsel %vm2820, %v2695, %v2697
      %v2828 = vsel %vm2820, %v2697, %v2699
      %v2829 = vsel %vm2820, %v2701, %v2703
      %v2830 = vsel %vm2820, %v2703, %v2705
      %v2831 = vsel %vm2820, %v2707, %v2709
      %v2832 = vsel %vm2820, %v2709, %v2711
      %v2833 = vsel %vm2820, %v2713, %v2715
      %v2834 = vsel %vm2820, %v2715, %v2717
      %v2835 = vsel %vm2820, %v2719, %v2721
      %v2836 = vsel %vm2820, %v2721, %v2723
      %v2837 = vsel %vm2820, %v2725, %v2727
      %v2838 = vsel %vm2820, %v2727, %v2729
      %v2839 = vsel %vm2820, %v2731, %v2733
      %v2840 = vsel %vm2820, %v2733, %v2735
      %v2841 = vsel %vm2820, %v2737, %v2739
      %v2842 = vsel %vm2820, %v2739, %v2741
      %v2843 = vsel %vm2820, %v2743, %v2745
      %v2844 = vsel %vm2820, %v2745, %v2747
      %v2845 = vsel %vm2820, %v2749, %v2751
      %v2846 = vsel %vm2820, %v2751, %v2753
      %v2847 = vsel %vm2820, %v2755, %v2757
      %v2848 = vsel %vm2820, %v2757, %v2759
      %v2849 = vsel %vm2820, %v2761, %v2763
      %v2850 = vsel %vm2820, %v2763, %v2765
      %v2851 = vsel %vm2820, %v2767, %v2769
      %v2852 = vsel %vm2820, %v2769, %v2771
      %v2853 = vsel %vm2820, %v2773, %v2775
      %v2854 = vsel %vm2820, %v2775, %v2777
      %v2855 = vsel %vm2820, %v2779, %v2781
      %v2856 = vsel %vm2820, %v2781, %v2783
      %v2857 = vsel %vm2820, %v2785, %v2787
      %v2858 = vsel %vm2820, %v2787, %v2789
      %v2859 = vsel %vm2820, %v2791, %v2793
      %v2860 = vsel %vm2820, %v2793, %v2795
      %v2861 = vsel %vm2820, %v2797, %v2799
      %v2862 = vsel %vm2820, %v2799, %v2801
      %v2863 = vsel %vm2820, %v2803, %v2805
      %v2864 = vsel %vm2820, %v2805, %v2807
      %v2865 = vsel %vm2820, %v2809, %v2811
      %v2866 = vsel %vm2820, %v2811, %v2813
      %v2867 = vsel %vm2820, %v2815, %v2817
      %v2868 = vsel %vm2820, %v2817, %v2819
      %v2917 = vadd.f32 %v2384, %v2821
      %v2918 = vadd.f32 %v2385, %v2822
      %v2919 = vadd.f32 %v2386, %v2823
      %v2920 = vadd.f32 %v2387, %v2824
      %v2921 = vadd.f32 %v2388, %v2825
      %v2922 = vadd.f32 %v2389, %v2826
      %v2923 = vadd.f32 %v2390, %v2827
      %v2924 = vadd.f32 %v2391, %v2828
      %v2925 = vadd.f32 %v2392, %v2829
      %v2926 = vadd.f32 %v2393, %v2830
      %v2927 = vadd.f32 %v2394, %v2831
      %v2928 = vadd.f32 %v2395, %v2832
      %v2929 = vadd.f32 %v2396, %v2833
      %v2930 = vadd.f32 %v2397, %v2834
      %v2931 = vadd.f32 %v2398, %v2835
      %v2932 = vadd.f32 %v2399, %v2836
      %v2933 = vadd.f32 %v2400, %v2837
      %v2934 = vadd.f32 %v2401, %v2838
      %v2935 = vadd.f32 %v2402, %v2839
      %v2936 = vadd.f32 %v2403, %v2840
      %v2937 = vadd.f32 %v2404, %v2841
      %v2938 = vadd.f32 %v2405, %v2842
      %v2939 = vadd.f32 %v2406, %v2843
      %v2940 = vadd.f32 %v2407, %v2844
      %v2941 = vadd.f32 %v2408, %v2845
      %v2942 = vadd.f32 %v2409, %v2846
      %v2943 = vadd.f32 %v2410, %v2847
      %v2944 = vadd.f32 %v2411, %v2848
      %v2945 = vadd.f32 %v2412, %v2849
      %v2946 = vadd.f32 %v2413, %v2850
      %v2947 = vadd.f32 %v2414, %v2851
      %v2948 = vadd.f32 %v2415, %v2852
      %v2949 = vadd.f32 %v2416, %v2853
      %v2950 = vadd.f32 %v2417, %v2854
      %v2951 = vadd.f32 %v2418, %v2855
      %v2952 = vadd.f32 %v2419, %v2856
      %v2953 = vadd.f32 %v2420, %v2857
      %v2954 = vadd.f32 %v2421, %v2858
      %v2955 = vadd.f32 %v2422, %v2859
      %v2956 = vadd.f32 %v2423, %v2860
      %v2957 = vadd.f32 %v2424, %v2861
      %v2958 = vadd.f32 %v2425, %v2862
      %v2959 = vadd.f32 %v2426, %v2863
      %v2960 = vadd.f32 %v2427, %v2864
      %v2961 = vadd.f32 %v2428, %v2865
      %v2962 = vadd.f32 %v2429, %v2866
      %v2963 = vadd.f32 %v2430, %v2867
      %v2964 = vadd.f32 %v2431, %v2868
      %2965 = vrot.lane.b32.xlu0 %v214, 32
      %v2966 = vpop.permute.xlu0 %2965
      %2967 = vrot.lane.b32.xlu0 %v215, 32
      %v2968 = vpop.permute.xlu0 %2967
      %vm2969 = vcmask 261120
      %v2970 = vsel %vm2969, %v2966, %v2968
      %v2974 = vmul.f32 %v201, %v2966
      %v2975 = vmul.f32 %v202, %v2970
      %v2976 = vmul.f32 %v203, %v2968
      %v2980 = vrot.slane %v2975, 7
      %v2981 = vrot.slane %v2976, 6
      %v2982 = vsel %vm223, %v2974, %v2980
      %v2983 = vsel %vm395, %v2982, %v2981
      %v2984 = vsel %vm225, %v2974, %v2980
      %v2985 = vsel %vm398, %v2984, %v2981
      %v2986 = vrot.slane %v2985, 1
      %v2987 = vsel %vm228, %v2974, %v2980
      %v2988 = vsel %vm402, %v2987, %v2981
      %v2989 = vrot.slane %v2988, 2
      %v2990 = vsel %vm231, %v2974, %v2980
      %v2991 = vsel %vm406, %v2990, %v2981
      %v2992 = vrot.slane %v2991, 3
      %v2993 = vsel %vm234, %v2974, %v2980
      %v2994 = vsel %vm410, %v2993, %v2981
      %v2995 = vrot.slane %v2994, 4
      %v2996 = vsel %vm237, %v2974, %v2980
      %v2997 = vsel %vm414, %v2996, %v2981
      %v2998 = vrot.slane %v2997, 5
      %v2999 = vsel %vm240, %v2974, %v2980
      %v3000 = vsel %vm418, %v2981, %v2999
      %v3001 = vrot.slane %v3000, 6
      %v3002 = vsel %vm243, %v2980, %v2974
      %v3003 = vsel %vm422, %v2981, %v3002
      %v3004 = vrot.slane %v3003, 7
      %3005 = vset.pattern.permute.xlu0 6
      %3006 = vperm.xlu0 %3005, %v204
      %v3007 = vpop.permute.xlu0 %3006
      %3009 = vset.pattern.permute.xlu0 6
      %3010 = vperm.xlu0 %3009, %v205
      %v3011 = vpop.permute.xlu0 %3010
      %3013 = vset.pattern.permute.xlu0 6
      %3014 = vperm.xlu0 %3013, %v206
      %v3015 = vpop.permute.xlu0 %3014
      %v3017 = vperm.slane %v2983, 0
      %v3018 = vperm.slane %v2983, 1
      %v3019 = vperm.slane %v2983, 2
      %v3020 = vperm.slane %v2986, 0
      %v3021 = vperm.slane %v2986, 1
      %v3022 = vperm.slane %v2986, 2
      %v3023 = vperm.slane %v2989, 0
      %v3024 = vperm.slane %v2989, 1
      %v3025 = vperm.slane %v2989, 2
      %v3026 = vperm.slane %v2992, 0
      %v3027 = vperm.slane %v2992, 1
      %v3028 = vperm.slane %v2992, 2
      %v3029 = vperm.slane %v2995, 0
      %v3030 = vperm.slane %v2995, 1
      %v3031 = vperm.slane %v2995, 2
      %v3032 = vperm.slane %v2998, 0
      %v3033 = vperm.slane %v2998, 1
      %v3034 = vperm.slane %v2998, 2
      %v3035 = vperm.slane %v3001, 0
      %v3036 = vperm.slane %v3001, 1
      %v3037 = vperm.slane %v3001, 2
      %v3038 = vperm.slane %v3004, 0
      %v3039 = vperm.slane %v3004, 1
      %v3040 = vperm.slane %v3004, 2
      %v3065 = vmul.f32 %v3007, %v3017
      %v3066 = vmul.f32 %v3007, %v3018
      %v3067 = vmul.f32 %v3007, %v3019
      %v3068 = vmul.f32 %v3011, %v3017
      %v3069 = vmul.f32 %v3011, %v3018
      %v3070 = vmul.f32 %v3011, %v3019
      %v3071 = vmul.f32 %v3015, %v3017
      %v3072 = vmul.f32 %v3015, %v3018
      %v3073 = vmul.f32 %v3015, %v3019
      %v3074 = vmul.f32 %v3007, %v3020
      %v3075 = vmul.f32 %v3007, %v3021
      %v3076 = vmul.f32 %v3007, %v3022
      %v3077 = vmul.f32 %v3011, %v3020
      %v3078 = vmul.f32 %v3011, %v3021
      %v3079 = vmul.f32 %v3011, %v3022
      %v3080 = vmul.f32 %v3015, %v3020
      %v3081 = vmul.f32 %v3015, %v3021
      %v3082 = vmul.f32 %v3015, %v3022
      %v3083 = vmul.f32 %v3007, %v3023
      %v3084 = vmul.f32 %v3007, %v3024
      %v3085 = vmul.f32 %v3007, %v3025
      %v3086 = vmul.f32 %v3011, %v3023
      %v3087 = vmul.f32 %v3011, %v3024
      %v3088 = vmul.f32 %v3011, %v3025
      %v3089 = vmul.f32 %v3015, %v3023
      %v3090 = vmul.f32 %v3015, %v3024
      %v3091 = vmul.f32 %v3015, %v3025
      %v3092 = vmul.f32 %v3007, %v3026
      %v3093 = vmul.f32 %v3007, %v3027
      %v3094 = vmul.f32 %v3007, %v3028
      %v3095 = vmul.f32 %v3011, %v3026
      %v3096 = vmul.f32 %v3011, %v3027
      %v3097 = vmul.f32 %v3011, %v3028
      %v3098 = vmul.f32 %v3015, %v3026
      %v3099 = vmul.f32 %v3015, %v3027
      %v3100 = vmul.f32 %v3015, %v3028
      %v3101 = vmul.f32 %v3007, %v3029
      %v3102 = vmul.f32 %v3007, %v3030
      %v3103 = vmul.f32 %v3007, %v3031
      %v3104 = vmul.f32 %v3011, %v3029
      %v3105 = vmul.f32 %v3011, %v3030
      %v3106 = vmul.f32 %v3011, %v3031
      %v3107 = vmul.f32 %v3015, %v3029
      %v3108 = vmul.f32 %v3015, %v3030
      %v3109 = vmul.f32 %v3015, %v3031
      %v3110 = vmul.f32 %v3007, %v3032
      %v3111 = vmul.f32 %v3007, %v3033
      %v3112 = vmul.f32 %v3007, %v3034
      %v3113 = vmul.f32 %v3011, %v3032
      %v3114 = vmul.f32 %v3011, %v3033
      %v3115 = vmul.f32 %v3011, %v3034
      %v3116 = vmul.f32 %v3015, %v3032
      %v3117 = vmul.f32 %v3015, %v3033
      %v3118 = vmul.f32 %v3015, %v3034
      %v3119 = vmul.f32 %v3007, %v3035
      %v3120 = vmul.f32 %v3007, %v3036
      %v3121 = vmul.f32 %v3007, %v3037
      %v3122 = vmul.f32 %v3011, %v3035
      %v3123 = vmul.f32 %v3011, %v3036
      %v3124 = vmul.f32 %v3011, %v3037
      %v3125 = vmul.f32 %v3015, %v3035
      %v3126 = vmul.f32 %v3015, %v3036
      %v3127 = vmul.f32 %v3015, %v3037
      %v3128 = vmul.f32 %v3007, %v3038
      %v3129 = vmul.f32 %v3007, %v3039
      %v3130 = vmul.f32 %v3007, %v3040
      %v3131 = vmul.f32 %v3011, %v3038
      %v3132 = vmul.f32 %v3011, %v3039
      %v3133 = vmul.f32 %v3011, %v3040
      %v3134 = vmul.f32 %v3015, %v3038
      %v3135 = vmul.f32 %v3015, %v3039
      %v3136 = vmul.f32 %v3015, %v3040
      %3209 = vrot.lane.b32.xlu0 %v3065, 96
      %v3210 = vpop.permute.xlu0 %3209
      %3211 = vrot.lane.b32.xlu0 %v3066, 96
      %v3212 = vpop.permute.xlu0 %3211
      %3213 = vrot.lane.b32.xlu0 %v3067, 96
      %v3214 = vpop.permute.xlu0 %3213
      %3215 = vrot.lane.b32.xlu0 %v3068, 96
      %v3216 = vpop.permute.xlu0 %3215
      %3217 = vrot.lane.b32.xlu0 %v3069, 96
      %v3218 = vpop.permute.xlu0 %3217
      %3219 = vrot.lane.b32.xlu0 %v3070, 96
      %v3220 = vpop.permute.xlu0 %3219
      %3221 = vrot.lane.b32.xlu0 %v3071, 96
      %v3222 = vpop.permute.xlu0 %3221
      %3223 = vrot.lane.b32.xlu0 %v3072, 96
      %v3224 = vpop.permute.xlu0 %3223
      %3225 = vrot.lane.b32.xlu0 %v3073, 96
      %v3226 = vpop.permute.xlu0 %3225
      %3227 = vrot.lane.b32.xlu0 %v3074, 96
      %v3228 = vpop.permute.xlu0 %3227
      %3229 = vrot.lane.b32.xlu0 %v3075, 96
      %v3230 = vpop.permute.xlu0 %3229
      %3231 = vrot.lane.b32.xlu0 %v3076, 96
      %v3232 = vpop.permute.xlu0 %3231
      %3233 = vrot.lane.b32.xlu0 %v3077, 96
      %v3234 = vpop.permute.xlu0 %3233
      %3235 = vrot.lane.b32.xlu0 %v3078, 96
      %v3236 = vpop.permute.xlu0 %3235
      %3237 = vrot.lane.b32.xlu0 %v3079, 96
      %v3238 = vpop.permute.xlu0 %3237
      %3239 = vrot.lane.b32.xlu0 %v3080, 96
      %v3240 = vpop.permute.xlu0 %3239
      %3241 = vrot.lane.b32.xlu0 %v3081, 96
      %v3242 = vpop.permute.xlu0 %3241
      %3243 = vrot.lane.b32.xlu0 %v3082, 96
      %v3244 = vpop.permute.xlu0 %3243
      %3245 = vrot.lane.b32.xlu0 %v3083, 96
      %v3246 = vpop.permute.xlu0 %3245
      %3247 = vrot.lane.b32.xlu0 %v3084, 96
      %v3248 = vpop.permute.xlu0 %3247
      %3249 = vrot.lane.b32.xlu0 %v3085, 96
      %v3250 = vpop.permute.xlu0 %3249
      %3251 = vrot.lane.b32.xlu0 %v3086, 96
      %v3252 = vpop.permute.xlu0 %3251
      %3253 = vrot.lane.b32.xlu0 %v3087, 96
      %v3254 = vpop.permute.xlu0 %3253
      %3255 = vrot.lane.b32.xlu0 %v3088, 96
      %v3256 = vpop.permute.xlu0 %3255
      %3257 = vrot.lane.b32.xlu0 %v3089, 96
      %v3258 = vpop.permute.xlu0 %3257
      %3259 = vrot.lane.b32.xlu0 %v3090, 96
      %v3260 = vpop.permute.xlu0 %3259
      %3261 = vrot.lane.b32.xlu0 %v3091, 96
      %v3262 = vpop.permute.xlu0 %3261
      %3263 = vrot.lane.b32.xlu0 %v3092, 96
      %v3264 = vpop.permute.xlu0 %3263
      %3265 = vrot.lane.b32.xlu0 %v3093, 96
      %v3266 = vpop.permute.xlu0 %3265
      %3267 = vrot.lane.b32.xlu0 %v3094, 96
      %v3268 = vpop.permute.xlu0 %3267
      %3269 = vrot.lane.b32.xlu0 %v3095, 96
      %v3270 = vpop.permute.xlu0 %3269
      %3271 = vrot.lane.b32.xlu0 %v3096, 96
      %v3272 = vpop.permute.xlu0 %3271
      %3273 = vrot.lane.b32.xlu0 %v3097, 96
      %v3274 = vpop.permute.xlu0 %3273
      %3275 = vrot.lane.b32.xlu0 %v3098, 96
      %v3276 = vpop.permute.xlu0 %3275
      %3277 = vrot.lane.b32.xlu0 %v3099, 96
      %v3278 = vpop.permute.xlu0 %3277
      %3279 = vrot.lane.b32.xlu0 %v3100, 96
      %v3280 = vpop.permute.xlu0 %3279
      %3281 = vrot.lane.b32.xlu0 %v3101, 96
      %v3282 = vpop.permute.xlu0 %3281
      %3283 = vrot.lane.b32.xlu0 %v3102, 96
      %v3284 = vpop.permute.xlu0 %3283
      %3285 = vrot.lane.b32.xlu0 %v3103, 96
      %v3286 = vpop.permute.xlu0 %3285
      %3287 = vrot.lane.b32.xlu0 %v3104, 96
      %v3288 = vpop.permute.xlu0 %3287
      %3289 = vrot.lane.b32.xlu0 %v3105, 96
      %v3290 = vpop.permute.xlu0 %3289
      %3291 = vrot.lane.b32.xlu0 %v3106, 96
      %v3292 = vpop.permute.xlu0 %3291
      %3293 = vrot.lane.b32.xlu0 %v3107, 96
      %v3294 = vpop.permute.xlu0 %3293
      %3295 = vrot.lane.b32.xlu0 %v3108, 96
      %v3296 = vpop.permute.xlu0 %3295
      %3297 = vrot.lane.b32.xlu0 %v3109, 96
      %v3298 = vpop.permute.xlu0 %3297
      %3299 = vrot.lane.b32.xlu0 %v3110, 96
      %v3300 = vpop.permute.xlu0 %3299
      %3301 = vrot.lane.b32.xlu0 %v3111, 96
      %v3302 = vpop.permute.xlu0 %3301
      %3303 = vrot.lane.b32.xlu0 %v3112, 96
      %v3304 = vpop.permute.xlu0 %3303
      %3305 = vrot.lane.b32.xlu0 %v3113, 96
      %v3306 = vpop.permute.xlu0 %3305
      %3307 = vrot.lane.b32.xlu0 %v3114, 96
      %v3308 = vpop.permute.xlu0 %3307
      %3309 = vrot.lane.b32.xlu0 %v3115, 96
      %v3310 = vpop.permute.xlu0 %3309
      %3311 = vrot.lane.b32.xlu0 %v3116, 96
      %v3312 = vpop.permute.xlu0 %3311
      %3313 = vrot.lane.b32.xlu0 %v3117, 96
      %v3314 = vpop.permute.xlu0 %3313
      %3315 = vrot.lane.b32.xlu0 %v3118, 96
      %v3316 = vpop.permute.xlu0 %3315
      %3317 = vrot.lane.b32.xlu0 %v3119, 96
      %v3318 = vpop.permute.xlu0 %3317
      %3319 = vrot.lane.b32.xlu0 %v3120, 96
      %v3320 = vpop.permute.xlu0 %3319
      %3321 = vrot.lane.b32.xlu0 %v3121, 96
      %v3322 = vpop.permute.xlu0 %3321
      %3323 = vrot.lane.b32.xlu0 %v3122, 96
      %v3324 = vpop.permute.xlu0 %3323
      %3325 = vrot.lane.b32.xlu0 %v3123, 96
      %v3326 = vpop.permute.xlu0 %3325
      %3327 = vrot.lane.b32.xlu0 %v3124, 96
      %v3328 = vpop.permute.xlu0 %3327
      %3329 = vrot.lane.b32.xlu0 %v3125, 96
      %v3330 = vpop.permute.xlu0 %3329
      %3331 = vrot.lane.b32.xlu0 %v3126, 96
      %v3332 = vpop.permute.xlu0 %3331
      %3333 = vrot.lane.b32.xlu0 %v3127, 96
      %v3334 = vpop.permute.xlu0 %3333
      %3335 = vrot.lane.b32.xlu0 %v3128, 96
      %v3336 = vpop.permute.xlu0 %3335
      %3337 = vrot.lane.b32.xlu0 %v3129, 96
      %v3338 = vpop.permute.xlu0 %3337
      %3339 = vrot.lane.b32.xlu0 %v3130, 96
      %v3340 = vpop.permute.xlu0 %3339
      %3341 = vrot.lane.b32.xlu0 %v3131, 96
      %v3342 = vpop.permute.xlu0 %3341
      %3343 = vrot.lane.b32.xlu0 %v3132, 96
      %v3344 = vpop.permute.xlu0 %3343
      %3345 = vrot.lane.b32.xlu0 %v3133, 96
      %v3346 = vpop.permute.xlu0 %3345
      %3347 = vrot.lane.b32.xlu0 %v3134, 96
      %v3348 = vpop.permute.xlu0 %3347
      %3349 = vrot.lane.b32.xlu0 %v3135, 96
      %v3350 = vpop.permute.xlu0 %3349
      %3351 = vrot.lane.b32.xlu0 %v3136, 96
      %v3352 = vpop.permute.xlu0 %3351
      %vm3353 = vcmask 785408
      %v3354 = vsel %vm3353, %v3210, %v3212
      %v3355 = vsel %vm3353, %v3212, %v3214
      %v3356 = vsel %vm3353, %v3216, %v3218
      %v3357 = vsel %vm3353, %v3218, %v3220
      %v3358 = vsel %vm3353, %v3222, %v3224
      %v3359 = vsel %vm3353, %v3224, %v3226
      %v3360 = vsel %vm3353, %v3228, %v3230
      %v3361 = vsel %vm3353, %v3230, %v3232
      %v3362 = vsel %vm3353, %v3234, %v3236
      %v3363 = vsel %vm3353, %v3236, %v3238
      %v3364 = vsel %vm3353, %v3240, %v3242
      %v3365 = vsel %vm3353, %v3242, %v3244
      %v3366 = vsel %vm3353, %v3246, %v3248
      %v3367 = vsel %vm3353, %v3248, %v3250
      %v3368 = vsel %vm3353, %v3252, %v3254
      %v3369 = vsel %vm3353, %v3254, %v3256
      %v3370 = vsel %vm3353, %v3258, %v3260
      %v3371 = vsel %vm3353, %v3260, %v3262
      %v3372 = vsel %vm3353, %v3264, %v3266
      %v3373 = vsel %vm3353, %v3266, %v3268
      %v3374 = vsel %vm3353, %v3270, %v3272
      %v3375 = vsel %vm3353, %v3272, %v3274
      %v3376 = vsel %vm3353, %v3276, %v3278
      %v3377 = vsel %vm3353, %v3278, %v3280
      %v3378 = vsel %vm3353, %v3282, %v3284
      %v3379 = vsel %vm3353, %v3284, %v3286
      %v3380 = vsel %vm3353, %v3288, %v3290
      %v3381 = vsel %vm3353, %v3290, %v3292
      %v3382 = vsel %vm3353, %v3294, %v3296
      %v3383 = vsel %vm3353, %v3296, %v3298
      %v3384 = vsel %vm3353, %v3300, %v3302
      %v3385 = vsel %vm3353, %v3302, %v3304
      %v3386 = vsel %vm3353, %v3306, %v3308
      %v3387 = vsel %vm3353, %v3308, %v3310
      %v3388 = vsel %vm3353, %v3312, %v3314
      %v3389 = vsel %vm3353, %v3314, %v3316
      %v3390 = vsel %vm3353, %v3318, %v3320
      %v3391 = vsel %vm3353, %v3320, %v3322
      %v3392 = vsel %vm3353, %v3324, %v3326
      %v3393 = vsel %vm3353, %v3326, %v3328
      %v3394 = vsel %vm3353, %v3330, %v3332
      %v3395 = vsel %vm3353, %v3332, %v3334
      %v3396 = vsel %vm3353, %v3336, %v3338
      %v3397 = vsel %vm3353, %v3338, %v3340
      %v3398 = vsel %vm3353, %v3342, %v3344
      %v3399 = vsel %vm3353, %v3344, %v3346
      %v3400 = vsel %vm3353, %v3348, %v3350
      %v3401 = vsel %vm3353, %v3350, %v3352
      %v3450 = vadd.f32 %v2917, %v3354
      %v3451 = vadd.f32 %v2918, %v3355
      %v3452 = vadd.f32 %v2919, %v3356
      %v3453 = vadd.f32 %v2920, %v3357
      %v3454 = vadd.f32 %v2921, %v3358
      %v3455 = vadd.f32 %v2922, %v3359
      %v3456 = vadd.f32 %v2923, %v3360
      %v3457 = vadd.f32 %v2924, %v3361
      %v3458 = vadd.f32 %v2925, %v3362
      %v3459 = vadd.f32 %v2926, %v3363
      %v3460 = vadd.f32 %v2927, %v3364
      %v3461 = vadd.f32 %v2928, %v3365
      %v3462 = vadd.f32 %v2929, %v3366
      %v3463 = vadd.f32 %v2930, %v3367
      %v3464 = vadd.f32 %v2931, %v3368
      %v3465 = vadd.f32 %v2932, %v3369
      %v3466 = vadd.f32 %v2933, %v3370
      %v3467 = vadd.f32 %v2934, %v3371
      %v3468 = vadd.f32 %v2935, %v3372
      %v3469 = vadd.f32 %v2936, %v3373
      %v3470 = vadd.f32 %v2937, %v3374
      %v3471 = vadd.f32 %v2938, %v3375
      %v3472 = vadd.f32 %v2939, %v3376
      %v3473 = vadd.f32 %v2940, %v3377
      %v3474 = vadd.f32 %v2941, %v3378
      %v3475 = vadd.f32 %v2942, %v3379
      %v3476 = vadd.f32 %v2943, %v3380
      %v3477 = vadd.f32 %v2944, %v3381
      %v3478 = vadd.f32 %v2945, %v3382
      %v3479 = vadd.f32 %v2946, %v3383
      %v3480 = vadd.f32 %v2947, %v3384
      %v3481 = vadd.f32 %v2948, %v3385
      %v3482 = vadd.f32 %v2949, %v3386
      %v3483 = vadd.f32 %v2950, %v3387
      %v3484 = vadd.f32 %v2951, %v3388
      %v3485 = vadd.f32 %v2952, %v3389
      %v3486 = vadd.f32 %v2953, %v3390
      %v3487 = vadd.f32 %v2954, %v3391
      %v3488 = vadd.f32 %v2955, %v3392
      %v3489 = vadd.f32 %v2956, %v3393
      %v3490 = vadd.f32 %v2957, %v3394
      %v3491 = vadd.f32 %v2958, %v3395
      %v3492 = vadd.f32 %v2959, %v3396
      %v3493 = vadd.f32 %v2960, %v3397
      %v3494 = vadd.f32 %v2961, %v3398
      %v3495 = vadd.f32 %v2962, %v3399
      %v3496 = vadd.f32 %v2963, %v3400
      %v3497 = vadd.f32 %v2964, %v3401
      %3498 = vset.pattern.permute.xlu0 7
      %3499 = vperm.xlu0 %3498, %v204
      %v3500 = vpop.permute.xlu0 %3499
      %3502 = vset.pattern.permute.xlu0 7
      %3503 = vperm.xlu0 %3502, %v205
      %v3504 = vpop.permute.xlu0 %3503
      %3506 = vset.pattern.permute.xlu0 7
      %3507 = vperm.xlu0 %3506, %v206
      %v3508 = vpop.permute.xlu0 %3507
      %v3510 = vmul.f32 %v3500, %v437
      %v3511 = vmul.f32 %v3500, %v438
      %v3512 = vmul.f32 %v3500, %v439
      %v3513 = vmul.f32 %v3504, %v437
      %v3514 = vmul.f32 %v3504, %v438
      %v3515 = vmul.f32 %v3504, %v439
      %v3516 = vmul.f32 %v3508, %v437
      %v3517 = vmul.f32 %v3508, %v438
      %v3518 = vmul.f32 %v3508, %v439
      %v3519 = vmul.f32 %v3500, %v440
      %v3520 = vmul.f32 %v3500, %v441
      %v3521 = vmul.f32 %v3500, %v442
      %v3522 = vmul.f32 %v3504, %v440
      %v3523 = vmul.f32 %v3504, %v441
      %v3524 = vmul.f32 %v3504, %v442
      %v3525 = vmul.f32 %v3508, %v440
      %v3526 = vmul.f32 %v3508, %v441
      %v3527 = vmul.f32 %v3508, %v442
      %v3528 = vmul.f32 %v3500, %v443
      %v3529 = vmul.f32 %v3500, %v444
      %v3530 = vmul.f32 %v3500, %v445
      %v3531 = vmul.f32 %v3504, %v443
      %v3532 = vmul.f32 %v3504, %v444
      %v3533 = vmul.f32 %v3504, %v445
      %v3534 = vmul.f32 %v3508, %v443
      %v3535 = vmul.f32 %v3508, %v444
      %v3536 = vmul.f32 %v3508, %v445
      %v3537 = vmul.f32 %v3500, %v446
      %v3538 = vmul.f32 %v3500, %v447
      %v3539 = vmul.f32 %v3500, %v448
      %v3540 = vmul.f32 %v3504, %v446
      %v3541 = vmul.f32 %v3504, %v447
      %v3542 = vmul.f32 %v3504, %v448
      %v3543 = vmul.f32 %v3508, %v446
      %v3544 = vmul.f32 %v3508, %v447
      %v3545 = vmul.f32 %v3508, %v448
      %v3546 = vmul.f32 %v3500, %v449
      %v3547 = vmul.f32 %v3500, %v450
      %v3548 = vmul.f32 %v3500, %v451
      %v3549 = vmul.f32 %v3504, %v449
      %v3550 = vmul.f32 %v3504, %v450
      %v3551 = vmul.f32 %v3504, %v451
      %v3552 = vmul.f32 %v3508, %v449
      %v3553 = vmul.f32 %v3508, %v450
      %v3554 = vmul.f32 %v3508, %v451
      %v3555 = vmul.f32 %v3500, %v452
      %v3556 = vmul.f32 %v3500, %v453
      %v3557 = vmul.f32 %v3500, %v454
      %v3558 = vmul.f32 %v3504, %v452
      %v3559 = vmul.f32 %v3504, %v453
      %v3560 = vmul.f32 %v3504, %v454
      %v3561 = vmul.f32 %v3508, %v452
      %v3562 = vmul.f32 %v3508, %v453
      %v3563 = vmul.f32 %v3508, %v454
      %v3564 = vmul.f32 %v3500, %v455
      %v3565 = vmul.f32 %v3500, %v456
      %v3566 = vmul.f32 %v3500, %v457
      %v3567 = vmul.f32 %v3504, %v455
      %v3568 = vmul.f32 %v3504, %v456
      %v3569 = vmul.f32 %v3504, %v457
      %v3570 = vmul.f32 %v3508, %v455
      %v3571 = vmul.f32 %v3508, %v456
      %v3572 = vmul.f32 %v3508, %v457
      %v3573 = vmul.f32 %v3500, %v458
      %v3574 = vmul.f32 %v3500, %v459
      %v3575 = vmul.f32 %v3500, %v460
      %v3576 = vmul.f32 %v3504, %v458
      %v3577 = vmul.f32 %v3504, %v459
      %v3578 = vmul.f32 %v3504, %v460
      %v3579 = vmul.f32 %v3508, %v458
      %v3580 = vmul.f32 %v3508, %v459
      %v3581 = vmul.f32 %v3508, %v460
      %3654 = vrot.lane.b32.xlu0 %v3510, 95
      %v3655 = vpop.permute.xlu0 %3654
      %3656 = vrot.lane.b32.xlu0 %v3511, 95
      %v3657 = vpop.permute.xlu0 %3656
      %3658 = vrot.lane.b32.xlu0 %v3512, 95
      %v3659 = vpop.permute.xlu0 %3658
      %3660 = vrot.lane.b32.xlu0 %v3513, 95
      %v3661 = vpop.permute.xlu0 %3660
      %3662 = vrot.lane.b32.xlu0 %v3514, 95
      %v3663 = vpop.permute.xlu0 %3662
      %3664 = vrot.lane.b32.xlu0 %v3515, 95
      %v3665 = vpop.permute.xlu0 %3664
      %3666 = vrot.lane.b32.xlu0 %v3516, 95
      %v3667 = vpop.permute.xlu0 %3666
      %3668 = vrot.lane.b32.xlu0 %v3517, 95
      %v3669 = vpop.permute.xlu0 %3668
      %3670 = vrot.lane.b32.xlu0 %v3518, 95
      %v3671 = vpop.permute.xlu0 %3670
      %3672 = vrot.lane.b32.xlu0 %v3519, 95
      %v3673 = vpop.permute.xlu0 %3672
      %3674 = vrot.lane.b32.xlu0 %v3520, 95
      %v3675 = vpop.permute.xlu0 %3674
      %3676 = vrot.lane.b32.xlu0 %v3521, 95
      %v3677 = vpop.permute.xlu0 %3676
      %3678 = vrot.lane.b32.xlu0 %v3522, 95
      %v3679 = vpop.permute.xlu0 %3678
      %3680 = vrot.lane.b32.xlu0 %v3523, 95
      %v3681 = vpop.permute.xlu0 %3680
      %3682 = vrot.lane.b32.xlu0 %v3524, 95
      %v3683 = vpop.permute.xlu0 %3682
      %3684 = vrot.lane.b32.xlu0 %v3525, 95
      %v3685 = vpop.permute.xlu0 %3684
      %3686 = vrot.lane.b32.xlu0 %v3526, 95
      %v3687 = vpop.permute.xlu0 %3686
      %3688 = vrot.lane.b32.xlu0 %v3527, 95
      %v3689 = vpop.permute.xlu0 %3688
      %3690 = vrot.lane.b32.xlu0 %v3528, 95
      %v3691 = vpop.permute.xlu0 %3690
      %3692 = vrot.lane.b32.xlu0 %v3529, 95
      %v3693 = vpop.permute.xlu0 %3692
      %3694 = vrot.lane.b32.xlu0 %v3530, 95
      %v3695 = vpop.permute.xlu0 %3694
      %3696 = vrot.lane.b32.xlu0 %v3531, 95
      %v3697 = vpop.permute.xlu0 %3696
      %3698 = vrot.lane.b32.xlu0 %v3532, 95
      %v3699 = vpop.permute.xlu0 %3698
      %3700 = vrot.lane.b32.xlu0 %v3533, 95
      %v3701 = vpop.permute.xlu0 %3700
      %3702 = vrot.lane.b32.xlu0 %v3534, 95
      %v3703 = vpop.permute.xlu0 %3702
      %3704 = vrot.lane.b32.xlu0 %v3535, 95
      %v3705 = vpop.permute.xlu0 %3704
      %3706 = vrot.lane.b32.xlu0 %v3536, 95
      %v3707 = vpop.permute.xlu0 %3706
      %3708 = vrot.lane.b32.xlu0 %v3537, 95
      %v3709 = vpop.permute.xlu0 %3708
      %3710 = vrot.lane.b32.xlu0 %v3538, 95
      %v3711 = vpop.permute.xlu0 %3710
      %3712 = vrot.lane.b32.xlu0 %v3539, 95
      %v3713 = vpop.permute.xlu0 %3712
      %3714 = vrot.lane.b32.xlu0 %v3540, 95
      %v3715 = vpop.permute.xlu0 %3714
      %3716 = vrot.lane.b32.xlu0 %v3541, 95
      %v3717 = vpop.permute.xlu0 %3716
      %3718 = vrot.lane.b32.xlu0 %v3542, 95
      %v3719 = vpop.permute.xlu0 %3718
      %3720 = vrot.lane.b32.xlu0 %v3543, 95
      %v3721 = vpop.permute.xlu0 %3720
      %3722 = vrot.lane.b32.xlu0 %v3544, 95
      %v3723 = vpop.permute.xlu0 %3722
      %3724 = vrot.lane.b32.xlu0 %v3545, 95
      %v3725 = vpop.permute.xlu0 %3724
      %3726 = vrot.lane.b32.xlu0 %v3546, 95
      %v3727 = vpop.permute.xlu0 %3726
      %3728 = vrot.lane.b32.xlu0 %v3547, 95
      %v3729 = vpop.permute.xlu0 %3728
      %3730 = vrot.lane.b32.xlu0 %v3548, 95
      %v3731 = vpop.permute.xlu0 %3730
      %3732 = vrot.lane.b32.xlu0 %v3549, 95
      %v3733 = vpop.permute.xlu0 %3732
      %3734 = vrot.lane.b32.xlu0 %v3550, 95
      %v3735 = vpop.permute.xlu0 %3734
      %3736 = vrot.lane.b32.xlu0 %v3551, 95
      %v3737 = vpop.permute.xlu0 %3736
      %3738 = vrot.lane.b32.xlu0 %v3552, 95
      %v3739 = vpop.permute.xlu0 %3738
      %3740 = vrot.lane.b32.xlu0 %v3553, 95
      %v3741 = vpop.permute.xlu0 %3740
      %3742 = vrot.lane.b32.xlu0 %v3554, 95
      %v3743 = vpop.permute.xlu0 %3742
      %3744 = vrot.lane.b32.xlu0 %v3555, 95
      %v3745 = vpop.permute.xlu0 %3744
      %3746 = vrot.lane.b32.xlu0 %v3556, 95
      %v3747 = vpop.permute.xlu0 %3746
      %3748 = vrot.lane.b32.xlu0 %v3557, 95
      %v3749 = vpop.permute.xlu0 %3748
      %3750 = vrot.lane.b32.xlu0 %v3558, 95
      %v3751 = vpop.permute.xlu0 %3750
      %3752 = vrot.lane.b32.xlu0 %v3559, 95
      %v3753 = vpop.permute.xlu0 %3752
      %3754 = vrot.lane.b32.xlu0 %v3560, 95
      %v3755 = vpop.permute.xlu0 %3754
      %3756 = vrot.lane.b32.xlu0 %v3561, 95
      %v3757 = vpop.permute.xlu0 %3756
      %3758 = vrot.lane.b32.xlu0 %v3562, 95
      %v3759 = vpop.permute.xlu0 %3758
      %3760 = vrot.lane.b32.xlu0 %v3563, 95
      %v3761 = vpop.permute.xlu0 %3760
      %3762 = vrot.lane.b32.xlu0 %v3564, 95
      %v3763 = vpop.permute.xlu0 %3762
      %3764 = vrot.lane.b32.xlu0 %v3565, 95
      %v3765 = vpop.permute.xlu0 %3764
      %3766 = vrot.lane.b32.xlu0 %v3566, 95
      %v3767 = vpop.permute.xlu0 %3766
      %3768 = vrot.lane.b32.xlu0 %v3567, 95
      %v3769 = vpop.permute.xlu0 %3768
      %3770 = vrot.lane.b32.xlu0 %v3568, 95
      %v3771 = vpop.permute.xlu0 %3770
      %3772 = vrot.lane.b32.xlu0 %v3569, 95
      %v3773 = vpop.permute.xlu0 %3772
      %3774 = vrot.lane.b32.xlu0 %v3570, 95
      %v3775 = vpop.permute.xlu0 %3774
      %3776 = vrot.lane.b32.xlu0 %v3571, 95
      %v3777 = vpop.permute.xlu0 %3776
      %3778 = vrot.lane.b32.xlu0 %v3572, 95
      %v3779 = vpop.permute.xlu0 %3778
      %3780 = vrot.lane.b32.xlu0 %v3573, 95
      %v3781 = vpop.permute.xlu0 %3780
      %3782 = vrot.lane.b32.xlu0 %v3574, 95
      %v3783 = vpop.permute.xlu0 %3782
      %3784 = vrot.lane.b32.xlu0 %v3575, 95
      %v3785 = vpop.permute.xlu0 %3784
      %3786 = vrot.lane.b32.xlu0 %v3576, 95
      %v3787 = vpop.permute.xlu0 %3786
      %3788 = vrot.lane.b32.xlu0 %v3577, 95
      %v3789 = vpop.permute.xlu0 %3788
      %3790 = vrot.lane.b32.xlu0 %v3578, 95
      %v3791 = vpop.permute.xlu0 %3790
      %3792 = vrot.lane.b32.xlu0 %v3579, 95
      %v3793 = vpop.permute.xlu0 %3792
      %3794 = vrot.lane.b32.xlu0 %v3580, 95
      %v3795 = vpop.permute.xlu0 %3794
      %3796 = vrot.lane.b32.xlu0 %v3581, 95
      %v3797 = vpop.permute.xlu0 %3796
      %vm3798 = vcmask 777216
      %v3799 = vsel %vm3798, %v3655, %v3657
      %v3800 = vsel %vm3798, %v3657, %v3659
      %v3801 = vsel %vm3798, %v3661, %v3663
      %v3802 = vsel %vm3798, %v3663, %v3665
      %v3803 = vsel %vm3798, %v3667, %v3669
      %v3804 = vsel %vm3798, %v3669, %v3671
      %v3805 = vsel %vm3798, %v3673, %v3675
      %v3806 = vsel %vm3798, %v3675, %v3677
      %v3807 = vsel %vm3798, %v3679, %v3681
      %v3808 = vsel %vm3798, %v3681, %v3683
      %v3809 = vsel %vm3798, %v3685, %v3687
      %v3810 = vsel %vm3798, %v3687, %v3689
      %v3811 = vsel %vm3798, %v3691, %v3693
      %v3812 = vsel %vm3798, %v3693, %v3695
      %v3813 = vsel %vm3798, %v3697, %v3699
      %v3814 = vsel %vm3798, %v3699, %v3701
      %v3815 = vsel %vm3798, %v3703, %v3705
      %v3816 = vsel %vm3798, %v3705, %v3707
      %v3817 = vsel %vm3798, %v3709, %v3711
      %v3818 = vsel %vm3798, %v3711, %v3713
      %v3819 = vsel %vm3798, %v3715, %v3717
      %v3820 = vsel %vm3798, %v3717, %v3719
      %v3821 = vsel %vm3798, %v3721, %v3723
      %v3822 = vsel %vm3798, %v3723, %v3725
      %v3823 = vsel %vm3798, %v3727, %v3729
      %v3824 = vsel %vm3798, %v3729, %v3731
      %v3825 = vsel %vm3798, %v3733, %v3735
      %v3826 = vsel %vm3798, %v3735, %v3737
      %v3827 = vsel %vm3798, %v3739, %v3741
      %v3828 = vsel %vm3798, %v3741, %v3743
      %v3829 = vsel %vm3798, %v3745, %v3747
      %v3830 = vsel %vm3798, %v3747, %v3749
      %v3831 = vsel %vm3798, %v3751, %v3753
      %v3832 = vsel %vm3798, %v3753, %v3755
      %v3833 = vsel %vm3798, %v3757, %v3759
      %v3834 = vsel %vm3798, %v3759, %v3761
      %v3835 = vsel %vm3798, %v3763, %v3765
      %v3836 = vsel %vm3798, %v3765, %v3767
      %v3837 = vsel %vm3798, %v3769, %v3771
      %v3838 = vsel %vm3798, %v3771, %v3773
      %v3839 = vsel %vm3798, %v3775, %v3777
      %v3840 = vsel %vm3798, %v3777, %v3779
      %v3841 = vsel %vm3798, %v3781, %v3783
      %v3842 = vsel %vm3798, %v3783, %v3785
      %v3843 = vsel %vm3798, %v3787, %v3789
      %v3844 = vsel %vm3798, %v3789, %v3791
      %v3845 = vsel %vm3798, %v3793, %v3795
      %v3846 = vsel %vm3798, %v3795, %v3797
      %v3895 = vadd.f32 %v3450, %v3799
      %v3896 = vadd.f32 %v3451, %v3800
      %v3897 = vadd.f32 %v3452, %v3801
      %v3898 = vadd.f32 %v3453, %v3802
      %v3899 = vadd.f32 %v3454, %v3803
      %v3900 = vadd.f32 %v3455, %v3804
      %v3901 = vadd.f32 %v3456, %v3805
      %v3902 = vadd.f32 %v3457, %v3806
      %v3903 = vadd.f32 %v3458, %v3807
      %v3904 = vadd.f32 %v3459, %v3808
      %v3905 = vadd.f32 %v3460, %v3809
      %v3906 = vadd.f32 %v3461, %v3810
      %v3907 = vadd.f32 %v3462, %v3811
      %v3908 = vadd.f32 %v3463, %v3812
      %v3909 = vadd.f32 %v3464, %v3813
      %v3910 = vadd.f32 %v3465, %v3814
      %v3911 = vadd.f32 %v3466, %v3815
      %v3912 = vadd.f32 %v3467, %v3816
      %v3913 = vadd.f32 %v3468, %v3817
      %v3914 = vadd.f32 %v3469, %v3818
      %v3915 = vadd.f32 %v3470, %v3819
      %v3916 = vadd.f32 %v3471, %v3820
      %v3917 = vadd.f32 %v3472, %v3821
      %v3918 = vadd.f32 %v3473, %v3822
      %v3919 = vadd.f32 %v3474, %v3823
      %v3920 = vadd.f32 %v3475, %v3824
      %v3921 = vadd.f32 %v3476, %v3825
      %v3922 = vadd.f32 %v3477, %v3826
      %v3923 = vadd.f32 %v3478, %v3827
      %v3924 = vadd.f32 %v3479, %v3828
      %v3925 = vadd.f32 %v3480, %v3829
      %v3926 = vadd.f32 %v3481, %v3830
      %v3927 = vadd.f32 %v3482, %v3831
      %v3928 = vadd.f32 %v3483, %v3832
      %v3929 = vadd.f32 %v3484, %v3833
      %v3930 = vadd.f32 %v3485, %v3834
      %v3931 = vadd.f32 %v3486, %v3835
      %v3932 = vadd.f32 %v3487, %v3836
      %v3933 = vadd.f32 %v3488, %v3837
      %v3934 = vadd.f32 %v3489, %v3838
      %v3935 = vadd.f32 %v3490, %v3839
      %v3936 = vadd.f32 %v3491, %v3840
      %v3937 = vadd.f32 %v3492, %v3841
      %v3938 = vadd.f32 %v3493, %v3842
      %v3939 = vadd.f32 %v3494, %v3843
      %v3940 = vadd.f32 %v3495, %v3844
      %v3941 = vadd.f32 %v3496, %v3845
      %v3942 = vadd.f32 %v3497, %v3846
      %3943 = vrot.lane.b32.xlu0 %v919, 34
      %v3944 = vpop.permute.xlu0 %3943
      %3945 = vrot.lane.b32.xlu0 %v920, 34
      %v3946 = vpop.permute.xlu0 %3945
      %vm3947 = vcmask 277504
      %v3948 = vsel %vm3947, %v3944, %v3946
      %v3952 = vmul.f32 %v201, %v3944
      %v3953 = vmul.f32 %v202, %v3948
      %v3954 = vmul.f32 %v203, %v3946
      %v3958 = vrot.slane %v3953, 7
      %v3959 = vrot.slane %v3954, 6
      %v3960 = vsel %vm223, %v3952, %v3958
      %v3961 = vsel %vm395, %v3960, %v3959
      %v3962 = vsel %vm225, %v3952, %v3958
      %v3963 = vsel %vm398, %v3962, %v3959
      %v3964 = vrot.slane %v3963, 1
      %v3965 = vsel %vm228, %v3952, %v3958
      %v3966 = vsel %vm402, %v3965, %v3959
      %v3967 = vrot.slane %v3966, 2
      %v3968 = vsel %vm231, %v3952, %v3958
      %v3969 = vsel %vm406, %v3968, %v3959
      %v3970 = vrot.slane %v3969, 3
      %v3971 = vsel %vm234, %v3952, %v3958
      %v3972 = vsel %vm410, %v3971, %v3959
      %v3973 = vrot.slane %v3972, 4
      %v3974 = vsel %vm237, %v3952, %v3958
      %v3975 = vsel %vm414, %v3974, %v3959
      %v3976 = vrot.slane %v3975, 5
      %v3977 = vsel %vm240, %v3952, %v3958
      %v3978 = vsel %vm418, %v3959, %v3977
      %v3979 = vrot.slane %v3978, 6
      %v3980 = vsel %vm243, %v3958, %v3952
      %v3981 = vsel %vm422, %v3959, %v3980
      %v3982 = vrot.slane %v3981, 7
      %3983 = vset.pattern.permute.xlu0 8
      %3984 = vperm.xlu0 %3983, %v204
      %v3985 = vpop.permute.xlu0 %3984
      %3987 = vset.pattern.permute.xlu0 8
      %3988 = vperm.xlu0 %3987, %v205
      %v3989 = vpop.permute.xlu0 %3988
      %3991 = vset.pattern.permute.xlu0 8
      %3992 = vperm.xlu0 %3991, %v206
      %v3993 = vpop.permute.xlu0 %3992
      %v3995 = vperm.slane %v3961, 0
      %v3996 = vperm.slane %v3961, 1
      %v3997 = vperm.slane %v3961, 2
      %v3998 = vperm.slane %v3964, 0
      %v3999 = vperm.slane %v3964, 1
      %v4000 = vperm.slane %v3964, 2
      %v4001 = vperm.slane %v3967, 0
      %v4002 = vperm.slane %v3967, 1
      %v4003 = vperm.slane %v3967, 2
      %v4004 = vperm.slane %v3970, 0
      %v4005 = vperm.slane %v3970, 1
      %v4006 = vperm.slane %v3970, 2
      %v4007 = vperm.slane %v3973, 0
      %v4008 = vperm.slane %v3973, 1
      %v4009 = vperm.slane %v3973, 2
      %v4010 = vperm.slane %v3976, 0
      %v4011 = vperm.slane %v3976, 1
      %v4012 = vperm.slane %v3976, 2
      %v4013 = vperm.slane %v3979, 0
      %v4014 = vperm.slane %v3979, 1
      %v4015 = vperm.slane %v3979, 2
      %v4016 = vperm.slane %v3982, 0
      %v4017 = vperm.slane %v3982, 1
      %v4018 = vperm.slane %v3982, 2
      %v4043 = vmul.f32 %v3985, %v3995
      %v4044 = vmul.f32 %v3985, %v3996
      %v4045 = vmul.f32 %v3985, %v3997
      %v4046 = vmul.f32 %v3989, %v3995
      %v4047 = vmul.f32 %v3989, %v3996
      %v4048 = vmul.f32 %v3989, %v3997
      %v4049 = vmul.f32 %v3993, %v3995
      %v4050 = vmul.f32 %v3993, %v3996
      %v4051 = vmul.f32 %v3993, %v3997
      %v4052 = vmul.f32 %v3985, %v3998
      %v4053 = vmul.f32 %v3985, %v3999
      %v4054 = vmul.f32 %v3985, %v4000
      %v4055 = vmul.f32 %v3989, %v3998
      %v4056 = vmul.f32 %v3989, %v3999
      %v4057 = vmul.f32 %v3989, %v4000
      %v4058 = vmul.f32 %v3993, %v3998
      %v4059 = vmul.f32 %v3993, %v3999
      %v4060 = vmul.f32 %v3993, %v4000
      %v4061 = vmul.f32 %v3985, %v4001
      %v4062 = vmul.f32 %v3985, %v4002
      %v4063 = vmul.f32 %v3985, %v4003
      %v4064 = vmul.f32 %v3989, %v4001
      %v4065 = vmul.f32 %v3989, %v4002
      %v4066 = vmul.f32 %v3989, %v4003
      %v4067 = vmul.f32 %v3993, %v4001
      %v4068 = vmul.f32 %v3993, %v4002
      %v4069 = vmul.f32 %v3993, %v4003
      %v4070 = vmul.f32 %v3985, %v4004
      %v4071 = vmul.f32 %v3985, %v4005
      %v4072 = vmul.f32 %v3985, %v4006
      %v4073 = vmul.f32 %v3989, %v4004
      %v4074 = vmul.f32 %v3989, %v4005
      %v4075 = vmul.f32 %v3989, %v4006
      %v4076 = vmul.f32 %v3993, %v4004
      %v4077 = vmul.f32 %v3993, %v4005
      %v4078 = vmul.f32 %v3993, %v4006
      %v4079 = vmul.f32 %v3985, %v4007
      %v4080 = vmul.f32 %v3985, %v4008
      %v4081 = vmul.f32 %v3985, %v4009
      %v4082 = vmul.f32 %v3989, %v4007
      %v4083 = vmul.f32 %v3989, %v4008
      %v4084 = vmul.f32 %v3989, %v4009
      %v4085 = vmul.f32 %v3993, %v4007
      %v4086 = vmul.f32 %v3993, %v4008
      %v4087 = vmul.f32 %v3993, %v4009
      %v4088 = vmul.f32 %v3985, %v4010
      %v4089 = vmul.f32 %v3985, %v4011
      %v4090 = vmul.f32 %v3985, %v4012
      %v4091 = vmul.f32 %v3989, %v4010
      %v4092 = vmul.f32 %v3989, %v4011
      %v4093 = vmul.f32 %v3989, %v4012
      %v4094 = vmul.f32 %v3993, %v4010
      %v4095 = vmul.f32 %v3993, %v4011
      %v4096 = vmul.f32 %v3993, %v4012
      %v4097 = vmul.f32 %v3985, %v4013
      %v4098 = vmul.f32 %v3985, %v4014
      %v4099 = vmul.f32 %v3985, %v4015
      %v4100 = vmul.f32 %v3989, %v4013
      %v4101 = vmul.f32 %v3989, %v4014
      %v4102 = vmul.f32 %v3989, %v4015
      %v4103 = vmul.f32 %v3993, %v4013
      %v4104 = vmul.f32 %v3993, %v4014
      %v4105 = vmul.f32 %v3993, %v4015
      %v4106 = vmul.f32 %v3985, %v4016
      %v4107 = vmul.f32 %v3985, %v4017
      %v4108 = vmul.f32 %v3985, %v4018
      %v4109 = vmul.f32 %v3989, %v4016
      %v4110 = vmul.f32 %v3989, %v4017
      %v4111 = vmul.f32 %v3989, %v4018
      %v4112 = vmul.f32 %v3993, %v4016
      %v4113 = vmul.f32 %v3993, %v4017
      %v4114 = vmul.f32 %v3993, %v4018
      %4187 = vrot.lane.b32.xlu0 %v4043, 94
      %v4188 = vpop.permute.xlu0 %4187
      %4189 = vrot.lane.b32.xlu0 %v4044, 94
      %v4190 = vpop.permute.xlu0 %4189
      %4191 = vrot.lane.b32.xlu0 %v4045, 94
      %v4192 = vpop.permute.xlu0 %4191
      %4193 = vrot.lane.b32.xlu0 %v4046, 94
      %v4194 = vpop.permute.xlu0 %4193
      %4195 = vrot.lane.b32.xlu0 %v4047, 94
      %v4196 = vpop.permute.xlu0 %4195
      %4197 = vrot.lane.b32.xlu0 %v4048, 94
      %v4198 = vpop.permute.xlu0 %4197
      %4199 = vrot.lane.b32.xlu0 %v4049, 94
      %v4200 = vpop.permute.xlu0 %4199
      %4201 = vrot.lane.b32.xlu0 %v4050, 94
      %v4202 = vpop.permute.xlu0 %4201
      %4203 = vrot.lane.b32.xlu0 %v4051, 94
      %v4204 = vpop.permute.xlu0 %4203
      %4205 = vrot.lane.b32.xlu0 %v4052, 94
      %v4206 = vpop.permute.xlu0 %4205
      %4207 = vrot.lane.b32.xlu0 %v4053, 94
      %v4208 = vpop.permute.xlu0 %4207
      %4209 = vrot.lane.b32.xlu0 %v4054, 94
      %v4210 = vpop.permute.xlu0 %4209
      %4211 = vrot.lane.b32.xlu0 %v4055, 94
      %v4212 = vpop.permute.xlu0 %4211
      %4213 = vrot.lane.b32.xlu0 %v4056, 94
      %v4214 = vpop.permute.xlu0 %4213
      %4215 = vrot.lane.b32.xlu0 %v4057, 94
      %v4216 = vpop.permute.xlu0 %4215
      %4217 = vrot.lane.b32.xlu0 %v4058, 94
      %v4218 = vpop.permute.xlu0 %4217
      %4219 = vrot.lane.b32.xlu0 %v4059, 94
      %v4220 = vpop.permute.xlu0 %4219
      %4221 = vrot.lane.b32.xlu0 %v4060, 94
      %v4222 = vpop.permute.xlu0 %4221
      %4223 = vrot.lane.b32.xlu0 %v4061, 94
      %v4224 = vpop.permute.xlu0 %4223
      %4225 = vrot.lane.b32.xlu0 %v4062, 94
      %v4226 = vpop.permute.xlu0 %4225
      %4227 = vrot.lane.b32.xlu0 %v4063, 94
      %v4228 = vpop.permute.xlu0 %4227
      %4229 = vrot.lane.b32.xlu0 %v4064, 94
      %v4230 = vpop.permute.xlu0 %4229
      %4231 = vrot.lane.b32.xlu0 %v4065, 94
      %v4232 = vpop.permute.xlu0 %4231
      %4233 = vrot.lane.b32.xlu0 %v4066, 94
      %v4234 = vpop.permute.xlu0 %4233
      %4235 = vrot.lane.b32.xlu0 %v4067, 94
      %v4236 = vpop.permute.xlu0 %4235
      %4237 = vrot.lane.b32.xlu0 %v4068, 94
      %v4238 = vpop.permute.xlu0 %4237
      %4239 = vrot.lane.b32.xlu0 %v4069, 94
      %v4240 = vpop.permute.xlu0 %4239
      %4241 = vrot.lane.b32.xlu0 %v4070, 94
      %v4242 = vpop.permute.xlu0 %4241
      %4243 = vrot.lane.b32.xlu0 %v4071, 94
      %v4244 = vpop.permute.xlu0 %4243
      %4245 = vrot.lane.b32.xlu0 %v4072, 94
      %v4246 = vpop.permute.xlu0 %4245
      %4247 = vrot.lane.b32.xlu0 %v4073, 94
      %v4248 = vpop.permute.xlu0 %4247
      %4249 = vrot.lane.b32.xlu0 %v4074, 94
      %v4250 = vpop.permute.xlu0 %4249
      %4251 = vrot.lane.b32.xlu0 %v4075, 94
      %v4252 = vpop.permute.xlu0 %4251
      %4253 = vrot.lane.b32.xlu0 %v4076, 94
      %v4254 = vpop.permute.xlu0 %4253
      %4255 = vrot.lane.b32.xlu0 %v4077, 94
      %v4256 = vpop.permute.xlu0 %4255
      %4257 = vrot.lane.b32.xlu0 %v4078, 94
      %v4258 = vpop.permute.xlu0 %4257
      %4259 = vrot.lane.b32.xlu0 %v4079, 94
      %v4260 = vpop.permute.xlu0 %4259
      %4261 = vrot.lane.b32.xlu0 %v4080, 94
      %v4262 = vpop.permute.xlu0 %4261
      %4263 = vrot.lane.b32.xlu0 %v4081, 94
      %v4264 = vpop.permute.xlu0 %4263
      %4265 = vrot.lane.b32.xlu0 %v4082, 94
      %v4266 = vpop.permute.xlu0 %4265
      %4267 = vrot.lane.b32.xlu0 %v4083, 94
      %v4268 = vpop.permute.xlu0 %4267
      %4269 = vrot.lane.b32.xlu0 %v4084, 94
      %v4270 = vpop.permute.xlu0 %4269
      %4271 = vrot.lane.b32.xlu0 %v4085, 94
      %v4272 = vpop.permute.xlu0 %4271
      %4273 = vrot.lane.b32.xlu0 %v4086, 94
      %v4274 = vpop.permute.xlu0 %4273
      %4275 = vrot.lane.b32.xlu0 %v4087, 94
      %v4276 = vpop.permute.xlu0 %4275
      %4277 = vrot.lane.b32.xlu0 %v4088, 94
      %v4278 = vpop.permute.xlu0 %4277
      %4279 = vrot.lane.b32.xlu0 %v4089, 94
      %v4280 = vpop.permute.xlu0 %4279
      %4281 = vrot.lane.b32.xlu0 %v4090, 94
      %v4282 = vpop.permute.xlu0 %4281
      %4283 = vrot.lane.b32.xlu0 %v4091, 94
      %v4284 = vpop.permute.xlu0 %4283
      %4285 = vrot.lane.b32.xlu0 %v4092, 94
      %v4286 = vpop.permute.xlu0 %4285
      %4287 = vrot.lane.b32.xlu0 %v4093, 94
      %v4288 = vpop.permute.xlu0 %4287
      %4289 = vrot.lane.b32.xlu0 %v4094, 94
      %v4290 = vpop.permute.xlu0 %4289
      %4291 = vrot.lane.b32.xlu0 %v4095, 94
      %v4292 = vpop.permute.xlu0 %4291
      %4293 = vrot.lane.b32.xlu0 %v4096, 94
      %v4294 = vpop.permute.xlu0 %4293
      %4295 = vrot.lane.b32.xlu0 %v4097, 94
      %v4296 = vpop.permute.xlu0 %4295
      %4297 = vrot.lane.b32.xlu0 %v4098, 94
      %v4298 = vpop.permute.xlu0 %4297
      %4299 = vrot.lane.b32.xlu0 %v4099, 94
      %v4300 = vpop.permute.xlu0 %4299
      %4301 = vrot.lane.b32.xlu0 %v4100, 94
      %v4302 = vpop.permute.xlu0 %4301
      %4303 = vrot.lane.b32.xlu0 %v4101, 94
      %v4304 = vpop.permute.xlu0 %4303
      %4305 = vrot.lane.b32.xlu0 %v4102, 94
      %v4306 = vpop.permute.xlu0 %4305
      %4307 = vrot.lane.b32.xlu0 %v4103, 94
      %v4308 = vpop.permute.xlu0 %4307
      %4309 = vrot.lane.b32.xlu0 %v4104, 94
      %v4310 = vpop.permute.xlu0 %4309
      %4311 = vrot.lane.b32.xlu0 %v4105, 94
      %v4312 = vpop.permute.xlu0 %4311
      %4313 = vrot.lane.b32.xlu0 %v4106, 94
      %v4314 = vpop.permute.xlu0 %4313
      %4315 = vrot.lane.b32.xlu0 %v4107, 94
      %v4316 = vpop.permute.xlu0 %4315
      %4317 = vrot.lane.b32.xlu0 %v4108, 94
      %v4318 = vpop.permute.xlu0 %4317
      %4319 = vrot.lane.b32.xlu0 %v4109, 94
      %v4320 = vpop.permute.xlu0 %4319
      %4321 = vrot.lane.b32.xlu0 %v4110, 94
      %v4322 = vpop.permute.xlu0 %4321
      %4323 = vrot.lane.b32.xlu0 %v4111, 94
      %v4324 = vpop.permute.xlu0 %4323
      %4325 = vrot.lane.b32.xlu0 %v4112, 94
      %v4326 = vpop.permute.xlu0 %4325
      %4327 = vrot.lane.b32.xlu0 %v4113, 94
      %v4328 = vpop.permute.xlu0 %4327
      %4329 = vrot.lane.b32.xlu0 %v4114, 94
      %v4330 = vpop.permute.xlu0 %4329
      %vm4331 = vcmask 769024
      %v4332 = vsel %vm4331, %v4188, %v4190
      %v4333 = vsel %vm4331, %v4190, %v4192
      %v4334 = vsel %vm4331, %v4194, %v4196
      %v4335 = vsel %vm4331, %v4196, %v4198
      %v4336 = vsel %vm4331, %v4200, %v4202
      %v4337 = vsel %vm4331, %v4202, %v4204
      %v4338 = vsel %vm4331, %v4206, %v4208
      %v4339 = vsel %vm4331, %v4208, %v4210
      %v4340 = vsel %vm4331, %v4212, %v4214
      %v4341 = vsel %vm4331, %v4214, %v4216
      %v4342 = vsel %vm4331, %v4218, %v4220
      %v4343 = vsel %vm4331, %v4220, %v4222
      %v4344 = vsel %vm4331, %v4224, %v4226
      %v4345 = vsel %vm4331, %v4226, %v4228
      %v4346 = vsel %vm4331, %v4230, %v4232
      %v4347 = vsel %vm4331, %v4232, %v4234
      %v4348 = vsel %vm4331, %v4236, %v4238
      %v4349 = vsel %vm4331, %v4238, %v4240
      %v4350 = vsel %vm4331, %v4242, %v4244
      %v4351 = vsel %vm4331, %v4244, %v4246
      %v4352 = vsel %vm4331, %v4248, %v4250
      %v4353 = vsel %vm4331, %v4250, %v4252
      %v4354 = vsel %vm4331, %v4254, %v4256
      %v4355 = vsel %vm4331, %v4256, %v4258
      %v4356 = vsel %vm4331, %v4260, %v4262
      %v4357 = vsel %vm4331, %v4262, %v4264
      %v4358 = vsel %vm4331, %v4266, %v4268
      %v4359 = vsel %vm4331, %v4268, %v4270
      %v4360 = vsel %vm4331, %v4272, %v4274
      %v4361 = vsel %vm4331, %v4274, %v4276
      %v4362 = vsel %vm4331, %v4278, %v4280
      %v4363 = vsel %vm4331, %v4280, %v4282
      %v4364 = vsel %vm4331, %v4284, %v4286
      %v4365 = vsel %vm4331, %v4286, %v4288
      %v4366 = vsel %vm4331, %v4290, %v4292
      %v4367 = vsel %vm4331, %v4292, %v4294
      %v4368 = vsel %vm4331, %v4296, %v4298
      %v4369 = vsel %vm4331, %v4298, %v4300
      %v4370 = vsel %vm4331, %v4302, %v4304
      %v4371 = vsel %vm4331, %v4304, %v4306
      %v4372 = vsel %vm4331, %v4308, %v4310
      %v4373 = vsel %vm4331, %v4310, %v4312
      %v4374 = vsel %vm4331, %v4314, %v4316
      %v4375 = vsel %vm4331, %v4316, %v4318
      %v4376 = vsel %vm4331, %v4320, %v4322
      %v4377 = vsel %vm4331, %v4322, %v4324
      %v4378 = vsel %vm4331, %v4326, %v4328
      %v4379 = vsel %vm4331, %v4328, %v4330
      %v4428 = vadd.f32 %v3895, %v4332
      %v4429 = vadd.f32 %v3896, %v4333
      %v4430 = vadd.f32 %v3897, %v4334
      %v4431 = vadd.f32 %v3898, %v4335
      %v4432 = vadd.f32 %v3899, %v4336
      %v4433 = vadd.f32 %v3900, %v4337
      %v4434 = vadd.f32 %v3901, %v4338
      %v4435 = vadd.f32 %v3902, %v4339
      %v4436 = vadd.f32 %v3903, %v4340
      %v4437 = vadd.f32 %v3904, %v4341
      %v4438 = vadd.f32 %v3905, %v4342
      %v4439 = vadd.f32 %v3906, %v4343
      %v4440 = vadd.f32 %v3907, %v4344
      %v4441 = vadd.f32 %v3908, %v4345
      %v4442 = vadd.f32 %v3909, %v4346
      %v4443 = vadd.f32 %v3910, %v4347
      %v4444 = vadd.f32 %v3911, %v4348
      %v4445 = vadd.f32 %v3912, %v4349
      %v4446 = vadd.f32 %v3913, %v4350
      %v4447 = vadd.f32 %v3914, %v4351
      %v4448 = vadd.f32 %v3915, %v4352
      %v4449 = vadd.f32 %v3916, %v4353
      %v4450 = vadd.f32 %v3917, %v4354
      %v4451 = vadd.f32 %v3918, %v4355
      %v4452 = vadd.f32 %v3919, %v4356
      %v4453 = vadd.f32 %v3920, %v4357
      %v4454 = vadd.f32 %v3921, %v4358
      %v4455 = vadd.f32 %v3922, %v4359
      %v4456 = vadd.f32 %v3923, %v4360
      %v4457 = vadd.f32 %v3924, %v4361
      %v4458 = vadd.f32 %v3925, %v4362
      %v4459 = vadd.f32 %v3926, %v4363
      %v4460 = vadd.f32 %v3927, %v4364
      %v4461 = vadd.f32 %v3928, %v4365
      %v4462 = vadd.f32 %v3929, %v4366
      %v4463 = vadd.f32 %v3930, %v4367
      %v4464 = vadd.f32 %v3931, %v4368
      %v4465 = vadd.f32 %v3932, %v4369
      %v4466 = vadd.f32 %v3933, %v4370
      %v4467 = vadd.f32 %v3934, %v4371
      %v4468 = vadd.f32 %v3935, %v4372
      %v4469 = vadd.f32 %v3936, %v4373
      %v4470 = vadd.f32 %v3937, %v4374
      %v4471 = vadd.f32 %v3938, %v4375
      %v4472 = vadd.f32 %v3939, %v4376
      %v4473 = vadd.f32 %v3940, %v4377
      %v4474 = vadd.f32 %v3941, %v4378
      %v4475 = vadd.f32 %v3942, %v4379
      %4477 = vset.pattern.permute.xlu0 0
      %4478 = vperm.xlu0 %4477, %v207
      %v4479 = vpop.permute.xlu0 %4478
      %4482 = vset.pattern.permute.xlu0 0
      %4483 = vperm.xlu0 %4482, %v208
      %v4484 = vpop.permute.xlu0 %4483
      %4487 = vset.pattern.permute.xlu0 0
      %4488 = vperm.xlu0 %4487, %v209
      %v4489 = vpop.permute.xlu0 %4488
      %v4491 = vadd.f32 %v4428, %v4479
      %v4492 = vadd.f32 %v4429, %v4479
      %v4493 = vadd.f32 %v4430, %v4484
      %v4494 = vadd.f32 %v4431, %v4484
      %v4495 = vadd.f32 %v4432, %v4489
      %v4496 = vadd.f32 %v4433, %v4489
      %v4497 = vadd.f32 %v4434, %v4479
      %v4498 = vadd.f32 %v4435, %v4479
      %v4499 = vadd.f32 %v4436, %v4484
      %v4500 = vadd.f32 %v4437, %v4484
      %v4501 = vadd.f32 %v4438, %v4489
      %v4502 = vadd.f32 %v4439, %v4489
      %v4503 = vadd.f32 %v4440, %v4479
      %v4504 = vadd.f32 %v4441, %v4479
      %v4505 = vadd.f32 %v4442, %v4484
      %v4506 = vadd.f32 %v4443, %v4484
      %v4507 = vadd.f32 %v4444, %v4489
      %v4508 = vadd.f32 %v4445, %v4489
      %v4509 = vadd.f32 %v4446, %v4479
      %v4510 = vadd.f32 %v4447, %v4479
      %v4511 = vadd.f32 %v4448, %v4484
      %v4512 = vadd.f32 %v4449, %v4484
      %v4513 = vadd.f32 %v4450, %v4489
      %v4514 = vadd.f32 %v4451, %v4489
      %v4515 = vadd.f32 %v4452, %v4479
      %v4516 = vadd.f32 %v4453, %v4479
      %v4517 = vadd.f32 %v4454, %v4484
      %v4518 = vadd.f32 %v4455, %v4484
      %v4519 = vadd.f32 %v4456, %v4489
      %v4520 = vadd.f32 %v4457, %v4489
      %v4521 = vadd.f32 %v4458, %v4479
      %v4522 = vadd.f32 %v4459, %v4479
      %v4523 = vadd.f32 %v4460, %v4484
      %v4524 = vadd.f32 %v4461, %v4484
      %v4525 = vadd.f32 %v4462, %v4489
      %v4526 = vadd.f32 %v4463, %v4489
      %v4527 = vadd.f32 %v4464, %v4479
      %v4528 = vadd.f32 %v4465, %v4479
      %v4529 = vadd.f32 %v4466, %v4484
      %v4530 = vadd.f32 %v4467, %v4484
      %v4531 = vadd.f32 %v4468, %v4489
      %v4532 = vadd.f32 %v4469, %v4489
      %v4533 = vadd.f32 %v4470, %v4479
      %v4534 = vadd.f32 %v4471, %v4479
      %v4535 = vadd.f32 %v4472, %v4484
      %v4536 = vadd.f32 %v4473, %v4484
      %v4537 = vadd.f32 %v4474, %v4489
      %v4538 = vadd.f32 %v4475, %v4489
      %v4539 = vmax.f32 %v4491, 0.0
      %v4540 = vmax.f32 %v4492, 0.0
      %v4541 = vmax.f32 %v4493, 0.0
      %v4542 = vmax.f32 %v4494, 0.0
      %v4543 = vmax.f32 %v4495, 0.0
      %v4544 = vmax.f32 %v4496, 0.0
      %v4545 = vmax.f32 %v4497, 0.0
      %v4546 = vmax.f32 %v4498, 0.0
      %v4547 = vmax.f32 %v4499, 0.0
      %v4548 = vmax.f32 %v4500, 0.0
      %v4549 = vmax.f32 %v4501, 0.0
      %v4550 = vmax.f32 %v4502, 0.0
      %v4551 = vmax.f32 %v4503, 0.0
      %v4552 = vmax.f32 %v4504, 0.0
      %v4553 = vmax.f32 %v4505, 0.0
      %v4554 = vmax.f32 %v4506, 0.0
      %v4555 = vmax.f32 %v4507, 0.0
      %v4556 = vmax.f32 %v4508, 0.0
      %v4557 = vmax.f32 %v4509, 0.0
      %v4558 = vmax.f32 %v4510, 0.0
      %v4559 = vmax.f32 %v4511, 0.0
      %v4560 = vmax.f32 %v4512, 0.0
      %v4561 = vmax.f32 %v4513, 0.0
      %v4562 = vmax.f32 %v4514, 0.0
      %v4563 = vmax.f32 %v4515, 0.0
      %v4564 = vmax.f32 %v4516, 0.0
      %v4565 = vmax.f32 %v4517, 0.0
      %v4566 = vmax.f32 %v4518, 0.0
      %v4567 = vmax.f32 %v4519, 0.0
      %v4568 = vmax.f32 %v4520, 0.0
      %v4569 = vmax.f32 %v4521, 0.0
      %v4570 = vmax.f32 %v4522, 0.0
      %v4571 = vmax.f32 %v4523, 0.0
      %v4572 = vmax.f32 %v4524, 0.0
      %v4573 = vmax.f32 %v4525, 0.0
      %v4574 = vmax.f32 %v4526, 0.0
      %v4575 = vmax.f32 %v4527, 0.0
      %v4576 = vmax.f32 %v4528, 0.0
      %v4577 = vmax.f32 %v4529, 0.0
      %v4578 = vmax.f32 %v4530, 0.0
      %v4579 = vmax.f32 %v4531, 0.0
      %v4580 = vmax.f32 %v4532, 0.0
      %v4581 = vmax.f32 %v4533, 0.0
      %v4582 = vmax.f32 %v4534, 0.0
      %v4583 = vmax.f32 %v4535, 0.0
      %v4584 = vmax.f32 %v4536, 0.0
      %v4585 = vmax.f32 %v4537, 0.0
      %v4586 = vmax.f32 %v4538, 0.0
      %4587 = vst [vmem:[%s199] sm:$0xff] %v4539
      %4588 = vst [vmem:[%s199 + $0x8] sm:$0xff] %v4540
      %4589 = vst [vmem:[%s199 + $0x10] sm:$0xff] %v4541
      %4590 = vst [vmem:[%s199 + $0x18] sm:$0xff] %v4542
      %4591 = vst [vmem:[%s199 + $0x20] sm:$0xf] %v4543
      %4592 = vst [vmem:[%s199 + $0x28] sm:$0xf] %v4544
      %4593 = vst [vmem:[%s199 + $0x30] sm:$0xff] %v4545
      %4594 = vst [vmem:[%s199 + $0x38] sm:$0xff] %v4546
      %4595 = vst [vmem:[%s199 + $0x40] sm:$0xff] %v4547
      %4596 = vst [vmem:[%s199 + $0x48] sm:$0xff] %v4548
      %4597 = vst [vmem:[%s199 + $0x50] sm:$0xf] %v4549
      %4598 = vst [vmem:[%s199 + $0x58] sm:$0xf] %v4550
      %4599 = vst [vmem:[%s199 + $0x60] sm:$0xff] %v4551
      %4600 = vst [vmem:[%s199 + $0x68] sm:$0xff] %v4552
      %4601 = vst [vmem:[%s199 + $0x70] sm:$0xff] %v4553
      %4602 = vst [vmem:[%s199 + $0x78] sm:$0xff] %v4554
      %4603 = vst [vmem:[%s199 + $0x80] sm:$0xf] %v4555
      %4604 = vst [vmem:[%s199 + $0x88] sm:$0xf] %v4556
      %4605 = vst [vmem:[%s199 + $0x90] sm:$0xff] %v4557
      %4606 = vst [vmem:[%s199 + $0x98] sm:$0xff] %v4558
      %4607 = vst [vmem:[%s199 + $0xa0] sm:$0xff] %v4559
      %4608 = vst [vmem:[%s199 + $0xa8] sm:$0xff] %v4560
      %4609 = vst [vmem:[%s199 + $0xb0] sm:$0xf] %v4561
      %4610 = vst [vmem:[%s199 + $0xb8] sm:$0xf] %v4562
      %4611 = vst [vmem:[%s199 + $0xc0] sm:$0xff] %v4563
      %4612 = vst [vmem:[%s199 + $0xc8] sm:$0xff] %v4564
      %4613 = vst [vmem:[%s199 + $0xd0] sm:$0xff] %v4565
      %4614 = vst [vmem:[%s199 + $0xd8] sm:$0xff] %v4566
      %4615 = vst [vmem:[%s199 + $0xe0] sm:$0xf] %v4567
      %4616 = vst [vmem:[%s199 + $0xe8] sm:$0xf] %v4568
      %4617 = vst [vmem:[%s199 + $0xf0] sm:$0xff] %v4569
      %4618 = vst [vmem:[%s199 + $0xf8] sm:$0xff] %v4570
      %4619 = vst [vmem:[%s199 + $0x100] sm:$0xff] %v4571
      %4620 = vst [vmem:[%s199 + $0x108] sm:$0xff] %v4572
      %4621 = vst [vmem:[%s199 + $0x110] sm:$0xf] %v4573
      %4622 = vst [vmem:[%s199 + $0x118] sm:$0xf] %v4574
      %4623 = vst [vmem:[%s199 + $0x120] sm:$0xff] %v4575
      %4624 = vst [vmem:[%s199 + $0x128] sm:$0xff] %v4576
      %4625 = vst [vmem:[%s199 + $0x130] sm:$0xff] %v4577
      %4626 = vst [vmem:[%s199 + $0x138] sm:$0xff] %v4578
      %4627 = vst [vmem:[%s199 + $0x140] sm:$0xf] %v4579
      %4628 = vst [vmem:[%s199 + $0x148] sm:$0xf] %v4580
      %4629 = vst [vmem:[%s199 + $0x150] sm:$0xff] %v4581
      %4630 = vst [vmem:[%s199 + $0x158] sm:$0xff] %v4582
      %4631 = vst [vmem:[%s199 + $0x160] sm:$0xff] %v4583
      %4632 = vst [vmem:[%s199 + $0x168] sm:$0xff] %v4584
      %4633 = vst [vmem:[%s199 + $0x170] sm:$0xf] %v4585
      %4634 = vst [vmem:[%s199 + $0x178] sm:$0xf] %v4586
      %s4635 = smul.u32 8, %s15
      %p4636 = scmp.lt.s32.totalorder %s4635, 15
      %s4637 = scalar_select %p4636, %s4635, 15
      %s4638 = smul.addr %s4637, 6
      %s4639 = smul.addr %s4638, 8
      %s4640 = scalar_lea.vmem %s4, %s4639
      // Predicated region
      $region37: #{tpu_custom_call.1} parent=35 // pred_check
        %p4641 = pneg %p122
      $region38: #{tpu_custom_call.1} parent=35 // pred_check_branch
        %4643 = sbr.rel (%p4641) target = $region40
      $region39: #{tpu_custom_call.1} parent=35 // pred_region
        %s4644 = smul.u32 8, %s15
      $region40: #{tpu_custom_call.1} parent=35 // pred_fallthru
        _
    $region36: #{tpu_custom_call.1} parent=5 // pred_fallthru
      _
    %p4645 = scmp.le.s32.totalorder 2, %s10
    // Predicated region
    $region41: #{tpu_custom_call.1} parent=5 // pred_check
      %p4646 = pneg %p4645
    $region42: #{tpu_custom_call.1} parent=5 // pred_check_branch
      %4648 = sbr.rel (%p4646) target = $region44
    $region43: #{tpu_custom_call.1} parent=5 // pred_region
      %s4649 = ssub.s32 %s10, 2
      // Predicated region
      $region45: #{tpu_custom_call.1} parent=43 // pred_check
        %p4650 = pneg %p128
      $region46: #{tpu_custom_call.1} parent=43 // pred_check_branch
        %4652 = sbr.rel (%p4650) target = $region48
      $region47: #{tpu_custom_call.1} parent=43 // pred_region
        %s4653 = smul.u32 8, %s16
        %p4654 = scmp.lt.s32.totalorder %s4653, 15
        %s4655 = scalar_select %p4654, %s4653, 15
        %s4656 = smul.addr %s4655, 6
        %s4657 = smul.addr %s4656, 8
        %s4658 = scalar_lea.vmem %s4, %s4657
      $region48: #{tpu_custom_call.1} parent=43 // pred_fallthru
        _
    $region44: #{tpu_custom_call.1} parent=5 // pred_fallthru
      _
  $region6: #{tpu_custom_call.1} parent=0 // loop_footer
    %s14 = sadd.s32 1, %s10
  $region7: #{tpu_custom_call.1} parent=0 // loop_footer_branch
    %9 = sbr.rel target = $region3
  $region8: #{tpu_custom_call.1} parent=0 // loop_exit
    _

</llo_original>
